<compile_context>
chip_gen: v6e
topology: v6e:2x2x1
jax: 0.10.0
libtpu: 0.0.40
codegen_flags: <defaults>
</compile_context>

<pallas_src>
import functools

import jax
import jax.numpy as jnp
from jax import lax
from jax.experimental import pallas as pl
from jax.experimental.pallas import tpu as pltpu


# ----------------------------- Pallas kernel --------------------------------

def _layernorm_f32(x, g, b, eps):
    mu = jnp.mean(x, axis=-1, keepdims=True)
    d = x - mu
    var = jnp.mean(d * d, axis=-1, keepdims=True)
    return d * lax.rsqrt(var + eps) * g + b


def _qformer_kernel(vis_ref, q_ref, visw_ref, visb_ref,
                    inw_ref, inb_ref, wo_ref, bo_ref, ln1g_ref, ln1b_ref,
                    w1_ref, b1_ref, w2_ref, b2_ref, ln2g_ref, ln2b_ref,
                    outw_ref, outb_ref, o_ref, h_ref,
                    *, num_heads, num_layers, B, P, Q, eps, mxu_dtype, approx_recip):
    D = q_ref.shape[-1]
    S = Q + P
    hd = D // num_heads
    scale = 1.0 / float(hd) ** 0.5

    def mm(a, w):
        return jnp.dot(a.astype(mxu_dtype), w.astype(mxu_dtype),
                       preferred_element_type=jnp.float32)

    # ---- visual projection: (B*P, Dv) @ (Dv, D) + b, batch folded into M ----
    proj = mm(vis_ref[...], visw_ref[...]) + visb_ref[...]            # (B*P, D) f32

    # ---- assemble [queries ; projected visual] per batch via direct region stores ----
    qf = q_ref[...].astype(jnp.float32)
    for b in range(B):
        h_ref[b * S:b * S + Q, :] = qf
        h_ref[b * S + Q:(b + 1) * S, :] = proj[b * P:(b + 1) * P, :]
    x = h_ref[...]                                                     # (B*S, D) f32

    # ---- encoder layers (static unroll; all weights VMEM-resident) ----
    for l in range(num_layers):
        # fused QKV projection, lane-dense (B*S, 3D)
        qkv = mm(x, inw_ref[l]) + inb_ref[l]

        # per-(batch, head) attention; heads independent, re-packed lane-dense
        ctx_rows = []
        for b in range(B):
            qkv_b = qkv[b * S:(b + 1) * S, :]                          # (S, 3D)
            heads = []
            for h in range(num_heads):
                qh = qkv_b[:, h * hd:(h + 1) * hd]
                kh = qkv_b[:, D + h * hd:D + (h + 1) * hd]
                vh = qkv_b[:, 2 * D + h * hd:2 * D + (h + 1) * hd]
                # scores = q @ k^T via dot_general contracting last dims (no transpose)
                s = lax.dot_general(qh.astype(mxu_dtype), kh.astype(mxu_dtype),
                                    dimension_numbers=(((1,), (1,)), ((), ())),
                                    preferred_element_type=jnp.float32) * scale
                m = jnp.max(s, axis=-1, keepdims=True)
                p = jnp.exp(s - m)
                den = jnp.sum(p, axis=-1, keepdims=True)
                if approx_recip:
                    p = p * pl.reciprocal(den, approx=True)
                else:
                    p = p / den
                heads.append(mm(p, vh))                                # (S, hd)
            ctx_rows.append(jnp.concatenate(heads, axis=-1))           # (S, D)
        ctx = jnp.concatenate(ctx_rows, axis=0)                        # (B*S, D)

        # out_proj as one (B*S, D) @ (D, D) matmul, then residual + LayerNorm1
        attn = mm(ctx, wo_ref[l]) + bo_ref[l]
        h1 = _layernorm_f32(x + attn, ln1g_ref[l], ln1b_ref[l], eps)

        # feed-forward: ReLU(h1 @ W1 + b1) @ W2 + b2, residual + LayerNorm2
        f = jnp.maximum(mm(h1, w1_ref[l]) + b1_ref[l], 0.0)
        f = mm(f, w2_ref[l]) + b2_ref[l]
        x = _layernorm_f32(h1 + f, ln2g_ref[l], ln2b_ref[l], eps)

    # ---- output projection over the query rows of each batch ----
    qrows = jnp.concatenate([x[b * S:b * S + Q, :] for b in range(B)], axis=0)  # (B*Q, D)
    y = mm(qrows, outw_ref[...]) + outb_ref[...]
    o_ref[...] = y.astype(o_ref.dtype)


# ------------------------------ Wrapper --------------------------------------

def _full_spec(a):
    n = a.ndim
    return pl.BlockSpec(a.shape, lambda i, n=n: (0,) * n)


def qformer_forward(visual_features, packed, *, num_heads):
    """visual_features: (B, P, visual_hidden_dim) -> (B, num_queries, query_dim)."""
    B, P, Dv = visual_features.shape
    queries = packed["queries"]
    Q, D = queries.shape
    S = Q + P
    L = packed["in_w"].shape[0]
    dff = packed["w1"].shape[2]
    N = packed["out_w"].shape[1]

    mxu_dtype = packed["in_w"].dtype          # weight dtype == matmul operand dtype
    approx_recip = (mxu_dtype == jnp.bfloat16)

    vis2d = visual_features.reshape(B * P, Dv)

    inputs = (vis2d, queries, packed["vis_w"], packed["vis_b"],
              packed["in_w"], packed["in_b"], packed["wo"], packed["bo"],
              packed["ln1_g"], packed["ln1_b"],
              packed["w1"], packed["b1"], packed["w2"], packed["b2"],
              packed["ln2_g"], packed["ln2_b"],
              packed["out_w"], packed["out_b"])

    # cost estimate (whole fused forward)
    flops = 2 * B * P * Dv * D
    flops += L * (2 * B * S * D * 3 * D + 4 * B * S * S * D + 2 * B * S * D * D
                  + 4 * B * S * D * dff)
    flops += 2 * B * Q * D * N
    transcendentals = L * (num_heads * B * S * S + num_heads * B * S + 4 * B * S)
    bytes_accessed = int(sum(int(v.size) * v.dtype.itemsize for v in inputs))
    bytes_accessed += int(B * Q * N * 4)

    kernel = functools.partial(
        _qformer_kernel, num_heads=num_heads, num_layers=L, B=B, P=P, Q=Q,
        eps=1e-5, mxu_dtype=mxu_dtype, approx_recip=approx_recip)

    out2d = pl.pallas_call(
        kernel,
        out_shape=jax.ShapeDtypeStruct((B * Q, N), jnp.float32),
        grid=(1,),
        in_specs=[_full_spec(a) for a in inputs],
        out_specs=pl.BlockSpec((B * Q, N), lambda i: (0, 0)),
        scratch_shapes=[pltpu.VMEM((B * S, D), jnp.float32)],
        compiler_params=pltpu.CompilerParams(dimension_semantics=("arbitrary",)),
        cost_estimate=pl.CostEstimate(flops=int(flops),
                                      transcendentals=int(transcendentals),
                                      bytes_accessed=int(bytes_accessed)),
    )(*inputs)
    return out2d.reshape(B, Q, N)


# ------------------ Parameters: module layout + kernel packing ---------------

def init_params(key, visual_hidden_dim, query_dim, num_queries, d_model,
                num_layers, num_heads):
    """PyTorch-module-layout parameters (x @ W convention; in_w == in_proj_weight.T)."""
    assert query_dim == d_model, "cat([queries, projected], dim=1) requires query_dim == d_model"
    keys = jax.random.split(key, 6 + num_layers)
    s = 0.05
    p = {
        "queries": jax.random.normal(keys[0], (num_queries, query_dim), jnp.float32),
        "vis_w": jax.random.normal(keys[1], (visual_hidden_dim, d_model), jnp.float32) * s,
        "vis_b": jax.random.normal(keys[2], (1, d_model), jnp.float32) * s,
        "out_w": jax.random.normal(keys[3], (d_model, query_dim), jnp.float32) * s,
        "out_b": jax.random.normal(keys[4], (1, query_dim), jnp.float32) * s,
        "layers": [],
    }
    dff = 4 * d_model
    for l in range(num_layers):
        lk = jax.random.split(keys[5 + l], 8)
        p["layers"].append(dict(
            in_w=jax.random.normal(lk[0], (d_model, 3 * d_model), jnp.float32) * s,
            in_b=jax.random.normal(lk[1], (1, 3 * d_model), jnp.float32) * s,
            wo=jax.random.normal(lk[2], (d_model, d_model), jnp.float32) * s,
            bo=jax.random.normal(lk[3], (1, d_model), jnp.float32) * s,
            ff1_w=jax.random.normal(lk[4], (d_model, dff), jnp.float32) * s,
            ff1_b=jax.random.normal(lk[5], (1, dff), jnp.float32) * s,
            ff2_w=jax.random.normal(lk[6], (dff, d_model), jnp.float32) * s,
            ff2_b=jax.random.normal(lk[7], (1, d_model), jnp.float32) * s,
            ln1_g=jnp.ones((1, d_model), jnp.float32),
            ln1_b=jnp.zeros((1, d_model), jnp.float32),
            ln2_g=jnp.ones((1, d_model), jnp.float32),
            ln2_b=jnp.zeros((1, d_model), jnp.float32),
        ))
    return p


def pack_params(p, weight_dtype=jnp.bfloat16):
    """Stack per-layer params along a leading layer axis; lane-dense weight layout."""
    layers = p["layers"]
    stk = lambda name: jnp.stack([lp[name] for lp in layers], axis=0)
    return {
        "queries": p["queries"],
        "vis_w": p["vis_w"].astype(weight_dtype),
        "vis_b": p["vis_b"],
        "out_w": p["out_w"].astype(weight_dtype),
        "out_b": p["out_b"],
        "in_w": stk("in_w").astype(weight_dtype),    # (L, D, 3D)
        "in_b": stk("in_b"),                         # (L, 1, 3D)
        "wo": stk("wo").astype(weight_dtype),        # (L, D, D)
        "bo": stk("bo"),
        "ln1_g": stk("ln1_g"), "ln1_b": stk("ln1_b"),
        "w1": stk("ff1_w").astype(weight_dtype),     # (L, D, dff)
        "b1": stk("ff1_b"),
        "w2": stk("ff2_w").astype(weight_dtype),     # (L, dff, D)
        "b2": stk("ff2_b"),
        "ln2_g": stk("ln2_g"), "ln2_b": stk("ln2_b"),
    }


# --------------------------- Pure-JAX reference ------------------------------

def _ln_ref(x, g, b, eps=1e-5):
    mu = jnp.mean(x, axis=-1, keepdims=True)
    var = jnp.mean((x - mu) ** 2, axis=-1, keepdims=True)
    return (x - mu) * lax.rsqrt(var + eps) * g + b


def qformer_reference(visual, params, num_heads):
    B, P, Dv = visual.shape
    queries = params["queries"]
    Q, D = queries.shape
    hd = D // num_heads
    x = visual @ params["vis_w"] + params["vis_b"]
    h = jnp.concatenate([jnp.broadcast_to(queries[None], (B, Q, D)), x], axis=1)
    for lp in params["layers"]:
        S = h.shape[1]
        qkv = h @ lp["in_w"] + lp["in_b"]
        q, k, v = jnp.split(qkv, 3, axis=-1)
        def split_heads(t):
            return t.reshape(B, S, num_heads, hd).transpose(0, 2, 1, 3)
        qh, kh, vh = split_heads(q), split_heads(k), split_heads(v)
        s = jnp.einsum("bhqd,bhkd->bhqk", qh, kh) / (hd ** 0.5)
        p = jax.nn.softmax(s, axis=-1)
        o = jnp.einsum("bhqk,bhkd->bhqd", p, vh).transpose(0, 2, 1, 3).reshape(B, S, D)
        h = _ln_ref(h + o @ lp["wo"] + lp["bo"], lp["ln1_g"], lp["ln1_b"])
        f = jax.nn.relu(h @ lp["ff1_w"] + lp["ff1_b"]) @ lp["ff2_w"] + lp["ff2_b"]
        h = _ln_ref(h + f, lp["ln2_g"], lp["ln2_b"])
    return h[:, :Q, :] @ params["out_w"] + params["out_b"]


# --------------------------------- Main --------------------------------------

if __name__ == "__main__":
    B, P = 2, 8                   # batch, num visual patches
    visual_hidden_dim = 16
    d_model = 32                  # transformer_hidden_dim
    query_dim = 32                # must equal d_model for the concat in forward()
    num_queries = 8
    num_heads = 4
    num_layers = 2

    key = jax.random.PRNGKey(0)
    pkey, xkey = jax.random.split(key)
    params = init_params(pkey, visual_hidden_dim, query_dim, num_queries,
                         d_model, num_layers, num_heads)
    visual_features = jax.random.normal(xkey, (B, P, visual_hidden_dim), jnp.float32)

    ref = qformer_reference(visual_features, params, num_heads)
    fwd = jax.jit(functools.partial(qformer_forward, num_heads=num_heads))

    # 1) all-f32 kernel path (exact reciprocal) -> tight validation of kernel structure
    packed_f32 = pack_params(params, weight_dtype=jnp.float32)
    out_f32 = jax.block_until_ready(fwd(visual_features, packed_f32))
    assert out_f32.shape == (B, num_queries, query_dim)
    assert bool(jnp.all(jnp.isfinite(out_f32)))
    err_f32 = float(jnp.max(jnp.abs(out_f32 - ref)))
    assert err_f32 < 5e-4, f"f32 kernel vs reference max abs error: {err_f32}"

    # 2) bf16 production path (MXU bf16 operands, approx reciprocal)
    packed_bf16 = pack_params(params, weight_dtype=jnp.bfloat16)
    out = jax.block_until_ready(fwd(visual_features, packed_bf16))
    assert out.shape == (B, num_queries, query_dim)
    assert bool(jnp.all(jnp.isfinite(out)))
    err_bf16 = float(jnp.max(jnp.abs(out - ref)))
    assert err_bf16 < 5e-2, f"bf16 kernel vs reference max abs error: {err_bf16}"

    print("KERNEL_OK")
</pallas_src>

<mosaic_0001>
module attributes {stable_mosaic.version = 11 : i64} {
  func.func @_qformer_kernel(%arg0: i32, %arg1: memref<16x16xf32, #tpu.memory_space<vmem>>, %arg2: memref<8x32xf32, #tpu.memory_space<vmem>>, %arg3: memref<16x32xf32, #tpu.memory_space<vmem>>, %arg4: memref<1x32xf32, #tpu.memory_space<vmem>>, %arg5: memref<2x32x96xf32, #tpu.memory_space<vmem>>, %arg6: memref<2x1x96xf32, #tpu.memory_space<vmem>>, %arg7: memref<2x32x32xf32, #tpu.memory_space<vmem>>, %arg8: memref<2x1x32xf32, #tpu.memory_space<vmem>>, %arg9: memref<2x1x32xf32, #tpu.memory_space<vmem>>, %arg10: memref<2x1x32xf32, #tpu.memory_space<vmem>>, %arg11: memref<2x32x128xf32, #tpu.memory_space<vmem>>, %arg12: memref<2x1x128xf32, #tpu.memory_space<vmem>>, %arg13: memref<2x128x32xf32, #tpu.memory_space<vmem>>, %arg14: memref<2x1x32xf32, #tpu.memory_space<vmem>>, %arg15: memref<2x1x32xf32, #tpu.memory_space<vmem>>, %arg16: memref<2x1x32xf32, #tpu.memory_space<vmem>>, %arg17: memref<32x32xf32, #tpu.memory_space<vmem>>, %arg18: memref<1x32xf32, #tpu.memory_space<vmem>>, %arg19: memref<16x32xf32, #tpu.memory_space<vmem>>, %arg20: memref<32x32xf32, #tpu.memory_space<vmem>>) attributes {dimension_semantics = [#tpu.dimension_semantics<arbitrary>], iteration_bounds = array<i64: 1>, scalar_prefetch = 0 : i64, scratch_operands = 1 : i64, tpu.core_type = #tpu.core_type<tc>, window_params = [{pipeline_mode = #tpu.pipeline_mode<synchronous>, transform_indices = @transform_0, window_bounds = array<i64: 16, 16>}, {pipeline_mode = #tpu.pipeline_mode<synchronous>, transform_indices = @transform_1, window_bounds = array<i64: 8, 32>}, {pipeline_mode = #tpu.pipeline_mode<synchronous>, transform_indices = @transform_2, window_bounds = array<i64: 16, 32>}, {pipeline_mode = #tpu.pipeline_mode<synchronous>, transform_indices = @transform_3, window_bounds = array<i64: 1, 32>}, {pipeline_mode = #tpu.pipeline_mode<synchronous>, transform_indices = @transform_4, window_bounds = array<i64: 2, 32, 96>}, {pipeline_mode = #tpu.pipeline_mode<synchronous>, transform_indices = @transform_5, window_bounds = array<i64: 2, 1, 96>}, {pipeline_mode = #tpu.pipeline_mode<synchronous>, transform_indices = @transform_6, window_bounds = array<i64: 2, 32, 32>}, {pipeline_mode = #tpu.pipeline_mode<synchronous>, transform_indices = @transform_7, window_bounds = array<i64: 2, 1, 32>}, {pipeline_mode = #tpu.pipeline_mode<synchronous>, transform_indices = @transform_8, window_bounds = array<i64: 2, 1, 32>}, {pipeline_mode = #tpu.pipeline_mode<synchronous>, transform_indices = @transform_9, window_bounds = array<i64: 2, 1, 32>}, {pipeline_mode = #tpu.pipeline_mode<synchronous>, transform_indices = @transform_10, window_bounds = array<i64: 2, 32, 128>}, {pipeline_mode = #tpu.pipeline_mode<synchronous>, transform_indices = @transform_11, window_bounds = array<i64: 2, 1, 128>}, {pipeline_mode = #tpu.pipeline_mode<synchronous>, transform_indices = @transform_12, window_bounds = array<i64: 2, 128, 32>}, {pipeline_mode = #tpu.pipeline_mode<synchronous>, transform_indices = @transform_13, window_bounds = array<i64: 2, 1, 32>}, {pipeline_mode = #tpu.pipeline_mode<synchronous>, transform_indices = @transform_14, window_bounds = array<i64: 2, 1, 32>}, {pipeline_mode = #tpu.pipeline_mode<synchronous>, transform_indices = @transform_15, window_bounds = array<i64: 2, 1, 32>}, {pipeline_mode = #tpu.pipeline_mode<synchronous>, transform_indices = @transform_16, window_bounds = array<i64: 32, 32>}, {pipeline_mode = #tpu.pipeline_mode<synchronous>, transform_indices = @transform_17, window_bounds = array<i64: 1, 32>}, {pipeline_mode = #tpu.pipeline_mode<synchronous>, transform_indices = @transform_18, window_bounds = array<i64: 16, 32>}]} {
    %c0 = arith.constant 0 : index
    %c0_0 = arith.constant 0 : index
    %0 = vector.load %arg1[%c0, %c0_0] : memref<16x16xf32, #tpu.memory_space<vmem>>, vector<16x16xf32>
    %c0_1 = arith.constant 0 : index
    %c0_2 = arith.constant 0 : index
    %1 = vector.load %arg3[%c0_1, %c0_2] : memref<16x32xf32, #tpu.memory_space<vmem>>, vector<16x32xf32>
    %cst = arith.constant dense<0.000000e+00> : vector<16x32xf32>
    %2 = tpu.matmul %0, %1, %cst {dimension_numbers = #tpu.dot_dimension_numbers<[1], [0], [0], [1], [0, 0, 1, 1], [], []>} : vector<16x16xf32>, vector<16x32xf32>, vector<16x32xf32> -> vector<16x32xf32>
    %c0_3 = arith.constant 0 : index
    %c0_4 = arith.constant 0 : index
    %3 = vector.load %arg4[%c0_3, %c0_4] : memref<1x32xf32, #tpu.memory_space<vmem>>, vector<1x32xf32>
    %4 = vector.broadcast %3 : vector<1x32xf32> to vector<16x32xf32>
    %5 = arith.addf %2, %4 : vector<16x32xf32>
    %c0_5 = arith.constant 0 : index
    %c0_6 = arith.constant 0 : index
    %6 = vector.load %arg2[%c0_5, %c0_6] : memref<8x32xf32, #tpu.memory_space<vmem>>, vector<8x32xf32>
    %c0_7 = arith.constant 0 : index
    %c0_8 = arith.constant 0 : index
    %7 = vector.load %arg20[%c0_7, %c0_8] : memref<32x32xf32, #tpu.memory_space<vmem>>, vector<8x32xf32>
    tpu.vector_store %arg20[%c0_7, %c0_8], %6 {strides = array<i32>} : memref<32x32xf32, #tpu.memory_space<vmem>>, vector<8x32xf32>,
    %8 = vector.extract_strided_slice %5 {offsets = [0, 0], sizes = [8, 32], strides = [1, 1]} : vector<16x32xf32> to vector<8x32xf32>
    %c8 = arith.constant 8 : index
    %c0_9 = arith.constant 0 : index
    %9 = vector.load %arg20[%c8, %c0_9] : memref<32x32xf32, #tpu.memory_space<vmem>>, vector<8x32xf32>
    tpu.vector_store %arg20[%c8, %c0_9], %8 {strides = array<i32>} : memref<32x32xf32, #tpu.memory_space<vmem>>, vector<8x32xf32>,
    %c16 = arith.constant 16 : index
    %c0_10 = arith.constant 0 : index
    %10 = vector.load %arg20[%c16, %c0_10] : memref<32x32xf32, #tpu.memory_space<vmem>>, vector<8x32xf32>
    tpu.vector_store %arg20[%c16, %c0_10], %6 {strides = array<i32>} : memref<32x32xf32, #tpu.memory_space<vmem>>, vector<8x32xf32>,
    %11 = vector.extract_strided_slice %5 {offsets = [8, 0], sizes = [8, 32], strides = [1, 1]} : vector<16x32xf32> to vector<8x32xf32>
    %c24 = arith.constant 24 : index
    %c0_11 = arith.constant 0 : index
    %12 = vector.load %arg20[%c24, %c0_11] : memref<32x32xf32, #tpu.memory_space<vmem>>, vector<8x32xf32>
    tpu.vector_store %arg20[%c24, %c0_11], %11 {strides = array<i32>} : memref<32x32xf32, #tpu.memory_space<vmem>>, vector<8x32xf32>,
    %c0_12 = arith.constant 0 : index
    %c0_13 = arith.constant 0 : index
    %13 = vector.load %arg20[%c0_12, %c0_13] : memref<32x32xf32, #tpu.memory_space<vmem>>, vector<32x32xf32>
    %c0_14 = arith.constant 0 : index
    %c0_15 = arith.constant 0 : index
    %c0_16 = arith.constant 0 : index
    %14 = vector.load %arg5[%c0_14, %c0_15, %c0_16] : memref<2x32x96xf32, #tpu.memory_space<vmem>>, vector<1x32x96xf32>
    %15 = vector.shape_cast %14 : vector<1x32x96xf32> to vector<32x96xf32>
    %cst_17 = arith.constant dense<0.000000e+00> : vector<32x96xf32>
    %16 = tpu.matmul %13, %15, %cst_17 {dimension_numbers = #tpu.dot_dimension_numbers<[1], [0], [0], [1], [0, 0, 1, 1], [], []>} : vector<32x32xf32>, vector<32x96xf32>, vector<32x96xf32> -> vector<32x96xf32>
    %c0_18 = arith.constant 0 : index
    %c0_19 = arith.constant 0 : index
    %c0_20 = arith.constant 0 : index
    %17 = vector.load %arg6[%c0_18, %c0_19, %c0_20] : memref<2x1x96xf32, #tpu.memory_space<vmem>>, vector<1x1x96xf32>
    %18 = vector.shape_cast %17 : vector<1x1x96xf32> to vector<1x96xf32>
    %19 = vector.broadcast %18 : vector<1x96xf32> to vector<32x96xf32>
    %20 = arith.addf %16, %19 : vector<32x96xf32>
    %21 = vector.extract_strided_slice %20 {offsets = [0, 0], sizes = [16, 96], strides = [1, 1]} : vector<32x96xf32> to vector<16x96xf32>
    %22 = vector.extract_strided_slice %21 {offsets = [0, 0], sizes = [16, 8], strides = [1, 1]} : vector<16x96xf32> to vector<16x8xf32>
    %23 = vector.extract_strided_slice %21 {offsets = [0, 32], sizes = [16, 8], strides = [1, 1]} : vector<16x96xf32> to vector<16x8xf32>
    %24 = vector.extract_strided_slice %21 {offsets = [0, 64], sizes = [16, 8], strides = [1, 1]} : vector<16x96xf32> to vector<16x8xf32>
    %cst_21 = arith.constant dense<0.000000e+00> : vector<16x16xf32>
    %25 = tpu.matmul %22, %23, %cst_21 {dimension_numbers = #tpu.dot_dimension_numbers<[1], [1], [0], [0], [0, 0, 1, 0], [], []>} : vector<16x8xf32>, vector<16x8xf32>, vector<16x16xf32> -> vector<16x16xf32>
    %cst_22 = arith.constant 0.353553385 : f32
    %26 = vector.broadcast %cst_22 : f32 to vector<16x16xf32>
    %27 = arith.mulf %25, %26 : vector<16x16xf32>
    %cst_23 = arith.constant dense<0xFF800000> : vector<16xf32>
    %28 = vector.multi_reduction <maximumf>, %27, %cst_23 [1] : vector<16x16xf32> to vector<16xf32>
    %29 = vector.shape_cast %28 : vector<16xf32> to vector<16x1xf32>
    %30 = vector.broadcast %29 : vector<16x1xf32> to vector<16x16xf32>
    %31 = arith.subf %27, %30 : vector<16x16xf32>
    %32 = math.exp %31 : vector<16x16xf32>
    %cst_24 = arith.constant dense<0.000000e+00> : vector<16xf32>
    %33 = vector.multi_reduction <add>, %32, %cst_24 [1] : vector<16x16xf32> to vector<16xf32>
    %34 = vector.shape_cast %33 : vector<16xf32> to vector<16x1xf32>
    %35 = vector.broadcast %34 : vector<16x1xf32> to vector<16x16xf32>
    %36 = arith.divf %32, %35 : vector<16x16xf32>
    %cst_25 = arith.constant dense<0.000000e+00> : vector<16x8xf32>
    %37 = tpu.matmul %36, %24, %cst_25 {dimension_numbers = #tpu.dot_dimension_numbers<[1], [0], [0], [1], [0, 0, 1, 1], [], []>} : vector<16x16xf32>, vector<16x8xf32>, vector<16x8xf32> -> vector<16x8xf32>
    %38 = vector.extract_strided_slice %21 {offsets = [0, 8], sizes = [16, 8], strides = [1, 1]} : vector<16x96xf32> to vector<16x8xf32>
    %39 = vector.extract_strided_slice %21 {offsets = [0, 40], sizes = [16, 8], strides = [1, 1]} : vector<16x96xf32> to vector<16x8xf32>
    %40 = vector.extract_strided_slice %21 {offsets = [0, 72], sizes = [16, 8], strides = [1, 1]} : vector<16x96xf32> to vector<16x8xf32>
    %cst_26 = arith.constant dense<0.000000e+00> : vector<16x16xf32>
    %41 = tpu.matmul %38, %39, %cst_26 {dimension_numbers = #tpu.dot_dimension_numbers<[1], [1], [0], [0], [0, 0, 1, 0], [], []>} : vector<16x8xf32>, vector<16x8xf32>, vector<16x16xf32> -> vector<16x16xf32>
    %cst_27 = arith.constant 0.353553385 : f32
    %42 = vector.broadcast %cst_27 : f32 to vector<16x16xf32>
    %43 = arith.mulf %41, %42 : vector<16x16xf32>
    %cst_28 = arith.constant dense<0xFF800000> : vector<16xf32>
    %44 = vector.multi_reduction <maximumf>, %43, %cst_28 [1] : vector<16x16xf32> to vector<16xf32>
    %45 = vector.shape_cast %44 : vector<16xf32> to vector<16x1xf32>
    %46 = vector.broadcast %45 : vector<16x1xf32> to vector<16x16xf32>
    %47 = arith.subf %43, %46 : vector<16x16xf32>
    %48 = math.exp %47 : vector<16x16xf32>
    %cst_29 = arith.constant dense<0.000000e+00> : vector<16xf32>
    %49 = vector.multi_reduction <add>, %48, %cst_29 [1] : vector<16x16xf32> to vector<16xf32>
    %50 = vector.shape_cast %49 : vector<16xf32> to vector<16x1xf32>
    %51 = vector.broadcast %50 : vector<16x1xf32> to vector<16x16xf32>
    %52 = arith.divf %48, %51 : vector<16x16xf32>
    %cst_30 = arith.constant dense<0.000000e+00> : vector<16x8xf32>
    %53 = tpu.matmul %52, %40, %cst_30 {dimension_numbers = #tpu.dot_dimension_numbers<[1], [0], [0], [1], [0, 0, 1, 1], [], []>} : vector<16x16xf32>, vector<16x8xf32>, vector<16x8xf32> -> vector<16x8xf32>
    %54 = vector.extract_strided_slice %21 {offsets = [0, 16], sizes = [16, 8], strides = [1, 1]} : vector<16x96xf32> to vector<16x8xf32>
    %55 = vector.extract_strided_slice %21 {offsets = [0, 48], sizes = [16, 8], strides = [1, 1]} : vector<16x96xf32> to vector<16x8xf32>
    %56 = vector.extract_strided_slice %21 {offsets = [0, 80], sizes = [16, 8], strides = [1, 1]} : vector<16x96xf32> to vector<16x8xf32>
    %cst_31 = arith.constant dense<0.000000e+00> : vector<16x16xf32>
    %57 = tpu.matmul %54, %55, %cst_31 {dimension_numbers = #tpu.dot_dimension_numbers<[1], [1], [0], [0], [0, 0, 1, 0], [], []>} : vector<16x8xf32>, vector<16x8xf32>, vector<16x16xf32> -> vector<16x16xf32>
    %cst_32 = arith.constant 0.353553385 : f32
    %58 = vector.broadcast %cst_32 : f32 to vector<16x16xf32>
    %59 = arith.mulf %57, %58 : vector<16x16xf32>
    %cst_33 = arith.constant dense<0xFF800000> : vector<16xf32>
    %60 = vector.multi_reduction <maximumf>, %59, %cst_33 [1] : vector<16x16xf32> to vector<16xf32>
    %61 = vector.shape_cast %60 : vector<16xf32> to vector<16x1xf32>
    %62 = vector.broadcast %61 : vector<16x1xf32> to vector<16x16xf32>
    %63 = arith.subf %59, %62 : vector<16x16xf32>
    %64 = math.exp %63 : vector<16x16xf32>
    %cst_34 = arith.constant dense<0.000000e+00> : vector<16xf32>
    %65 = vector.multi_reduction <add>, %64, %cst_34 [1] : vector<16x16xf32> to vector<16xf32>
    %66 = vector.shape_cast %65 : vector<16xf32> to vector<16x1xf32>
    %67 = vector.broadcast %66 : vector<16x1xf32> to vector<16x16xf32>
    %68 = arith.divf %64, %67 : vector<16x16xf32>
    %cst_35 = arith.constant dense<0.000000e+00> : vector<16x8xf32>
    %69 = tpu.matmul %68, %56, %cst_35 {dimension_numbers = #tpu.dot_dimension_numbers<[1], [0], [0], [1], [0, 0, 1, 1], [], []>} : vector<16x16xf32>, vector<16x8xf32>, vector<16x8xf32> -> vector<16x8xf32>
    %70 = vector.extract_strided_slice %21 {offsets = [0, 24], sizes = [16, 8], strides = [1, 1]} : vector<16x96xf32> to vector<16x8xf32>
    %71 = vector.extract_strided_slice %21 {offsets = [0, 56], sizes = [16, 8], strides = [1, 1]} : vector<16x96xf32> to vector<16x8xf32>
    %72 = vector.extract_strided_slice %21 {offsets = [0, 88], sizes = [16, 8], strides = [1, 1]} : vector<16x96xf32> to vector<16x8xf32>
    %cst_36 = arith.constant dense<0.000000e+00> : vector<16x16xf32>
    %73 = tpu.matmul %70, %71, %cst_36 {dimension_numbers = #tpu.dot_dimension_numbers<[1], [1], [0], [0], [0, 0, 1, 0], [], []>} : vector<16x8xf32>, vector<16x8xf32>, vector<16x16xf32> -> vector<16x16xf32>
    %cst_37 = arith.constant 0.353553385 : f32
    %74 = vector.broadcast %cst_37 : f32 to vector<16x16xf32>
    %75 = arith.mulf %73, %74 : vector<16x16xf32>
    %cst_38 = arith.constant dense<0xFF800000> : vector<16xf32>
    %76 = vector.multi_reduction <maximumf>, %75, %cst_38 [1] : vector<16x16xf32> to vector<16xf32>
    %77 = vector.shape_cast %76 : vector<16xf32> to vector<16x1xf32>
    %78 = vector.broadcast %77 : vector<16x1xf32> to vector<16x16xf32>
    %79 = arith.subf %75, %78 : vector<16x16xf32>
    %80 = math.exp %79 : vector<16x16xf32>
    %cst_39 = arith.constant dense<0.000000e+00> : vector<16xf32>
    %81 = vector.multi_reduction <add>, %80, %cst_39 [1] : vector<16x16xf32> to vector<16xf32>
    %82 = vector.shape_cast %81 : vector<16xf32> to vector<16x1xf32>
    %83 = vector.broadcast %82 : vector<16x1xf32> to vector<16x16xf32>
    %84 = arith.divf %80, %83 : vector<16x16xf32>
    %cst_40 = arith.constant dense<0.000000e+00> : vector<16x8xf32>
    %85 = tpu.matmul %84, %72, %cst_40 {dimension_numbers = #tpu.dot_dimension_numbers<[1], [0], [0], [1], [0, 0, 1, 1], [], []>} : vector<16x16xf32>, vector<16x8xf32>, vector<16x8xf32> -> vector<16x8xf32>
    %86 = tpu.concatenate %37, %53, %69, %85 in 1 : vector<16x8xf32>, vector<16x8xf32>, vector<16x8xf32>, vector<16x8xf32> -> vector<16x32xf32>
    %87 = vector.extract_strided_slice %20 {offsets = [16, 0], sizes = [16, 96], strides = [1, 1]} : vector<32x96xf32> to vector<16x96xf32>
    %88 = vector.extract_strided_slice %87 {offsets = [0, 0], sizes = [16, 8], strides = [1, 1]} : vector<16x96xf32> to vector<16x8xf32>
    %89 = vector.extract_strided_slice %87 {offsets = [0, 32], sizes = [16, 8], strides = [1, 1]} : vector<16x96xf32> to vector<16x8xf32>
    %90 = vector.extract_strided_slice %87 {offsets = [0, 64], sizes = [16, 8], strides = [1, 1]} : vector<16x96xf32> to vector<16x8xf32>
    %cst_41 = arith.constant dense<0.000000e+00> : vector<16x16xf32>
    %91 = tpu.matmul %88, %89, %cst_41 {dimension_numbers = #tpu.dot_dimension_numbers<[1], [1], [0], [0], [0, 0, 1, 0], [], []>} : vector<16x8xf32>, vector<16x8xf32>, vector<16x16xf32> -> vector<16x16xf32>
    %cst_42 = arith.constant 0.353553385 : f32
    %92 = vector.broadcast %cst_42 : f32 to vector<16x16xf32>
    %93 = arith.mulf %91, %92 : vector<16x16xf32>
    %cst_43 = arith.constant dense<0xFF800000> : vector<16xf32>
    %94 = vector.multi_reduction <maximumf>, %93, %cst_43 [1] : vector<16x16xf32> to vector<16xf32>
    %95 = vector.shape_cast %94 : vector<16xf32> to vector<16x1xf32>
    %96 = vector.broadcast %95 : vector<16x1xf32> to vector<16x16xf32>
    %97 = arith.subf %93, %96 : vector<16x16xf32>
    %98 = math.exp %97 : vector<16x16xf32>
    %cst_44 = arith.constant dense<0.000000e+00> : vector<16xf32>
    %99 = vector.multi_reduction <add>, %98, %cst_44 [1] : vector<16x16xf32> to vector<16xf32>
    %100 = vector.shape_cast %99 : vector<16xf32> to vector<16x1xf32>
    %101 = vector.broadcast %100 : vector<16x1xf32> to vector<16x16xf32>
    %102 = arith.divf %98, %101 : vector<16x16xf32>
    %cst_45 = arith.constant dense<0.000000e+00> : vector<16x8xf32>
    %103 = tpu.matmul %102, %90, %cst_45 {dimension_numbers = #tpu.dot_dimension_numbers<[1], [0], [0], [1], [0, 0, 1, 1], [], []>} : vector<16x16xf32>, vector<16x8xf32>, vector<16x8xf32> -> vector<16x8xf32>
    %104 = vector.extract_strided_slice %87 {offsets = [0, 8], sizes = [16, 8], strides = [1, 1]} : vector<16x96xf32> to vector<16x8xf32>
    %105 = vector.extract_strided_slice %87 {offsets = [0, 40], sizes = [16, 8], strides = [1, 1]} : vector<16x96xf32> to vector<16x8xf32>
    %106 = vector.extract_strided_slice %87 {offsets = [0, 72], sizes = [16, 8], strides = [1, 1]} : vector<16x96xf32> to vector<16x8xf32>
    %cst_46 = arith.constant dense<0.000000e+00> : vector<16x16xf32>
    %107 = tpu.matmul %104, %105, %cst_46 {dimension_numbers = #tpu.dot_dimension_numbers<[1], [1], [0], [0], [0, 0, 1, 0], [], []>} : vector<16x8xf32>, vector<16x8xf32>, vector<16x16xf32> -> vector<16x16xf32>
    %cst_47 = arith.constant 0.353553385 : f32
    %108 = vector.broadcast %cst_47 : f32 to vector<16x16xf32>
    %109 = arith.mulf %107, %108 : vector<16x16xf32>
    %cst_48 = arith.constant dense<0xFF800000> : vector<16xf32>
    %110 = vector.multi_reduction <maximumf>, %109, %cst_48 [1] : vector<16x16xf32> to vector<16xf32>
    %111 = vector.shape_cast %110 : vector<16xf32> to vector<16x1xf32>
    %112 = vector.broadcast %111 : vector<16x1xf32> to vector<16x16xf32>
    %113 = arith.subf %109, %112 : vector<16x16xf32>
    %114 = math.exp %113 : vector<16x16xf32>
    %cst_49 = arith.constant dense<0.000000e+00> : vector<16xf32>
    %115 = vector.multi_reduction <add>, %114, %cst_49 [1] : vector<16x16xf32> to vector<16xf32>
    %116 = vector.shape_cast %115 : vector<16xf32> to vector<16x1xf32>
    %117 = vector.broadcast %116 : vector<16x1xf32> to vector<16x16xf32>
    %118 = arith.divf %114, %117 : vector<16x16xf32>
    %cst_50 = arith.constant dense<0.000000e+00> : vector<16x8xf32>
    %119 = tpu.matmul %118, %106, %cst_50 {dimension_numbers = #tpu.dot_dimension_numbers<[1], [0], [0], [1], [0, 0, 1, 1], [], []>} : vector<16x16xf32>, vector<16x8xf32>, vector<16x8xf32> -> vector<16x8xf32>
    %120 = vector.extract_strided_slice %87 {offsets = [0, 16], sizes = [16, 8], strides = [1, 1]} : vector<16x96xf32> to vector<16x8xf32>
    %121 = vector.extract_strided_slice %87 {offsets = [0, 48], sizes = [16, 8], strides = [1, 1]} : vector<16x96xf32> to vector<16x8xf32>
    %122 = vector.extract_strided_slice %87 {offsets = [0, 80], sizes = [16, 8], strides = [1, 1]} : vector<16x96xf32> to vector<16x8xf32>
    %cst_51 = arith.constant dense<0.000000e+00> : vector<16x16xf32>
    %123 = tpu.matmul %120, %121, %cst_51 {dimension_numbers = #tpu.dot_dimension_numbers<[1], [1], [0], [0], [0, 0, 1, 0], [], []>} : vector<16x8xf32>, vector<16x8xf32>, vector<16x16xf32> -> vector<16x16xf32>
    %cst_52 = arith.constant 0.353553385 : f32
    %124 = vector.broadcast %cst_52 : f32 to vector<16x16xf32>
    %125 = arith.mulf %123, %124 : vector<16x16xf32>
    %cst_53 = arith.constant dense<0xFF800000> : vector<16xf32>
    %126 = vector.multi_reduction <maximumf>, %125, %cst_53 [1] : vector<16x16xf32> to vector<16xf32>
    %127 = vector.shape_cast %126 : vector<16xf32> to vector<16x1xf32>
    %128 = vector.broadcast %127 : vector<16x1xf32> to vector<16x16xf32>
    %129 = arith.subf %125, %128 : vector<16x16xf32>
    %130 = math.exp %129 : vector<16x16xf32>
    %cst_54 = arith.constant dense<0.000000e+00> : vector<16xf32>
    %131 = vector.multi_reduction <add>, %130, %cst_54 [1] : vector<16x16xf32> to vector<16xf32>
    %132 = vector.shape_cast %131 : vector<16xf32> to vector<16x1xf32>
    %133 = vector.broadcast %132 : vector<16x1xf32> to vector<16x16xf32>
    %134 = arith.divf %130, %133 : vector<16x16xf32>
    %cst_55 = arith.constant dense<0.000000e+00> : vector<16x8xf32>
    %135 = tpu.matmul %134, %122, %cst_55 {dimension_numbers = #tpu.dot_dimension_numbers<[1], [0], [0], [1], [0, 0, 1, 1], [], []>} : vector<16x16xf32>, vector<16x8xf32>, vector<16x8xf32> -> vector<16x8xf32>
    %136 = vector.extract_strided_slice %87 {offsets = [0, 24], sizes = [16, 8], strides = [1, 1]} : vector<16x96xf32> to vector<16x8xf32>
    %137 = vector.extract_strided_slice %87 {offsets = [0, 56], sizes = [16, 8], strides = [1, 1]} : vector<16x96xf32> to vector<16x8xf32>
    %138 = vector.extract_strided_slice %87 {offsets = [0, 88], sizes = [16, 8], strides = [1, 1]} : vector<16x96xf32> to vector<16x8xf32>
    %cst_56 = arith.constant dense<0.000000e+00> : vector<16x16xf32>
    %139 = tpu.matmul %136, %137, %cst_56 {dimension_numbers = #tpu.dot_dimension_numbers<[1], [1], [0], [0], [0, 0, 1, 0], [], []>} : vector<16x8xf32>, vector<16x8xf32>, vector<16x16xf32> -> vector<16x16xf32>
    %cst_57 = arith.constant 0.353553385 : f32
    %140 = vector.broadcast %cst_57 : f32 to vector<16x16xf32>
    %141 = arith.mulf %139, %140 : vector<16x16xf32>
    %cst_58 = arith.constant dense<0xFF800000> : vector<16xf32>
    %142 = vector.multi_reduction <maximumf>, %141, %cst_58 [1] : vector<16x16xf32> to vector<16xf32>
    %143 = vector.shape_cast %142 : vector<16xf32> to vector<16x1xf32>
    %144 = vector.broadcast %143 : vector<16x1xf32> to vector<16x16xf32>
    %145 = arith.subf %141, %144 : vector<16x16xf32>
    %146 = math.exp %145 : vector<16x16xf32>
    %cst_59 = arith.constant dense<0.000000e+00> : vector<16xf32>
    %147 = vector.multi_reduction <add>, %146, %cst_59 [1] : vector<16x16xf32> to vector<16xf32>
    %148 = vector.shape_cast %147 : vector<16xf32> to vector<16x1xf32>
    %149 = vector.broadcast %148 : vector<16x1xf32> to vector<16x16xf32>
    %150 = arith.divf %146, %149 : vector<16x16xf32>
    %cst_60 = arith.constant dense<0.000000e+00> : vector<16x8xf32>
    %151 = tpu.matmul %150, %138, %cst_60 {dimension_numbers = #tpu.dot_dimension_numbers<[1], [0], [0], [1], [0, 0, 1, 1], [], []>} : vector<16x16xf32>, vector<16x8xf32>, vector<16x8xf32> -> vector<16x8xf32>
    %152 = tpu.concatenate %103, %119, %135, %151 in 1 : vector<16x8xf32>, vector<16x8xf32>, vector<16x8xf32>, vector<16x8xf32> -> vector<16x32xf32>
    %153 = tpu.concatenate %86, %152 in 0 : vector<16x32xf32>, vector<16x32xf32> -> vector<32x32xf32>
    %c0_61 = arith.constant 0 : index
    %c0_62 = arith.constant 0 : index
    %c0_63 = arith.constant 0 : index
    %154 = vector.load %arg7[%c0_61, %c0_62, %c0_63] : memref<2x32x32xf32, #tpu.memory_space<vmem>>, vector<1x32x32xf32>
    %155 = vector.shape_cast %154 : vector<1x32x32xf32> to vector<32x32xf32>
    %cst_64 = arith.constant dense<0.000000e+00> : vector<32x32xf32>
    %156 = tpu.matmul %153, %155, %cst_64 {dimension_numbers = #tpu.dot_dimension_numbers<[1], [0], [0], [1], [0, 0, 1, 1], [], []>} : vector<32x32xf32>, vector<32x32xf32>, vector<32x32xf32> -> vector<32x32xf32>
    %c0_65 = arith.constant 0 : index
    %c0_66 = arith.constant 0 : index
    %c0_67 = arith.constant 0 : index
    %157 = vector.load %arg8[%c0_65, %c0_66, %c0_67] : memref<2x1x32xf32, #tpu.memory_space<vmem>>, vector<1x1x32xf32>
    %158 = vector.shape_cast %157 : vector<1x1x32xf32> to vector<1x32xf32>
    %159 = vector.broadcast %158 : vector<1x32xf32> to vector<32x32xf32>
    %160 = arith.addf %156, %159 : vector<32x32xf32>
    %161 = arith.addf %13, %160 : vector<32x32xf32>
    %c0_68 = arith.constant 0 : index
    %c0_69 = arith.constant 0 : index
    %c0_70 = arith.constant 0 : index
    %162 = vector.load %arg9[%c0_68, %c0_69, %c0_70] : memref<2x1x32xf32, #tpu.memory_space<vmem>>, vector<1x1x32xf32>
    %163 = vector.shape_cast %162 : vector<1x1x32xf32> to vector<1x32xf32>
    %c0_71 = arith.constant 0 : index
    %c0_72 = arith.constant 0 : index
    %c0_73 = arith.constant 0 : index
    %164 = vector.load %arg10[%c0_71, %c0_72, %c0_73] : memref<2x1x32xf32, #tpu.memory_space<vmem>>, vector<1x1x32xf32>
    %165 = vector.shape_cast %164 : vector<1x1x32xf32> to vector<1x32xf32>
    %cst_74 = arith.constant dense<0.000000e+00> : vector<32xf32>
    %166 = vector.multi_reduction <add>, %161, %cst_74 [1] : vector<32x32xf32> to vector<32xf32>
    %167 = vector.shape_cast %166 : vector<32xf32> to vector<32x1xf32>
    %cst_75 = arith.constant 3.200000e+01 : f32
    %168 = vector.broadcast %cst_75 : f32 to vector<32x1xf32>
    %169 = arith.divf %167, %168 : vector<32x1xf32>
    %170 = vector.broadcast %169 : vector<32x1xf32> to vector<32x32xf32>
    %171 = arith.subf %161, %170 : vector<32x32xf32>
    %172 = arith.mulf %171, %171 : vector<32x32xf32>
    %cst_76 = arith.constant dense<0.000000e+00> : vector<32xf32>
    %173 = vector.multi_reduction <add>, %172, %cst_76 [1] : vector<32x32xf32> to vector<32xf32>
    %174 = vector.shape_cast %173 : vector<32xf32> to vector<32x1xf32>
    %cst_77 = arith.constant 3.200000e+01 : f32
    %175 = vector.broadcast %cst_77 : f32 to vector<32x1xf32>
    %176 = arith.divf %174, %175 : vector<32x1xf32>
    %cst_78 = arith.constant 9.99999974E-6 : f32
    %177 = vector.broadcast %cst_78 : f32 to vector<32x1xf32>
    %178 = arith.addf %176, %177 : vector<32x1xf32>
    %179 = math.rsqrt %178 : vector<32x1xf32>
    %180 = vector.broadcast %179 : vector<32x1xf32> to vector<32x32xf32>
    %181 = arith.mulf %171, %180 : vector<32x32xf32>
    %182 = vector.broadcast %163 : vector<1x32xf32> to vector<32x32xf32>
    %183 = arith.mulf %181, %182 : vector<32x32xf32>
    %184 = vector.broadcast %165 : vector<1x32xf32> to vector<32x32xf32>
    %185 = arith.addf %183, %184 : vector<32x32xf32>
    %c0_79 = arith.constant 0 : index
    %c0_80 = arith.constant 0 : index
    %c0_81 = arith.constant 0 : index
    %186 = vector.load %arg11[%c0_79, %c0_80, %c0_81] : memref<2x32x128xf32, #tpu.memory_space<vmem>>, vector<1x32x128xf32>
    %187 = vector.shape_cast %186 : vector<1x32x128xf32> to vector<32x128xf32>
    %cst_82 = arith.constant dense<0.000000e+00> : vector<32x128xf32>
    %188 = tpu.matmul %185, %187, %cst_82 {dimension_numbers = #tpu.dot_dimension_numbers<[1], [0], [0], [1], [0, 0, 1, 1], [], []>} : vector<32x32xf32>, vector<32x128xf32>, vector<32x128xf32> -> vector<32x128xf32>
    %c0_83 = arith.constant 0 : index
    %c0_84 = arith.constant 0 : index
    %c0_85 = arith.constant 0 : index
    %189 = vector.load %arg12[%c0_83, %c0_84, %c0_85] : memref<2x1x128xf32, #tpu.memory_space<vmem>>, vector<1x1x128xf32>
    %190 = vector.shape_cast %189 : vector<1x1x128xf32> to vector<1x128xf32>
    %191 = vector.broadcast %190 : vector<1x128xf32> to vector<32x128xf32>
    %192 = arith.addf %188, %191 : vector<32x128xf32>
    %cst_86 = arith.constant 0.000000e+00 : f32
    %193 = vector.broadcast %cst_86 : f32 to vector<32x128xf32>
    %194 = arith.maximumf %192, %193 : vector<32x128xf32>
    %c0_87 = arith.constant 0 : index
    %c0_88 = arith.constant 0 : index
    %c0_89 = arith.constant 0 : index
    %195 = vector.load %arg13[%c0_87, %c0_88, %c0_89] : memref<2x128x32xf32, #tpu.memory_space<vmem>>, vector<1x128x32xf32>
    %196 = vector.shape_cast %195 : vector<1x128x32xf32> to vector<128x32xf32>
    %cst_90 = arith.constant dense<0.000000e+00> : vector<32x32xf32>
    %197 = tpu.matmul %194, %196, %cst_90 {dimension_numbers = #tpu.dot_dimension_numbers<[1], [0], [0], [1], [0, 0, 1, 1], [], []>} : vector<32x128xf32>, vector<128x32xf32>, vector<32x32xf32> -> vector<32x32xf32>
    %c0_91 = arith.constant 0 : index
    %c0_92 = arith.constant 0 : index
    %c0_93 = arith.constant 0 : index
    %198 = vector.load %arg14[%c0_91, %c0_92, %c0_93] : memref<2x1x32xf32, #tpu.memory_space<vmem>>, vector<1x1x32xf32>
    %199 = vector.shape_cast %198 : vector<1x1x32xf32> to vector<1x32xf32>
    %200 = vector.broadcast %199 : vector<1x32xf32> to vector<32x32xf32>
    %201 = arith.addf %197, %200 : vector<32x32xf32>
    %202 = arith.addf %185, %201 : vector<32x32xf32>
    %c0_94 = arith.constant 0 : index
    %c0_95 = arith.constant 0 : index
    %c0_96 = arith.constant 0 : index
    %203 = vector.load %arg15[%c0_94, %c0_95, %c0_96] : memref<2x1x32xf32, #tpu.memory_space<vmem>>, vector<1x1x32xf32>
    %204 = vector.shape_cast %203 : vector<1x1x32xf32> to vector<1x32xf32>
    %c0_97 = arith.constant 0 : index
    %c0_98 = arith.constant 0 : index
    %c0_99 = arith.constant 0 : index
    %205 = vector.load %arg16[%c0_97, %c0_98, %c0_99] : memref<2x1x32xf32, #tpu.memory_space<vmem>>, vector<1x1x32xf32>
    %206 = vector.shape_cast %205 : vector<1x1x32xf32> to vector<1x32xf32>
    %cst_100 = arith.constant dense<0.000000e+00> : vector<32xf32>
    %207 = vector.multi_reduction <add>, %202, %cst_100 [1] : vector<32x32xf32> to vector<32xf32>
    %208 = vector.shape_cast %207 : vector<32xf32> to vector<32x1xf32>
    %cst_101 = arith.constant 3.200000e+01 : f32
    %209 = vector.broadcast %cst_101 : f32 to vector<32x1xf32>
    %210 = arith.divf %208, %209 : vector<32x1xf32>
    %211 = vector.broadcast %210 : vector<32x1xf32> to vector<32x32xf32>
    %212 = arith.subf %202, %211 : vector<32x32xf32>
    %213 = arith.mulf %212, %212 : vector<32x32xf32>
    %cst_102 = arith.constant dense<0.000000e+00> : vector<32xf32>
    %214 = vector.multi_reduction <add>, %213, %cst_102 [1] : vector<32x32xf32> to vector<32xf32>
    %215 = vector.shape_cast %214 : vector<32xf32> to vector<32x1xf32>
    %cst_103 = arith.constant 3.200000e+01 : f32
    %216 = vector.broadcast %cst_103 : f32 to vector<32x1xf32>
    %217 = arith.divf %215, %216 : vector<32x1xf32>
    %cst_104 = arith.constant 9.99999974E-6 : f32
    %218 = vector.broadcast %cst_104 : f32 to vector<32x1xf32>
    %219 = arith.addf %217, %218 : vector<32x1xf32>
    %220 = math.rsqrt %219 : vector<32x1xf32>
    %221 = vector.broadcast %220 : vector<32x1xf32> to vector<32x32xf32>
    %222 = arith.mulf %212, %221 : vector<32x32xf32>
    %223 = vector.broadcast %204 : vector<1x32xf32> to vector<32x32xf32>
    %224 = arith.mulf %222, %223 : vector<32x32xf32>
    %225 = vector.broadcast %206 : vector<1x32xf32> to vector<32x32xf32>
    %226 = arith.addf %224, %225 : vector<32x32xf32>
    %c1 = arith.constant 1 : index
    %c0_105 = arith.constant 0 : index
    %c0_106 = arith.constant 0 : index
    %227 = vector.load %arg5[%c1, %c0_105, %c0_106] : memref<2x32x96xf32, #tpu.memory_space<vmem>>, vector<1x32x96xf32>
    %228 = vector.shape_cast %227 : vector<1x32x96xf32> to vector<32x96xf32>
    %cst_107 = arith.constant dense<0.000000e+00> : vector<32x96xf32>
    %229 = tpu.matmul %226, %228, %cst_107 {dimension_numbers = #tpu.dot_dimension_numbers<[1], [0], [0], [1], [0, 0, 1, 1], [], []>} : vector<32x32xf32>, vector<32x96xf32>, vector<32x96xf32> -> vector<32x96xf32>
    %c1_108 = arith.constant 1 : index
    %c0_109 = arith.constant 0 : index
    %c0_110 = arith.constant 0 : index
    %230 = vector.load %arg6[%c1_108, %c0_109, %c0_110] : memref<2x1x96xf32, #tpu.memory_space<vmem>>, vector<1x1x96xf32>
    %231 = vector.shape_cast %230 : vector<1x1x96xf32> to vector<1x96xf32>
    %232 = vector.broadcast %231 : vector<1x96xf32> to vector<32x96xf32>
    %233 = arith.addf %229, %232 : vector<32x96xf32>
    %234 = vector.extract_strided_slice %233 {offsets = [0, 0], sizes = [16, 96], strides = [1, 1]} : vector<32x96xf32> to vector<16x96xf32>
    %235 = vector.extract_strided_slice %234 {offsets = [0, 0], sizes = [16, 8], strides = [1, 1]} : vector<16x96xf32> to vector<16x8xf32>
    %236 = vector.extract_strided_slice %234 {offsets = [0, 32], sizes = [16, 8], strides = [1, 1]} : vector<16x96xf32> to vector<16x8xf32>
    %237 = vector.extract_strided_slice %234 {offsets = [0, 64], sizes = [16, 8], strides = [1, 1]} : vector<16x96xf32> to vector<16x8xf32>
    %cst_111 = arith.constant dense<0.000000e+00> : vector<16x16xf32>
    %238 = tpu.matmul %235, %236, %cst_111 {dimension_numbers = #tpu.dot_dimension_numbers<[1], [1], [0], [0], [0, 0, 1, 0], [], []>} : vector<16x8xf32>, vector<16x8xf32>, vector<16x16xf32> -> vector<16x16xf32>
    %cst_112 = arith.constant 0.353553385 : f32
    %239 = vector.broadcast %cst_112 : f32 to vector<16x16xf32>
    %240 = arith.mulf %238, %239 : vector<16x16xf32>
    %cst_113 = arith.constant dense<0xFF800000> : vector<16xf32>
    %241 = vector.multi_reduction <maximumf>, %240, %cst_113 [1] : vector<16x16xf32> to vector<16xf32>
    %242 = vector.shape_cast %241 : vector<16xf32> to vector<16x1xf32>
    %243 = vector.broadcast %242 : vector<16x1xf32> to vector<16x16xf32>
    %244 = arith.subf %240, %243 : vector<16x16xf32>
    %245 = math.exp %244 : vector<16x16xf32>
    %cst_114 = arith.constant dense<0.000000e+00> : vector<16xf32>
    %246 = vector.multi_reduction <add>, %245, %cst_114 [1] : vector<16x16xf32> to vector<16xf32>
    %247 = vector.shape_cast %246 : vector<16xf32> to vector<16x1xf32>
    %248 = vector.broadcast %247 : vector<16x1xf32> to vector<16x16xf32>
    %249 = arith.divf %245, %248 : vector<16x16xf32>
    %cst_115 = arith.constant dense<0.000000e+00> : vector<16x8xf32>
    %250 = tpu.matmul %249, %237, %cst_115 {dimension_numbers = #tpu.dot_dimension_numbers<[1], [0], [0], [1], [0, 0, 1, 1], [], []>} : vector<16x16xf32>, vector<16x8xf32>, vector<16x8xf32> -> vector<16x8xf32>
    %251 = vector.extract_strided_slice %234 {offsets = [0, 8], sizes = [16, 8], strides = [1, 1]} : vector<16x96xf32> to vector<16x8xf32>
    %252 = vector.extract_strided_slice %234 {offsets = [0, 40], sizes = [16, 8], strides = [1, 1]} : vector<16x96xf32> to vector<16x8xf32>
    %253 = vector.extract_strided_slice %234 {offsets = [0, 72], sizes = [16, 8], strides = [1, 1]} : vector<16x96xf32> to vector<16x8xf32>
    %cst_116 = arith.constant dense<0.000000e+00> : vector<16x16xf32>
    %254 = tpu.matmul %251, %252, %cst_116 {dimension_numbers = #tpu.dot_dimension_numbers<[1], [1], [0], [0], [0, 0, 1, 0], [], []>} : vector<16x8xf32>, vector<16x8xf32>, vector<16x16xf32> -> vector<16x16xf32>
    %cst_117 = arith.constant 0.353553385 : f32
    %255 = vector.broadcast %cst_117 : f32 to vector<16x16xf32>
    %256 = arith.mulf %254, %255 : vector<16x16xf32>
    %cst_118 = arith.constant dense<0xFF800000> : vector<16xf32>
    %257 = vector.multi_reduction <maximumf>, %256, %cst_118 [1] : vector<16x16xf32> to vector<16xf32>
    %258 = vector.shape_cast %257 : vector<16xf32> to vector<16x1xf32>
    %259 = vector.broadcast %258 : vector<16x1xf32> to vector<16x16xf32>
    %260 = arith.subf %256, %259 : vector<16x16xf32>
    %261 = math.exp %260 : vector<16x16xf32>
    %cst_119 = arith.constant dense<0.000000e+00> : vector<16xf32>
    %262 = vector.multi_reduction <add>, %261, %cst_119 [1] : vector<16x16xf32> to vector<16xf32>
    %263 = vector.shape_cast %262 : vector<16xf32> to vector<16x1xf32>
    %264 = vector.broadcast %263 : vector<16x1xf32> to vector<16x16xf32>
    %265 = arith.divf %261, %264 : vector<16x16xf32>
    %cst_120 = arith.constant dense<0.000000e+00> : vector<16x8xf32>
    %266 = tpu.matmul %265, %253, %cst_120 {dimension_numbers = #tpu.dot_dimension_numbers<[1], [0], [0], [1], [0, 0, 1, 1], [], []>} : vector<16x16xf32>, vector<16x8xf32>, vector<16x8xf32> -> vector<16x8xf32>
    %267 = vector.extract_strided_slice %234 {offsets = [0, 16], sizes = [16, 8], strides = [1, 1]} : vector<16x96xf32> to vector<16x8xf32>
    %268 = vector.extract_strided_slice %234 {offsets = [0, 48], sizes = [16, 8], strides = [1, 1]} : vector<16x96xf32> to vector<16x8xf32>
    %269 = vector.extract_strided_slice %234 {offsets = [0, 80], sizes = [16, 8], strides = [1, 1]} : vector<16x96xf32> to vector<16x8xf32>
    %cst_121 = arith.constant dense<0.000000e+00> : vector<16x16xf32>
    %270 = tpu.matmul %267, %268, %cst_121 {dimension_numbers = #tpu.dot_dimension_numbers<[1], [1], [0], [0], [0, 0, 1, 0], [], []>} : vector<16x8xf32>, vector<16x8xf32>, vector<16x16xf32> -> vector<16x16xf32>
    %cst_122 = arith.constant 0.353553385 : f32
    %271 = vector.broadcast %cst_122 : f32 to vector<16x16xf32>
    %272 = arith.mulf %270, %271 : vector<16x16xf32>
    %cst_123 = arith.constant dense<0xFF800000> : vector<16xf32>
    %273 = vector.multi_reduction <maximumf>, %272, %cst_123 [1] : vector<16x16xf32> to vector<16xf32>
    %274 = vector.shape_cast %273 : vector<16xf32> to vector<16x1xf32>
    %275 = vector.broadcast %274 : vector<16x1xf32> to vector<16x16xf32>
    %276 = arith.subf %272, %275 : vector<16x16xf32>
    %277 = math.exp %276 : vector<16x16xf32>
    %cst_124 = arith.constant dense<0.000000e+00> : vector<16xf32>
    %278 = vector.multi_reduction <add>, %277, %cst_124 [1] : vector<16x16xf32> to vector<16xf32>
    %279 = vector.shape_cast %278 : vector<16xf32> to vector<16x1xf32>
    %280 = vector.broadcast %279 : vector<16x1xf32> to vector<16x16xf32>
    %281 = arith.divf %277, %280 : vector<16x16xf32>
    %cst_125 = arith.constant dense<0.000000e+00> : vector<16x8xf32>
    %282 = tpu.matmul %281, %269, %cst_125 {dimension_numbers = #tpu.dot_dimension_numbers<[1], [0], [0], [1], [0, 0, 1, 1], [], []>} : vector<16x16xf32>, vector<16x8xf32>, vector<16x8xf32> -> vector<16x8xf32>
    %283 = vector.extract_strided_slice %234 {offsets = [0, 24], sizes = [16, 8], strides = [1, 1]} : vector<16x96xf32> to vector<16x8xf32>
    %284 = vector.extract_strided_slice %234 {offsets = [0, 56], sizes = [16, 8], strides = [1, 1]} : vector<16x96xf32> to vector<16x8xf32>
    %285 = vector.extract_strided_slice %234 {offsets = [0, 88], sizes = [16, 8], strides = [1, 1]} : vector<16x96xf32> to vector<16x8xf32>
    %cst_126 = arith.constant dense<0.000000e+00> : vector<16x16xf32>
    %286 = tpu.matmul %283, %284, %cst_126 {dimension_numbers = #tpu.dot_dimension_numbers<[1], [1], [0], [0], [0, 0, 1, 0], [], []>} : vector<16x8xf32>, vector<16x8xf32>, vector<16x16xf32> -> vector<16x16xf32>
    %cst_127 = arith.constant 0.353553385 : f32
    %287 = vector.broadcast %cst_127 : f32 to vector<16x16xf32>
    %288 = arith.mulf %286, %287 : vector<16x16xf32>
    %cst_128 = arith.constant dense<0xFF800000> : vector<16xf32>
    %289 = vector.multi_reduction <maximumf>, %288, %cst_128 [1] : vector<16x16xf32> to vector<16xf32>
    %290 = vector.shape_cast %289 : vector<16xf32> to vector<16x1xf32>
    %291 = vector.broadcast %290 : vector<16x1xf32> to vector<16x16xf32>
    %292 = arith.subf %288, %291 : vector<16x16xf32>
    %293 = math.exp %292 : vector<16x16xf32>
    %cst_129 = arith.constant dense<0.000000e+00> : vector<16xf32>
    %294 = vector.multi_reduction <add>, %293, %cst_129 [1] : vector<16x16xf32> to vector<16xf32>
    %295 = vector.shape_cast %294 : vector<16xf32> to vector<16x1xf32>
    %296 = vector.broadcast %295 : vector<16x1xf32> to vector<16x16xf32>
    %297 = arith.divf %293, %296 : vector<16x16xf32>
    %cst_130 = arith.constant dense<0.000000e+00> : vector<16x8xf32>
    %298 = tpu.matmul %297, %285, %cst_130 {dimension_numbers = #tpu.dot_dimension_numbers<[1], [0], [0], [1], [0, 0, 1, 1], [], []>} : vector<16x16xf32>, vector<16x8xf32>, vector<16x8xf32> -> vector<16x8xf32>
    %299 = tpu.concatenate %250, %266, %282, %298 in 1 : vector<16x8xf32>, vector<16x8xf32>, vector<16x8xf32>, vector<16x8xf32> -> vector<16x32xf32>
    %300 = vector.extract_strided_slice %233 {offsets = [16, 0], sizes = [16, 96], strides = [1, 1]} : vector<32x96xf32> to vector<16x96xf32>
    %301 = vector.extract_strided_slice %300 {offsets = [0, 0], sizes = [16, 8], strides = [1, 1]} : vector<16x96xf32> to vector<16x8xf32>
    %302 = vector.extract_strided_slice %300 {offsets = [0, 32], sizes = [16, 8], strides = [1, 1]} : vector<16x96xf32> to vector<16x8xf32>
    %303 = vector.extract_strided_slice %300 {offsets = [0, 64], sizes = [16, 8], strides = [1, 1]} : vector<16x96xf32> to vector<16x8xf32>
    %cst_131 = arith.constant dense<0.000000e+00> : vector<16x16xf32>
    %304 = tpu.matmul %301, %302, %cst_131 {dimension_numbers = #tpu.dot_dimension_numbers<[1], [1], [0], [0], [0, 0, 1, 0], [], []>} : vector<16x8xf32>, vector<16x8xf32>, vector<16x16xf32> -> vector<16x16xf32>
    %cst_132 = arith.constant 0.353553385 : f32
    %305 = vector.broadcast %cst_132 : f32 to vector<16x16xf32>
    %306 = arith.mulf %304, %305 : vector<16x16xf32>
    %cst_133 = arith.constant dense<0xFF800000> : vector<16xf32>
    %307 = vector.multi_reduction <maximumf>, %306, %cst_133 [1] : vector<16x16xf32> to vector<16xf32>
    %308 = vector.shape_cast %307 : vector<16xf32> to vector<16x1xf32>
    %309 = vector.broadcast %308 : vector<16x1xf32> to vector<16x16xf32>
    %310 = arith.subf %306, %309 : vector<16x16xf32>
    %311 = math.exp %310 : vector<16x16xf32>
    %cst_134 = arith.constant dense<0.000000e+00> : vector<16xf32>
    %312 = vector.multi_reduction <add>, %311, %cst_134 [1] : vector<16x16xf32> to vector<16xf32>
    %313 = vector.shape_cast %312 : vector<16xf32> to vector<16x1xf32>
    %314 = vector.broadcast %313 : vector<16x1xf32> to vector<16x16xf32>
    %315 = arith.divf %311, %314 : vector<16x16xf32>
    %cst_135 = arith.constant dense<0.000000e+00> : vector<16x8xf32>
    %316 = tpu.matmul %315, %303, %cst_135 {dimension_numbers = #tpu.dot_dimension_numbers<[1], [0], [0], [1], [0, 0, 1, 1], [], []>} : vector<16x16xf32>, vector<16x8xf32>, vector<16x8xf32> -> vector<16x8xf32>
    %317 = vector.extract_strided_slice %300 {offsets = [0, 8], sizes = [16, 8], strides = [1, 1]} : vector<16x96xf32> to vector<16x8xf32>
    %318 = vector.extract_strided_slice %300 {offsets = [0, 40], sizes = [16, 8], strides = [1, 1]} : vector<16x96xf32> to vector<16x8xf32>
    %319 = vector.extract_strided_slice %300 {offsets = [0, 72], sizes = [16, 8], strides = [1, 1]} : vector<16x96xf32> to vector<16x8xf32>
    %cst_136 = arith.constant dense<0.000000e+00> : vector<16x16xf32>
    %320 = tpu.matmul %317, %318, %cst_136 {dimension_numbers = #tpu.dot_dimension_numbers<[1], [1], [0], [0], [0, 0, 1, 0], [], []>} : vector<16x8xf32>, vector<16x8xf32>, vector<16x16xf32> -> vector<16x16xf32>
    %cst_137 = arith.constant 0.353553385 : f32
    %321 = vector.broadcast %cst_137 : f32 to vector<16x16xf32>
    %322 = arith.mulf %320, %321 : vector<16x16xf32>
    %cst_138 = arith.constant dense<0xFF800000> : vector<16xf32>
    %323 = vector.multi_reduction <maximumf>, %322, %cst_138 [1] : vector<16x16xf32> to vector<16xf32>
    %324 = vector.shape_cast %323 : vector<16xf32> to vector<16x1xf32>
    %325 = vector.broadcast %324 : vector<16x1xf32> to vector<16x16xf32>
    %326 = arith.subf %322, %325 : vector<16x16xf32>
    %327 = math.exp %326 : vector<16x16xf32>
    %cst_139 = arith.constant dense<0.000000e+00> : vector<16xf32>
    %328 = vector.multi_reduction <add>, %327, %cst_139 [1] : vector<16x16xf32> to vector<16xf32>
    %329 = vector.shape_cast %328 : vector<16xf32> to vector<16x1xf32>
    %330 = vector.broadcast %329 : vector<16x1xf32> to vector<16x16xf32>
    %331 = arith.divf %327, %330 : vector<16x16xf32>
    %cst_140 = arith.constant dense<0.000000e+00> : vector<16x8xf32>
    %332 = tpu.matmul %331, %319, %cst_140 {dimension_numbers = #tpu.dot_dimension_numbers<[1], [0], [0], [1], [0, 0, 1, 1], [], []>} : vector<16x16xf32>, vector<16x8xf32>, vector<16x8xf32> -> vector<16x8xf32>
    %333 = vector.extract_strided_slice %300 {offsets = [0, 16], sizes = [16, 8], strides = [1, 1]} : vector<16x96xf32> to vector<16x8xf32>
    %334 = vector.extract_strided_slice %300 {offsets = [0, 48], sizes = [16, 8], strides = [1, 1]} : vector<16x96xf32> to vector<16x8xf32>
    %335 = vector.extract_strided_slice %300 {offsets = [0, 80], sizes = [16, 8], strides = [1, 1]} : vector<16x96xf32> to vector<16x8xf32>
    %cst_141 = arith.constant dense<0.000000e+00> : vector<16x16xf32>
    %336 = tpu.matmul %333, %334, %cst_141 {dimension_numbers = #tpu.dot_dimension_numbers<[1], [1], [0], [0], [0, 0, 1, 0], [], []>} : vector<16x8xf32>, vector<16x8xf32>, vector<16x16xf32> -> vector<16x16xf32>
    %cst_142 = arith.constant 0.353553385 : f32
    %337 = vector.broadcast %cst_142 : f32 to vector<16x16xf32>
    %338 = arith.mulf %336, %337 : vector<16x16xf32>
    %cst_143 = arith.constant dense<0xFF800000> : vector<16xf32>
    %339 = vector.multi_reduction <maximumf>, %338, %cst_143 [1] : vector<16x16xf32> to vector<16xf32>
    %340 = vector.shape_cast %339 : vector<16xf32> to vector<16x1xf32>
    %341 = vector.broadcast %340 : vector<16x1xf32> to vector<16x16xf32>
    %342 = arith.subf %338, %341 : vector<16x16xf32>
    %343 = math.exp %342 : vector<16x16xf32>
    %cst_144 = arith.constant dense<0.000000e+00> : vector<16xf32>
    %344 = vector.multi_reduction <add>, %343, %cst_144 [1] : vector<16x16xf32> to vector<16xf32>
    %345 = vector.shape_cast %344 : vector<16xf32> to vector<16x1xf32>
    %346 = vector.broadcast %345 : vector<16x1xf32> to vector<16x16xf32>
    %347 = arith.divf %343, %346 : vector<16x16xf32>
    %cst_145 = arith.constant dense<0.000000e+00> : vector<16x8xf32>
    %348 = tpu.matmul %347, %335, %cst_145 {dimension_numbers = #tpu.dot_dimension_numbers<[1], [0], [0], [1], [0, 0, 1, 1], [], []>} : vector<16x16xf32>, vector<16x8xf32>, vector<16x8xf32> -> vector<16x8xf32>
    %349 = vector.extract_strided_slice %300 {offsets = [0, 24], sizes = [16, 8], strides = [1, 1]} : vector<16x96xf32> to vector<16x8xf32>
    %350 = vector.extract_strided_slice %300 {offsets = [0, 56], sizes = [16, 8], strides = [1, 1]} : vector<16x96xf32> to vector<16x8xf32>
    %351 = vector.extract_strided_slice %300 {offsets = [0, 88], sizes = [16, 8], strides = [1, 1]} : vector<16x96xf32> to vector<16x8xf32>
    %cst_146 = arith.constant dense<0.000000e+00> : vector<16x16xf32>
    %352 = tpu.matmul %349, %350, %cst_146 {dimension_numbers = #tpu.dot_dimension_numbers<[1], [1], [0], [0], [0, 0, 1, 0], [], []>} : vector<16x8xf32>, vector<16x8xf32>, vector<16x16xf32> -> vector<16x16xf32>
    %cst_147 = arith.constant 0.353553385 : f32
    %353 = vector.broadcast %cst_147 : f32 to vector<16x16xf32>
    %354 = arith.mulf %352, %353 : vector<16x16xf32>
    %cst_148 = arith.constant dense<0xFF800000> : vector<16xf32>
    %355 = vector.multi_reduction <maximumf>, %354, %cst_148 [1] : vector<16x16xf32> to vector<16xf32>
    %356 = vector.shape_cast %355 : vector<16xf32> to vector<16x1xf32>
    %357 = vector.broadcast %356 : vector<16x1xf32> to vector<16x16xf32>
    %358 = arith.subf %354, %357 : vector<16x16xf32>
    %359 = math.exp %358 : vector<16x16xf32>
    %cst_149 = arith.constant dense<0.000000e+00> : vector<16xf32>
    %360 = vector.multi_reduction <add>, %359, %cst_149 [1] : vector<16x16xf32> to vector<16xf32>
    %361 = vector.shape_cast %360 : vector<16xf32> to vector<16x1xf32>
    %362 = vector.broadcast %361 : vector<16x1xf32> to vector<16x16xf32>
    %363 = arith.divf %359, %362 : vector<16x16xf32>
    %cst_150 = arith.constant dense<0.000000e+00> : vector<16x8xf32>
    %364 = tpu.matmul %363, %351, %cst_150 {dimension_numbers = #tpu.dot_dimension_numbers<[1], [0], [0], [1], [0, 0, 1, 1], [], []>} : vector<16x16xf32>, vector<16x8xf32>, vector<16x8xf32> -> vector<16x8xf32>
    %365 = tpu.concatenate %316, %332, %348, %364 in 1 : vector<16x8xf32>, vector<16x8xf32>, vector<16x8xf32>, vector<16x8xf32> -> vector<16x32xf32>
    %366 = tpu.concatenate %299, %365 in 0 : vector<16x32xf32>, vector<16x32xf32> -> vector<32x32xf32>
    %c1_151 = arith.constant 1 : index
    %c0_152 = arith.constant 0 : index
    %c0_153 = arith.constant 0 : index
    %367 = vector.load %arg7[%c1_151, %c0_152, %c0_153] : memref<2x32x32xf32, #tpu.memory_space<vmem>>, vector<1x32x32xf32>
    %368 = vector.shape_cast %367 : vector<1x32x32xf32> to vector<32x32xf32>
    %cst_154 = arith.constant dense<0.000000e+00> : vector<32x32xf32>
    %369 = tpu.matmul %366, %368, %cst_154 {dimension_numbers = #tpu.dot_dimension_numbers<[1], [0], [0], [1], [0, 0, 1, 1], [], []>} : vector<32x32xf32>, vector<32x32xf32>, vector<32x32xf32> -> vector<32x32xf32>
    %c1_155 = arith.constant 1 : index
    %c0_156 = arith.constant 0 : index
    %c0_157 = arith.constant 0 : index
    %370 = vector.load %arg8[%c1_155, %c0_156, %c0_157] : memref<2x1x32xf32, #tpu.memory_space<vmem>>, vector<1x1x32xf32>
    %371 = vector.shape_cast %370 : vector<1x1x32xf32> to vector<1x32xf32>
    %372 = vector.broadcast %371 : vector<1x32xf32> to vector<32x32xf32>
    %373 = arith.addf %369, %372 : vector<32x32xf32>
    %374 = arith.addf %226, %373 : vector<32x32xf32>
    %c1_158 = arith.constant 1 : index
    %c0_159 = arith.constant 0 : index
    %c0_160 = arith.constant 0 : index
    %375 = vector.load %arg9[%c1_158, %c0_159, %c0_160] : memref<2x1x32xf32, #tpu.memory_space<vmem>>, vector<1x1x32xf32>
    %376 = vector.shape_cast %375 : vector<1x1x32xf32> to vector<1x32xf32>
    %c1_161 = arith.constant 1 : index
    %c0_162 = arith.constant 0 : index
    %c0_163 = arith.constant 0 : index
    %377 = vector.load %arg10[%c1_161, %c0_162, %c0_163] : memref<2x1x32xf32, #tpu.memory_space<vmem>>, vector<1x1x32xf32>
    %378 = vector.shape_cast %377 : vector<1x1x32xf32> to vector<1x32xf32>
    %cst_164 = arith.constant dense<0.000000e+00> : vector<32xf32>
    %379 = vector.multi_reduction <add>, %374, %cst_164 [1] : vector<32x32xf32> to vector<32xf32>
    %380 = vector.shape_cast %379 : vector<32xf32> to vector<32x1xf32>
    %cst_165 = arith.constant 3.200000e+01 : f32
    %381 = vector.broadcast %cst_165 : f32 to vector<32x1xf32>
    %382 = arith.divf %380, %381 : vector<32x1xf32>
    %383 = vector.broadcast %382 : vector<32x1xf32> to vector<32x32xf32>
    %384 = arith.subf %374, %383 : vector<32x32xf32>
    %385 = arith.mulf %384, %384 : vector<32x32xf32>
    %cst_166 = arith.constant dense<0.000000e+00> : vector<32xf32>
    %386 = vector.multi_reduction <add>, %385, %cst_166 [1] : vector<32x32xf32> to vector<32xf32>
    %387 = vector.shape_cast %386 : vector<32xf32> to vector<32x1xf32>
    %cst_167 = arith.constant 3.200000e+01 : f32
    %388 = vector.broadcast %cst_167 : f32 to vector<32x1xf32>
    %389 = arith.divf %387, %388 : vector<32x1xf32>
    %cst_168 = arith.constant 9.99999974E-6 : f32
    %390 = vector.broadcast %cst_168 : f32 to vector<32x1xf32>
    %391 = arith.addf %389, %390 : vector<32x1xf32>
    %392 = math.rsqrt %391 : vector<32x1xf32>
    %393 = vector.broadcast %392 : vector<32x1xf32> to vector<32x32xf32>
    %394 = arith.mulf %384, %393 : vector<32x32xf32>
    %395 = vector.broadcast %376 : vector<1x32xf32> to vector<32x32xf32>
    %396 = arith.mulf %394, %395 : vector<32x32xf32>
    %397 = vector.broadcast %378 : vector<1x32xf32> to vector<32x32xf32>
    %398 = arith.addf %396, %397 : vector<32x32xf32>
    %c1_169 = arith.constant 1 : index
    %c0_170 = arith.constant 0 : index
    %c0_171 = arith.constant 0 : index
    %399 = vector.load %arg11[%c1_169, %c0_170, %c0_171] : memref<2x32x128xf32, #tpu.memory_space<vmem>>, vector<1x32x128xf32>
    %400 = vector.shape_cast %399 : vector<1x32x128xf32> to vector<32x128xf32>
    %cst_172 = arith.constant dense<0.000000e+00> : vector<32x128xf32>
    %401 = tpu.matmul %398, %400, %cst_172 {dimension_numbers = #tpu.dot_dimension_numbers<[1], [0], [0], [1], [0, 0, 1, 1], [], []>} : vector<32x32xf32>, vector<32x128xf32>, vector<32x128xf32> -> vector<32x128xf32>
    %c1_173 = arith.constant 1 : index
    %c0_174 = arith.constant 0 : index
    %c0_175 = arith.constant 0 : index
    %402 = vector.load %arg12[%c1_173, %c0_174, %c0_175] : memref<2x1x128xf32, #tpu.memory_space<vmem>>, vector<1x1x128xf32>
    %403 = vector.shape_cast %402 : vector<1x1x128xf32> to vector<1x128xf32>
    %404 = vector.broadcast %403 : vector<1x128xf32> to vector<32x128xf32>
    %405 = arith.addf %401, %404 : vector<32x128xf32>
    %cst_176 = arith.constant 0.000000e+00 : f32
    %406 = vector.broadcast %cst_176 : f32 to vector<32x128xf32>
    %407 = arith.maximumf %405, %406 : vector<32x128xf32>
    %c1_177 = arith.constant 1 : index
    %c0_178 = arith.constant 0 : index
    %c0_179 = arith.constant 0 : index
    %408 = vector.load %arg13[%c1_177, %c0_178, %c0_179] : memref<2x128x32xf32, #tpu.memory_space<vmem>>, vector<1x128x32xf32>
    %409 = vector.shape_cast %408 : vector<1x128x32xf32> to vector<128x32xf32>
    %cst_180 = arith.constant dense<0.000000e+00> : vector<32x32xf32>
    %410 = tpu.matmul %407, %409, %cst_180 {dimension_numbers = #tpu.dot_dimension_numbers<[1], [0], [0], [1], [0, 0, 1, 1], [], []>} : vector<32x128xf32>, vector<128x32xf32>, vector<32x32xf32> -> vector<32x32xf32>
    %c1_181 = arith.constant 1 : index
    %c0_182 = arith.constant 0 : index
    %c0_183 = arith.constant 0 : index
    %411 = vector.load %arg14[%c1_181, %c0_182, %c0_183] : memref<2x1x32xf32, #tpu.memory_space<vmem>>, vector<1x1x32xf32>
    %412 = vector.shape_cast %411 : vector<1x1x32xf32> to vector<1x32xf32>
    %413 = vector.broadcast %412 : vector<1x32xf32> to vector<32x32xf32>
    %414 = arith.addf %410, %413 : vector<32x32xf32>
    %415 = arith.addf %398, %414 : vector<32x32xf32>
    %c1_184 = arith.constant 1 : index
    %c0_185 = arith.constant 0 : index
    %c0_186 = arith.constant 0 : index
    %416 = vector.load %arg15[%c1_184, %c0_185, %c0_186] : memref<2x1x32xf32, #tpu.memory_space<vmem>>, vector<1x1x32xf32>
    %417 = vector.shape_cast %416 : vector<1x1x32xf32> to vector<1x32xf32>
    %c1_187 = arith.constant 1 : index
    %c0_188 = arith.constant 0 : index
    %c0_189 = arith.constant 0 : index
    %418 = vector.load %arg16[%c1_187, %c0_188, %c0_189] : memref<2x1x32xf32, #tpu.memory_space<vmem>>, vector<1x1x32xf32>
    %419 = vector.shape_cast %418 : vector<1x1x32xf32> to vector<1x32xf32>
    %cst_190 = arith.constant dense<0.000000e+00> : vector<32xf32>
    %420 = vector.multi_reduction <add>, %415, %cst_190 [1] : vector<32x32xf32> to vector<32xf32>
    %421 = vector.shape_cast %420 : vector<32xf32> to vector<32x1xf32>
    %cst_191 = arith.constant 3.200000e+01 : f32
    %422 = vector.broadcast %cst_191 : f32 to vector<32x1xf32>
    %423 = arith.divf %421, %422 : vector<32x1xf32>
    %424 = vector.broadcast %423 : vector<32x1xf32> to vector<32x32xf32>
    %425 = arith.subf %415, %424 : vector<32x32xf32>
    %426 = arith.mulf %425, %425 : vector<32x32xf32>
    %cst_192 = arith.constant dense<0.000000e+00> : vector<32xf32>
    %427 = vector.multi_reduction <add>, %426, %cst_192 [1] : vector<32x32xf32> to vector<32xf32>
    %428 = vector.shape_cast %427 : vector<32xf32> to vector<32x1xf32>
    %cst_193 = arith.constant 3.200000e+01 : f32
    %429 = vector.broadcast %cst_193 : f32 to vector<32x1xf32>
    %430 = arith.divf %428, %429 : vector<32x1xf32>
    %cst_194 = arith.constant 9.99999974E-6 : f32
    %431 = vector.broadcast %cst_194 : f32 to vector<32x1xf32>
    %432 = arith.addf %430, %431 : vector<32x1xf32>
    %433 = math.rsqrt %432 : vector<32x1xf32>
    %434 = vector.broadcast %433 : vector<32x1xf32> to vector<32x32xf32>
    %435 = arith.mulf %425, %434 : vector<32x32xf32>
    %436 = vector.broadcast %417 : vector<1x32xf32> to vector<32x32xf32>
    %437 = arith.mulf %435, %436 : vector<32x32xf32>
    %438 = vector.broadcast %419 : vector<1x32xf32> to vector<32x32xf32>
    %439 = arith.addf %437, %438 : vector<32x32xf32>
    %440 = vector.extract_strided_slice %439 {offsets = [0, 0], sizes = [8, 32], strides = [1, 1]} : vector<32x32xf32> to vector<8x32xf32>
    %441 = vector.extract_strided_slice %439 {offsets = [16, 0], sizes = [8, 32], strides = [1, 1]} : vector<32x32xf32> to vector<8x32xf32>
    %442 = tpu.concatenate %440, %441 in 0 : vector<8x32xf32>, vector<8x32xf32> -> vector<16x32xf32>
    %c0_195 = arith.constant 0 : index
    %c0_196 = arith.constant 0 : index
    %443 = vector.load %arg17[%c0_195, %c0_196] : memref<32x32xf32, #tpu.memory_space<vmem>>, vector<32x32xf32>
    %cst_197 = arith.constant dense<0.000000e+00> : vector<16x32xf32>
    %444 = tpu.matmul %442, %443, %cst_197 {dimension_numbers = #tpu.dot_dimension_numbers<[1], [0], [0], [1], [0, 0, 1, 1], [], []>} : vector<16x32xf32>, vector<32x32xf32>, vector<16x32xf32> -> vector<16x32xf32>
    %c0_198 = arith.constant 0 : index
    %c0_199 = arith.constant 0 : index
    %445 = vector.load %arg18[%c0_198, %c0_199] : memref<1x32xf32, #tpu.memory_space<vmem>>, vector<1x32xf32>
    %446 = vector.broadcast %445 : vector<1x32xf32> to vector<16x32xf32>
    %447 = arith.addf %444, %446 : vector<16x32xf32>
    %c0_200 = arith.constant 0 : index
    %c0_201 = arith.constant 0 : index
    %448 = vector.load %arg19[%c0_200, %c0_201] : memref<16x32xf32, #tpu.memory_space<vmem>>, vector<16x32xf32>
    tpu.vector_store %arg19[%c0_200, %c0_201], %447 {strides = array<i32>} : memref<16x32xf32, #tpu.memory_space<vmem>>, vector<16x32xf32>,
    return
  }
  func.func @transform_0(%arg0: i32) -> (i32, i32) {
    %c0_i32 = arith.constant 0 : i32
    %c0_i32_0 = arith.constant 0 : i32
    %c0_i32_1 = arith.constant 0 : i32
    return %c0_i32, %c0_i32_0 : i32, i32
  }
  func.func @transform_1(%arg0: i32) -> (i32, i32) {
    %c0_i32 = arith.constant 0 : i32
    %c0_i32_0 = arith.constant 0 : i32
    %c0_i32_1 = arith.constant 0 : i32
    return %c0_i32, %c0_i32_0 : i32, i32
  }
  func.func @transform_2(%arg0: i32) -> (i32, i32) {
    %c0_i32 = arith.constant 0 : i32
    %c0_i32_0 = arith.constant 0 : i32
    %c0_i32_1 = arith.constant 0 : i32
    return %c0_i32, %c0_i32_0 : i32, i32
  }
  func.func @transform_3(%arg0: i32) -> (i32, i32) {
    %c0_i32 = arith.constant 0 : i32
    %c0_i32_0 = arith.constant 0 : i32
    %c0_i32_1 = arith.constant 0 : i32
    return %c0_i32, %c0_i32_0 : i32, i32
  }
  func.func @transform_4(%arg0: i32) -> (i32, i32, i32) {
    %c0_i32 = arith.constant 0 : i32
    %c0_i32_0 = arith.constant 0 : i32
    %c0_i32_1 = arith.constant 0 : i32
    %c0_i32_2 = arith.constant 0 : i32
    return %c0_i32, %c0_i32_0, %c0_i32_1 : i32, i32, i32
  }
  func.func @transform_5(%arg0: i32) -> (i32, i32, i32) {
    %c0_i32 = arith.constant 0 : i32
    %c0_i32_0 = arith.constant 0 : i32
    %c0_i32_1 = arith.constant 0 : i32
    %c0_i32_2 = arith.constant 0 : i32
    return %c0_i32, %c0_i32_0, %c0_i32_1 : i32, i32, i32
  }
  func.func @transform_6(%arg0: i32) -> (i32, i32, i32) {
    %c0_i32 = arith.constant 0 : i32
    %c0_i32_0 = arith.constant 0 : i32
    %c0_i32_1 = arith.constant 0 : i32
    %c0_i32_2 = arith.constant 0 : i32
    return %c0_i32, %c0_i32_0, %c0_i32_1 : i32, i32, i32
  }
  func.func @transform_7(%arg0: i32) -> (i32, i32, i32) {
    %c0_i32 = arith.constant 0 : i32
    %c0_i32_0 = arith.constant 0 : i32
    %c0_i32_1 = arith.constant 0 : i32
    %c0_i32_2 = arith.constant 0 : i32
    return %c0_i32, %c0_i32_0, %c0_i32_1 : i32, i32, i32
  }
  func.func @transform_8(%arg0: i32) -> (i32, i32, i32) {
    %c0_i32 = arith.constant 0 : i32
    %c0_i32_0 = arith.constant 0 : i32
    %c0_i32_1 = arith.constant 0 : i32
    %c0_i32_2 = arith.constant 0 : i32
    return %c0_i32, %c0_i32_0, %c0_i32_1 : i32, i32, i32
  }
  func.func @transform_9(%arg0: i32) -> (i32, i32, i32) {
    %c0_i32 = arith.constant 0 : i32
    %c0_i32_0 = arith.constant 0 : i32
    %c0_i32_1 = arith.constant 0 : i32
    %c0_i32_2 = arith.constant 0 : i32
    return %c0_i32, %c0_i32_0, %c0_i32_1 : i32, i32, i32
  }
  func.func @transform_10(%arg0: i32) -> (i32, i32, i32) {
    %c0_i32 = arith.constant 0 : i32
    %c0_i32_0 = arith.constant 0 : i32
    %c0_i32_1 = arith.constant 0 : i32
    %c0_i32_2 = arith.constant 0 : i32
    return %c0_i32, %c0_i32_0, %c0_i32_1 : i32, i32, i32
  }
  func.func @transform_11(%arg0: i32) -> (i32, i32, i32) {
    %c0_i32 = arith.constant 0 : i32
    %c0_i32_0 = arith.constant 0 : i32
    %c0_i32_1 = arith.constant 0 : i32
    %c0_i32_2 = arith.constant 0 : i32
    return %c0_i32, %c0_i32_0, %c0_i32_1 : i32, i32, i32
  }
  func.func @transform_12(%arg0: i32) -> (i32, i32, i32) {
    %c0_i32 = arith.constant 0 : i32
    %c0_i32_0 = arith.constant 0 : i32
    %c0_i32_1 = arith.constant 0 : i32
    %c0_i32_2 = arith.constant 0 : i32
    return %c0_i32, %c0_i32_0, %c0_i32_1 : i32, i32, i32
  }
  func.func @transform_13(%arg0: i32) -> (i32, i32, i32) {
    %c0_i32 = arith.constant 0 : i32
    %c0_i32_0 = arith.constant 0 : i32
    %c0_i32_1 = arith.constant 0 : i32
    %c0_i32_2 = arith.constant 0 : i32
    return %c0_i32, %c0_i32_0, %c0_i32_1 : i32, i32, i32
  }
  func.func @transform_14(%arg0: i32) -> (i32, i32, i32) {
    %c0_i32 = arith.constant 0 : i32
    %c0_i32_0 = arith.constant 0 : i32
    %c0_i32_1 = arith.constant 0 : i32
    %c0_i32_2 = arith.constant 0 : i32
    return %c0_i32, %c0_i32_0, %c0_i32_1 : i32, i32, i32
  }
  func.func @transform_15(%arg0: i32) -> (i32, i32, i32) {
    %c0_i32 = arith.constant 0 : i32
    %c0_i32_0 = arith.constant 0 : i32
    %c0_i32_1 = arith.constant 0 : i32
    %c0_i32_2 = arith.constant 0 : i32
    return %c0_i32, %c0_i32_0, %c0_i32_1 : i32, i32, i32
  }
  func.func @transform_16(%arg0: i32) -> (i32, i32) {
    %c0_i32 = arith.constant 0 : i32
    %c0_i32_0 = arith.constant 0 : i32
    %c0_i32_1 = arith.constant 0 : i32
    return %c0_i32, %c0_i32_0 : i32, i32
  }
  func.func @transform_17(%arg0: i32) -> (i32, i32) {
    %c0_i32 = arith.constant 0 : i32
    %c0_i32_0 = arith.constant 0 : i32
    %c0_i32_1 = arith.constant 0 : i32
    return %c0_i32, %c0_i32_0 : i32, i32
  }
  func.func @transform_18(%arg0: i32) -> (i32, i32) {
    %c0_i32 = arith.constant 0 : i32
    %c0_i32_0 = arith.constant 0 : i32
    %c0_i32_1 = arith.constant 0 : i32
    return %c0_i32, %c0_i32_0 : i32, i32
  }
}

</mosaic_0001>

<llo_original>
// kernel: qformer_forward.1
$region0: #{qformer_forward.1}
  #allocation0 [shape = 'u32[]', space=smem, size = 0x4, offset = 0x4, fixed_abs, tag = 'smem constant byte address 0x4 - core index']
  #allocation1 [shape = 'u32[144,128]{1,0:T(1,128)}', space=vmem, size = 0x12000, scoped, tag = 'internal scratch']
  #allocation2 [shape = 'f32[32,32]{1,0:T(8,128)}', space=vmem, size = 0x4000, scoped, tag = 'scratch operand']
  %s0 = inlined_call_operand.vmem [shape: f32[16,16], index: 0, kind: input, shape index: {}]
  %s1 = inlined_call_operand.vmem [shape: f32[8,32], index: 1, kind: input, shape index: {}]
  %s2 = inlined_call_operand.vmem [shape: f32[16,32], index: 2, kind: input, shape index: {}]
  %s3 = inlined_call_operand.vmem [shape: f32[1,32], index: 3, kind: input, shape index: {}]
  %s4 = inlined_call_operand.vmem [shape: f32[2,32,96], index: 4, kind: input, shape index: {}]
  %s5 = inlined_call_operand.vmem [shape: f32[2,1,96], index: 5, kind: input, shape index: {}]
  %s6 = inlined_call_operand.vmem [shape: f32[2,32,32], index: 6, kind: input, shape index: {}]
  %s7 = inlined_call_operand.vmem [shape: f32[2,1,32], index: 7, kind: input, shape index: {}]
  %s8 = inlined_call_operand.vmem [shape: f32[2,1,32], index: 8, kind: input, shape index: {}]
  %s9 = inlined_call_operand.vmem [shape: f32[2,1,32], index: 9, kind: input, shape index: {}]
  %s10 = inlined_call_operand.vmem [shape: f32[2,32,128], index: 10, kind: input, shape index: {}]
  %s11 = inlined_call_operand.vmem [shape: f32[2,1,128], index: 11, kind: input, shape index: {}]
  %s12 = inlined_call_operand.vmem [shape: f32[2,128,32], index: 12, kind: input, shape index: {}]
  %s13 = inlined_call_operand.vmem [shape: f32[2,1,32], index: 13, kind: input, shape index: {}]
  %s14 = inlined_call_operand.vmem [shape: f32[2,1,32], index: 14, kind: input, shape index: {}]
  %s15 = inlined_call_operand.vmem [shape: f32[2,1,32], index: 15, kind: input, shape index: {}]
  %s16 = inlined_call_operand.vmem [shape: f32[32,32], index: 16, kind: input, shape index: {}]
  %s17 = inlined_call_operand.vmem [shape: f32[1,32], index: 17, kind: input, shape index: {}]
  %s18 = inlined_call_operand.hbm [shape: f32[16,32], index: 18, kind: output, shape index: {}]
  %s19 = sld [smem:[#allocation0]]
  $region82: #{qformer_forward.1} parent=0
    _
  %s21 = ssub.s32 1, %s19
  %s22 = scalar_select 0, %s21, %s19
  $region1: #{qformer_forward.1} parent=0
    #allocation3 [shape = 'u8[8192]{0}', space=vmem, size = 0x2000, scoped, tag = 'output window, operand 0, single buffered']
    #allocation4 [shape = 's32[1]{0}', space=sflag, size = 0x4, scoped, tag = 'scoped memory for qformer_forward.1']
    %23 = vsyncpa [#allocation4], 0
    // Predicated region
    $region2: #{qformer_forward.1} parent=1 // pred_check
      _
    $region3: #{qformer_forward.1} parent=1 // pred_check_branch
      %25 = sbr.rel (0) target = $region5
    $region4: #{qformer_forward.1} parent=1 // pred_region
      _
    $region5: #{qformer_forward.1} parent=1 // pred_fallthru
      _
    // Predicated region
    $region6: #{qformer_forward.1} parent=1 // pred_check
      _
    $region7: #{qformer_forward.1} parent=1 // pred_check_branch
      %27 = sbr.rel (0) target = $region9
    $region8: #{qformer_forward.1} parent=1 // pred_region
      _
    $region9: #{qformer_forward.1} parent=1 // pred_fallthru
      _
    // Predicated region
    $region10: #{qformer_forward.1} parent=1 // pred_check
      _
    $region11: #{qformer_forward.1} parent=1 // pred_check_branch
      %29 = sbr.rel (0) target = $region13
    $region12: #{qformer_forward.1} parent=1 // pred_region
      _
    $region13: #{qformer_forward.1} parent=1 // pred_fallthru
      _
    // Predicated region
    $region14: #{qformer_forward.1} parent=1 // pred_check
      _
    $region15: #{qformer_forward.1} parent=1 // pred_check_branch
      %31 = sbr.rel (0) target = $region17
    $region16: #{qformer_forward.1} parent=1 // pred_region
      _
    $region17: #{qformer_forward.1} parent=1 // pred_fallthru
      _
    // Predicated region
    $region18: #{qformer_forward.1} parent=1 // pred_check
      _
    $region19: #{qformer_forward.1} parent=1 // pred_check_branch
      %33 = sbr.rel (0) target = $region21
    $region20: #{qformer_forward.1} parent=1 // pred_region
      _
    $region21: #{qformer_forward.1} parent=1 // pred_fallthru
      _
    // Predicated region
    $region22: #{qformer_forward.1} parent=1 // pred_check
      _
    $region23: #{qformer_forward.1} parent=1 // pred_check_branch
      %35 = sbr.rel (0) target = $region25
    $region24: #{qformer_forward.1} parent=1 // pred_region
      _
    $region25: #{qformer_forward.1} parent=1 // pred_fallthru
      _
    // Predicated region
    $region26: #{qformer_forward.1} parent=1 // pred_check
      _
    $region27: #{qformer_forward.1} parent=1 // pred_check_branch
      %37 = sbr.rel (0) target = $region29
    $region28: #{qformer_forward.1} parent=1 // pred_region
      _
    $region29: #{qformer_forward.1} parent=1 // pred_fallthru
      _
    // Predicated region
    $region30: #{qformer_forward.1} parent=1 // pred_check
      _
    $region31: #{qformer_forward.1} parent=1 // pred_check_branch
      %39 = sbr.rel (0) target = $region33
    $region32: #{qformer_forward.1} parent=1 // pred_region
      _
    $region33: #{qformer_forward.1} parent=1 // pred_fallthru
      _
    // Predicated region
    $region34: #{qformer_forward.1} parent=1 // pred_check
      _
    $region35: #{qformer_forward.1} parent=1 // pred_check_branch
      %41 = sbr.rel (0) target = $region37
    $region36: #{qformer_forward.1} parent=1 // pred_region
      _
    $region37: #{qformer_forward.1} parent=1 // pred_fallthru
      _
    // Predicated region
    $region38: #{qformer_forward.1} parent=1 // pred_check
      _
    $region39: #{qformer_forward.1} parent=1 // pred_check_branch
      %43 = sbr.rel (0) target = $region41
    $region40: #{qformer_forward.1} parent=1 // pred_region
      _
    $region41: #{qformer_forward.1} parent=1 // pred_fallthru
      _
    // Predicated region
    $region42: #{qformer_forward.1} parent=1 // pred_check
      _
    $region43: #{qformer_forward.1} parent=1 // pred_check_branch
      %45 = sbr.rel (0) target = $region45
    $region44: #{qformer_forward.1} parent=1 // pred_region
      _
    $region45: #{qformer_forward.1} parent=1 // pred_fallthru
      _
    // Predicated region
    $region46: #{qformer_forward.1} parent=1 // pred_check
      _
    $region47: #{qformer_forward.1} parent=1 // pred_check_branch
      %47 = sbr.rel (0) target = $region49
    $region48: #{qformer_forward.1} parent=1 // pred_region
      _
    $region49: #{qformer_forward.1} parent=1 // pred_fallthru
      _
    // Predicated region
    $region50: #{qformer_forward.1} parent=1 // pred_check
      _
    $region51: #{qformer_forward.1} parent=1 // pred_check_branch
      %49 = sbr.rel (0) target = $region53
    $region52: #{qformer_forward.1} parent=1 // pred_region
      _
    $region53: #{qformer_forward.1} parent=1 // pred_fallthru
      _
    // Predicated region
    $region54: #{qformer_forward.1} parent=1 // pred_check
      _
    $region55: #{qformer_forward.1} parent=1 // pred_check_branch
      %51 = sbr.rel (0) target = $region57
    $region56: #{qformer_forward.1} parent=1 // pred_region
      _
    $region57: #{qformer_forward.1} parent=1 // pred_fallthru
      _
    // Predicated region
    $region58: #{qformer_forward.1} parent=1 // pred_check
      _
    $region59: #{qformer_forward.1} parent=1 // pred_check_branch
      %53 = sbr.rel (0) target = $region61
    $region60: #{qformer_forward.1} parent=1 // pred_region
      _
    $region61: #{qformer_forward.1} parent=1 // pred_fallthru
      _
    // Predicated region
    $region62: #{qformer_forward.1} parent=1 // pred_check
      _
    $region63: #{qformer_forward.1} parent=1 // pred_check_branch
      %55 = sbr.rel (0) target = $region65
    $region64: #{qformer_forward.1} parent=1 // pred_region
      _
    $region65: #{qformer_forward.1} parent=1 // pred_fallthru
      _
    // Predicated region
    $region66: #{qformer_forward.1} parent=1 // pred_check
      _
    $region67: #{qformer_forward.1} parent=1 // pred_check_branch
      %57 = sbr.rel (0) target = $region69
    $region68: #{qformer_forward.1} parent=1 // pred_region
      _
    $region69: #{qformer_forward.1} parent=1 // pred_fallthru
      _
    // Predicated region
    $region70: #{qformer_forward.1} parent=1 // pred_check
      _
    $region71: #{qformer_forward.1} parent=1 // pred_check_branch
      %59 = sbr.rel (0) target = $region73
    $region72: #{qformer_forward.1} parent=1 // pred_region
      _
    $region73: #{qformer_forward.1} parent=1 // pred_fallthru
      _
    %v60 = vld [vmem:[%s0] sm:$0xff]
    %v61 = vld [vmem:[%s0 + $0x8] sm:$0xff]
    %v62 = vld [vmem:[%s2] sm:$0xff]
    %v63 = vld [vmem:[%s2 + $0x8] sm:$0xff]
    %v64 = vld [vmem:[%s3] sm:$0x1]
    %v66 = vlaneseq
    %v67 = vshrl.u32 %v66, 7
    %v68 = vsub.s32 0, %v67
    %v69 = vrot.slane %v64, %v68
    %vm71 = vcmask 130048
    %v73 = vsel %vm71, %v60, 0
    %v76 = vsel %vm71, %v61, 0
    %78 = vmatprep.subr.mxu0 0.0
    %79 = vmatpush1.msra.mxu0 0.0
    %80 = vmatprep.subr.mxu0 0.0
    %81 = vmatpush1.msra.mxu0 0.0
    %82 = vmatprep.subr.mxu0 0.0
    %83 = vmatpush1.msra.mxu0 0.0
    %84 = vmatprep.subr.mxu0 0.0
    %85 = vmatpush1.msra.mxu0 0.0
    %86 = vmatprep.subr.mxu0 0.0
    %87 = vmatpush1.msra.mxu0 0.0
    %88 = vmatprep.subr.mxu0 0.0
    %89 = vmatpush1.msra.mxu0 0.0
    %90 = vmatprep.subr.mxu0 0.0
    %91 = vmatpush1.msra.mxu0 0.0
    %92 = vmatprep.subr.mxu0 0.0
    %93 = vmatpush1.msra.mxu0 0.0
    %94 = vmatprep.subr.mxu0 0.0
    %95 = vmatpush1.msra.mxu0 0.0
    %96 = vmatprep.subr.mxu0 0.0
    %97 = vmatpush1.msra.mxu0 0.0
    %98 = vmatprep.subr.mxu0 0.0
    %99 = vmatpush1.msra.mxu0 0.0
    %100 = vmatprep.subr.mxu0 0.0
    %101 = vmatpush1.msra.mxu0 0.0
    %102 = vmatprep.subr.mxu0 0.0
    %103 = vmatpush1.msra.mxu0 0.0
    %104 = vmatprep.subr.mxu0 0.0
    %105 = vmatpush1.msra.mxu0 0.0
    %106 = vmatprep.subr.mxu0 0.0
    %107 = vmatpush1.msra.mxu0 %v63
    %108 = vmatprep.subr.mxu0 0.0
    %109 = vmatpush1.msra.mxu0 %v62
    %110 = vmatprep.subr.mxu0 0.0
    %111 = vmatpush2.msra.mxu0 0.0
    %112 = vmatprep.subr.mxu0 0.0
    %113 = vmatpush2.msra.mxu0 0.0
    %114 = vmatprep.subr.mxu0 0.0
    %115 = vmatpush2.msra.mxu0 0.0
    %116 = vmatprep.subr.mxu0 0.0
    %117 = vmatpush2.msra.mxu0 0.0
    %118 = vmatprep.subr.mxu0 0.0
    %119 = vmatpush2.msra.mxu0 0.0
    %120 = vmatprep.subr.mxu0 0.0
    %121 = vmatpush2.msra.mxu0 0.0
    %122 = vmatprep.subr.mxu0 0.0
    %123 = vmatpush2.msra.mxu0 0.0
    %124 = vmatprep.subr.mxu0 0.0
    %125 = vmatpush2.msra.mxu0 0.0
    %126 = vmatprep.subr.mxu0 0.0
    %127 = vmatpush2.msra.mxu0 0.0
    %128 = vmatprep.subr.mxu0 0.0
    %129 = vmatpush2.msra.mxu0 0.0
    %130 = vmatprep.subr.mxu0 0.0
    %131 = vmatpush2.msra.mxu0 0.0
    %132 = vmatprep.subr.mxu0 0.0
    %133 = vmatpush2.msra.mxu0 0.0
    %134 = vmatprep.subr.mxu0 0.0
    %135 = vmatpush2.msra.mxu0 0.0
    %136 = vmatprep.subr.mxu0 0.0
    %137 = vmatpush2.msra.mxu0 0.0
    %138 = vmatprep.subr.mxu0 0.0
    %139 = vmatpush2.msra.mxu0 0.0
    %140 = vmatprep.subr.mxu0 0.0
    %141 = vmatpush2.msra.mxu0 0.0
    %142 = vmatprep.mubr.f32.mxu0 0.0
    %143 = vmatmul.mubr.f32.gmra.mxu0 %v73
    %v144 = vpop.f32.mrf.mxu0
    %v145 = vadd.f32 %v69, %v144
    %v146 = vpop.f32.mrf.mxu0
    %147 = vmatprep.mubr.f32.mxu0 0.0
    %148 = vmatmul.mubr.f32.gmra.mxu0 %v76
    %v149 = vpop.f32.mrf.mxu0
    %v150 = vadd.f32 %v69, %v149
    %v151 = vpop.f32.mrf.mxu0
    %152 = vdwg.mxu0
    %v153 = vld [vmem:[%s1] sm:$0xff]
    %vm154 = vcmask 261120
    %155 = vst.msk [vmem:[#allocation2] sm:$0xff] %vm154, %v153
    %156 = vst.msk [vmem:[#allocation2 + $0x8] sm:$0xff] %vm154, %v145
    %157 = vst.msk [vmem:[#allocation2 + $0x10] sm:$0xff] %vm154, %v153
    %158 = vst.msk [vmem:[#allocation2 + $0x18] sm:$0xff] %vm154, %v150
    %v159 = vld [vmem:[#allocation2] sm:$0xff]
    %v160 = vld [vmem:[#allocation2 + $0x8] sm:$0xff]
    %v161 = vld [vmem:[#allocation2 + $0x10] sm:$0xff]
    %v162 = vld [vmem:[#allocation2 + $0x18] sm:$0xff]
    %v163 = vld [vmem:[%s4] sm:$0xff]
    %v164 = vld [vmem:[%s4 + $0x8] sm:$0xff]
    %v165 = vld [vmem:[%s4 + $0x10] sm:$0xff]
    %v166 = vld [vmem:[%s4 + $0x18] sm:$0xff]
    %v167 = vld [vmem:[%s5] sm:$0x1]
    %v169 = vlaneseq
    %v170 = vshrl.u32 %v169, 7
    %v171 = vsub.s32 0, %v170
    %v172 = vrot.slane %v167, %v171
    %v175 = vsel %vm154, %v159, 0
    %v178 = vsel %vm154, %v160, 0
    %v181 = vsel %vm154, %v161, 0
    %v184 = vsel %vm154, %v162, 0
    %186 = vmatprep.subr.mxu0 0.0
    %187 = vmatpush1.msra.mxu0 0.0
    %188 = vmatprep.subr.mxu0 0.0
    %189 = vmatpush1.msra.mxu0 0.0
    %190 = vmatprep.subr.mxu0 0.0
    %191 = vmatpush1.msra.mxu0 0.0
    %192 = vmatprep.subr.mxu0 0.0
    %193 = vmatpush1.msra.mxu0 0.0
    %194 = vmatprep.subr.mxu0 0.0
    %195 = vmatpush1.msra.mxu0 0.0
    %196 = vmatprep.subr.mxu0 0.0
    %197 = vmatpush1.msra.mxu0 0.0
    %198 = vmatprep.subr.mxu0 0.0
    %199 = vmatpush1.msra.mxu0 0.0
    %200 = vmatprep.subr.mxu0 0.0
    %201 = vmatpush1.msra.mxu0 0.0
    %202 = vmatprep.subr.mxu0 0.0
    %203 = vmatpush1.msra.mxu0 0.0
    %204 = vmatprep.subr.mxu0 0.0
    %205 = vmatpush1.msra.mxu0 0.0
    %206 = vmatprep.subr.mxu0 0.0
    %207 = vmatpush1.msra.mxu0 0.0
    %208 = vmatprep.subr.mxu0 0.0
    %209 = vmatpush1.msra.mxu0 0.0
    %210 = vmatprep.subr.mxu0 0.0
    %211 = vmatpush1.msra.mxu0 %v166
    %212 = vmatprep.subr.mxu0 0.0
    %213 = vmatpush1.msra.mxu0 %v165
    %214 = vmatprep.subr.mxu0 0.0
    %215 = vmatpush1.msra.mxu0 %v164
    %216 = vmatprep.subr.mxu0 0.0
    %217 = vmatpush1.msra.mxu0 %v163
    %218 = vmatprep.subr.mxu0 0.0
    %219 = vmatpush2.msra.mxu0 0.0
    %220 = vmatprep.subr.mxu0 0.0
    %221 = vmatpush2.msra.mxu0 0.0
    %222 = vmatprep.subr.mxu0 0.0
    %223 = vmatpush2.msra.mxu0 0.0
    %224 = vmatprep.subr.mxu0 0.0
    %225 = vmatpush2.msra.mxu0 0.0
    %226 = vmatprep.subr.mxu0 0.0
    %227 = vmatpush2.msra.mxu0 0.0
    %228 = vmatprep.subr.mxu0 0.0
    %229 = vmatpush2.msra.mxu0 0.0
    %230 = vmatprep.subr.mxu0 0.0
    %231 = vmatpush2.msra.mxu0 0.0
    %232 = vmatprep.subr.mxu0 0.0
    %233 = vmatpush2.msra.mxu0 0.0
    %234 = vmatprep.subr.mxu0 0.0
    %235 = vmatpush2.msra.mxu0 0.0
    %236 = vmatprep.subr.mxu0 0.0
    %237 = vmatpush2.msra.mxu0 0.0
    %238 = vmatprep.subr.mxu0 0.0
    %239 = vmatpush2.msra.mxu0 0.0
    %240 = vmatprep.subr.mxu0 0.0
    %241 = vmatpush2.msra.mxu0 0.0
    %242 = vmatprep.subr.mxu0 0.0
    %243 = vmatpush2.msra.mxu0 0.0
    %244 = vmatprep.subr.mxu0 0.0
    %245 = vmatpush2.msra.mxu0 0.0
    %246 = vmatprep.subr.mxu0 0.0
    %247 = vmatpush2.msra.mxu0 0.0
    %248 = vmatprep.subr.mxu0 0.0
    %249 = vmatpush2.msra.mxu0 0.0
    %250 = vmatprep.mubr.f32.mxu0 0.0
    %251 = vmatmul.mubr.f32.gmra.mxu0 %v175
    %v252 = vpop.f32.mrf.mxu0
    %v253 = vadd.f32 %v172, %v252
    %v254 = vpop.f32.mrf.mxu0
    %255 = vmatprep.mubr.f32.mxu0 0.0
    %256 = vmatmul.mubr.f32.gmra.mxu0 %v178
    %v257 = vpop.f32.mrf.mxu0
    %v258 = vadd.f32 %v172, %v257
    %v259 = vpop.f32.mrf.mxu0
    %260 = vmatprep.mubr.f32.mxu0 0.0
    %261 = vmatmul.mubr.f32.gmra.mxu0 %v181
    %v262 = vpop.f32.mrf.mxu0
    %v263 = vadd.f32 %v172, %v262
    %v264 = vpop.f32.mrf.mxu0
    %265 = vmatprep.mubr.f32.mxu0 0.0
    %266 = vmatmul.mubr.f32.gmra.mxu0 %v184
    %v267 = vpop.f32.mrf.mxu0
    %v268 = vadd.f32 %v172, %v267
    %v269 = vpop.f32.mrf.mxu0
    %270 = vdwg.mxu0
    %273 = vrot.lane.b32.xlu0 %v253, 96
    %v274 = vpop.permute.xlu0 %273
    %275 = vrot.lane.b32.xlu0 %v258, 96
    %v276 = vpop.permute.xlu0 %275
    %vm277 = vcmask 64512
    %v278 = vsel %vm277, %v253, 0
    %v280 = vsel %vm277, %v258, 0
    %v282 = vsel %vm277, %v274, 0
    %v284 = vsel %vm277, %v276, 0
    %286 = vmatprep.subr.mxu0 0.0
    %287 = vmatpush1.xpose.msra.mxu0 0.0
    %288 = vmatprep.subr.mxu0 0.0
    %289 = vmatpush1.xpose.msra.mxu0 0.0
    %290 = vmatprep.subr.mxu0 0.0
    %291 = vmatpush1.xpose.msra.mxu0 0.0
    %292 = vmatprep.subr.mxu0 0.0
    %293 = vmatpush1.xpose.msra.mxu0 0.0
    %294 = vmatprep.subr.mxu0 0.0
    %295 = vmatpush1.xpose.msra.mxu0 0.0
    %296 = vmatprep.subr.mxu0 0.0
    %297 = vmatpush1.xpose.msra.mxu0 0.0
    %298 = vmatprep.subr.mxu0 0.0
    %299 = vmatpush1.xpose.msra.mxu0 0.0
    %300 = vmatprep.subr.mxu0 0.0
    %301 = vmatpush1.xpose.msra.mxu0 0.0
    %302 = vmatprep.subr.mxu0 0.0
    %303 = vmatpush1.xpose.msra.mxu0 0.0
    %304 = vmatprep.subr.mxu0 0.0
    %305 = vmatpush1.xpose.msra.mxu0 0.0
    %306 = vmatprep.subr.mxu0 0.0
    %307 = vmatpush1.xpose.msra.mxu0 0.0
    %308 = vmatprep.subr.mxu0 0.0
    %309 = vmatpush1.xpose.msra.mxu0 0.0
    %310 = vmatprep.subr.mxu0 0.0
    %311 = vmatpush1.xpose.msra.mxu0 0.0
    %312 = vmatprep.subr.mxu0 0.0
    %313 = vmatpush1.xpose.msra.mxu0 0.0
    %314 = vmatprep.subr.mxu0 0.0
    %315 = vmatpush1.xpose.msra.mxu0 %v284
    %316 = vmatprep.subr.mxu0 0.0
    %317 = vmatpush1.xpose.msra.mxu0 %v282
    %318 = vmatprep.subr.mxu0 0.0
    %319 = vmatpush2.xpose.msra.mxu0 0.0
    %320 = vmatprep.subr.mxu0 0.0
    %321 = vmatpush2.xpose.msra.mxu0 0.0
    %322 = vmatprep.subr.mxu0 0.0
    %323 = vmatpush2.xpose.msra.mxu0 0.0
    %324 = vmatprep.subr.mxu0 0.0
    %325 = vmatpush2.xpose.msra.mxu0 0.0
    %326 = vmatprep.subr.mxu0 0.0
    %327 = vmatpush2.xpose.msra.mxu0 0.0
    %328 = vmatprep.subr.mxu0 0.0
    %329 = vmatpush2.xpose.msra.mxu0 0.0
    %330 = vmatprep.subr.mxu0 0.0
    %331 = vmatpush2.xpose.msra.mxu0 0.0
    %332 = vmatprep.subr.mxu0 0.0
    %333 = vmatpush2.xpose.msra.mxu0 0.0
    %334 = vmatprep.subr.mxu0 0.0
    %335 = vmatpush2.xpose.msra.mxu0 0.0
    %336 = vmatprep.subr.mxu0 0.0
    %337 = vmatpush2.xpose.msra.mxu0 0.0
    %338 = vmatprep.subr.mxu0 0.0
    %339 = vmatpush2.xpose.msra.mxu0 0.0
    %340 = vmatprep.subr.mxu0 0.0
    %341 = vmatpush2.xpose.msra.mxu0 0.0
    %342 = vmatprep.subr.mxu0 0.0
    %343 = vmatpush2.xpose.msra.mxu0 0.0
    %344 = vmatprep.subr.mxu0 0.0
    %345 = vmatpush2.xpose.msra.mxu0 0.0
    %346 = vmatprep.subr.mxu0 0.0
    %347 = vmatpush2.xpose.msra.mxu0 0.0
    %348 = vmatprep.subr.mxu0 0.0
    %349 = vmatpush2.xpose.msra.mxu0 0.0
    %350 = vmatprep.mubr.f32.mxu0 0.0
    %351 = vmatmul.mubr.f32.gmra.mxu0 %v278
    %v352 = vpop.f32.mrf.mxu0
    %v353 = vadd.f32 0.0, %v352
    %v354 = vpop.f32.mrf.mxu0
    %355 = vmatprep.mubr.f32.mxu0 0.0
    %356 = vmatmul.mubr.f32.gmra.mxu0 %v280
    %v357 = vpop.f32.mrf.mxu0
    %v358 = vadd.f32 0.0, %v357
    %v359 = vpop.f32.mrf.mxu0
    %360 = vdwg.mxu0
    %v361 = vmul.f32 %v353, 0.35355338
    %v362 = vmul.f32 %v358, 0.35355338
    %v363 = vsel %vm71, %v361, -inf
    %364 = vmax.xlane.f32.xlu0 %v363
    %v365 = vpop.xlane.xlu0 %364
    %v366 = vsel %vm71, %v362, -inf
    %367 = vmax.xlane.f32.xlu0 %v366
    %v368 = vpop.xlane.xlu0 %367
    %v369 = vsub.f32 %v361, %v365
    %v370 = vsub.f32 %v362, %v368
    %v371 = vmul.f32 %v369, 1.442695
    %v372 = vpow.pop %v371
    %v373 = vmul.f32 %v370, 1.442695
    %v374 = vpow.pop %v373
    %v375 = vsel %vm71, %v372, 0.0
    %376 = vadd.xlane.f32.xlu0 %v375
    %v377 = vpop.xlane.xlu0 %376
    %v378 = vsel %vm71, %v374, 0.0
    %379 = vadd.xlane.f32.xlu0 %v378
    %v380 = vpop.xlane.xlu0 %379
    %v381 = vrcp.pop %v377
    %v382 = vmul.f32 %v372, %v381
    %v383 = vrcp.pop %v380
    %v384 = vmul.f32 %v374, %v383
    %385 = vrot.lane.b32.xlu0 %v253, 64
    %v386 = vpop.permute.xlu0 %385
    %387 = vrot.lane.b32.xlu0 %v258, 64
    %v388 = vpop.permute.xlu0 %387
    %v392 = vsel %vm71, %v382, 0
    %v395 = vsel %vm71, %v384, 0
    %397 = vmatprep.subr.mxu0 0.0
    %398 = vmatpush1.msra.mxu0 0.0
    %399 = vmatprep.subr.mxu0 0.0
    %400 = vmatpush1.msra.mxu0 0.0
    %401 = vmatprep.subr.mxu0 0.0
    %402 = vmatpush1.msra.mxu0 0.0
    %403 = vmatprep.subr.mxu0 0.0
    %404 = vmatpush1.msra.mxu0 0.0
    %405 = vmatprep.subr.mxu0 0.0
    %406 = vmatpush1.msra.mxu0 0.0
    %407 = vmatprep.subr.mxu0 0.0
    %408 = vmatpush1.msra.mxu0 0.0
    %409 = vmatprep.subr.mxu0 0.0
    %410 = vmatpush1.msra.mxu0 0.0
    %411 = vmatprep.subr.mxu0 0.0
    %412 = vmatpush1.msra.mxu0 0.0
    %413 = vmatprep.subr.mxu0 0.0
    %414 = vmatpush1.msra.mxu0 0.0
    %415 = vmatprep.subr.mxu0 0.0
    %416 = vmatpush1.msra.mxu0 0.0
    %417 = vmatprep.subr.mxu0 0.0
    %418 = vmatpush1.msra.mxu0 0.0
    %419 = vmatprep.subr.mxu0 0.0
    %420 = vmatpush1.msra.mxu0 0.0
    %421 = vmatprep.subr.mxu0 0.0
    %422 = vmatpush1.msra.mxu0 0.0
    %423 = vmatprep.subr.mxu0 0.0
    %424 = vmatpush1.msra.mxu0 0.0
    %425 = vmatprep.subr.mxu0 0.0
    %426 = vmatpush1.msra.mxu0 %v388
    %427 = vmatprep.subr.mxu0 0.0
    %428 = vmatpush1.msra.mxu0 %v386
    %429 = vmatprep.subr.mxu0 0.0
    %430 = vmatpush2.msra.mxu0 0.0
    %431 = vmatprep.subr.mxu0 0.0
    %432 = vmatpush2.msra.mxu0 0.0
    %433 = vmatprep.subr.mxu0 0.0
    %434 = vmatpush2.msra.mxu0 0.0
    %435 = vmatprep.subr.mxu0 0.0
    %436 = vmatpush2.msra.mxu0 0.0
    %437 = vmatprep.subr.mxu0 0.0
    %438 = vmatpush2.msra.mxu0 0.0
    %439 = vmatprep.subr.mxu0 0.0
    %440 = vmatpush2.msra.mxu0 0.0
    %441 = vmatprep.subr.mxu0 0.0
    %442 = vmatpush2.msra.mxu0 0.0
    %443 = vmatprep.subr.mxu0 0.0
    %444 = vmatpush2.msra.mxu0 0.0
    %445 = vmatprep.subr.mxu0 0.0
    %446 = vmatpush2.msra.mxu0 0.0
    %447 = vmatprep.subr.mxu0 0.0
    %448 = vmatpush2.msra.mxu0 0.0
    %449 = vmatprep.subr.mxu0 0.0
    %450 = vmatpush2.msra.mxu0 0.0
    %451 = vmatprep.subr.mxu0 0.0
    %452 = vmatpush2.msra.mxu0 0.0
    %453 = vmatprep.subr.mxu0 0.0
    %454 = vmatpush2.msra.mxu0 0.0
    %455 = vmatprep.subr.mxu0 0.0
    %456 = vmatpush2.msra.mxu0 0.0
    %457 = vmatprep.subr.mxu0 0.0
    %458 = vmatpush2.msra.mxu0 0.0
    %459 = vmatprep.subr.mxu0 0.0
    %460 = vmatpush2.msra.mxu0 0.0
    %461 = vmatprep.mubr.f32.mxu0 0.0
    %462 = vmatmul.mubr.f32.gmra.mxu0 %v392
    %v463 = vpop.f32.mrf.mxu0
    %v464 = vadd.f32 0.0, %v463
    %v465 = vpop.f32.mrf.mxu0
    %466 = vmatprep.mubr.f32.mxu0 0.0
    %467 = vmatmul.mubr.f32.gmra.mxu0 %v395
    %v468 = vpop.f32.mrf.mxu0
    %v469 = vadd.f32 0.0, %v468
    %v470 = vpop.f32.mrf.mxu0
    %471 = vdwg.mxu0
    %472 = vrot.lane.b32.xlu0 %v253, 120
    %v473 = vpop.permute.xlu0 %472
    %474 = vrot.lane.b32.xlu0 %v258, 120
    %v475 = vpop.permute.xlu0 %474
    %476 = vrot.lane.b32.xlu0 %v253, 88
    %v477 = vpop.permute.xlu0 %476
    %478 = vrot.lane.b32.xlu0 %v258, 88
    %v479 = vpop.permute.xlu0 %478
    %v480 = vsel %vm277, %v473, 0
    %v482 = vsel %vm277, %v475, 0
    %v484 = vsel %vm277, %v477, 0
    %v486 = vsel %vm277, %v479, 0
    %488 = vmatprep.subr.mxu0 0.0
    %489 = vmatpush1.xpose.msra.mxu0 0.0
    %490 = vmatprep.subr.mxu0 0.0
    %491 = vmatpush1.xpose.msra.mxu0 0.0
    %492 = vmatprep.subr.mxu0 0.0
    %493 = vmatpush1.xpose.msra.mxu0 0.0
    %494 = vmatprep.subr.mxu0 0.0
    %495 = vmatpush1.xpose.msra.mxu0 0.0
    %496 = vmatprep.subr.mxu0 0.0
    %497 = vmatpush1.xpose.msra.mxu0 0.0
    %498 = vmatprep.subr.mxu0 0.0
    %499 = vmatpush1.xpose.msra.mxu0 0.0
    %500 = vmatprep.subr.mxu0 0.0
    %501 = vmatpush1.xpose.msra.mxu0 0.0
    %502 = vmatprep.subr.mxu0 0.0
    %503 = vmatpush1.xpose.msra.mxu0 0.0
    %504 = vmatprep.subr.mxu0 0.0
    %505 = vmatpush1.xpose.msra.mxu0 0.0
    %506 = vmatprep.subr.mxu0 0.0
    %507 = vmatpush1.xpose.msra.mxu0 0.0
    %508 = vmatprep.subr.mxu0 0.0
    %509 = vmatpush1.xpose.msra.mxu0 0.0
    %510 = vmatprep.subr.mxu0 0.0
    %511 = vmatpush1.xpose.msra.mxu0 0.0
    %512 = vmatprep.subr.mxu0 0.0
    %513 = vmatpush1.xpose.msra.mxu0 0.0
    %514 = vmatprep.subr.mxu0 0.0
    %515 = vmatpush1.xpose.msra.mxu0 0.0
    %516 = vmatprep.subr.mxu0 0.0
    %517 = vmatpush1.xpose.msra.mxu0 %v486
    %518 = vmatprep.subr.mxu0 0.0
    %519 = vmatpush1.xpose.msra.mxu0 %v484
    %520 = vmatprep.subr.mxu0 0.0
    %521 = vmatpush2.xpose.msra.mxu0 0.0
    %522 = vmatprep.subr.mxu0 0.0
    %523 = vmatpush2.xpose.msra.mxu0 0.0
    %524 = vmatprep.subr.mxu0 0.0
    %525 = vmatpush2.xpose.msra.mxu0 0.0
    %526 = vmatprep.subr.mxu0 0.0
    %527 = vmatpush2.xpose.msra.mxu0 0.0
    %528 = vmatprep.subr.mxu0 0.0
    %529 = vmatpush2.xpose.msra.mxu0 0.0
    %530 = vmatprep.subr.mxu0 0.0
    %531 = vmatpush2.xpose.msra.mxu0 0.0
    %532 = vmatprep.subr.mxu0 0.0
    %533 = vmatpush2.xpose.msra.mxu0 0.0
    %534 = vmatprep.subr.mxu0 0.0
    %535 = vmatpush2.xpose.msra.mxu0 0.0
    %536 = vmatprep.subr.mxu0 0.0
    %537 = vmatpush2.xpose.msra.mxu0 0.0
    %538 = vmatprep.subr.mxu0 0.0
    %539 = vmatpush2.xpose.msra.mxu0 0.0
    %540 = vmatprep.subr.mxu0 0.0
    %541 = vmatpush2.xpose.msra.mxu0 0.0
    %542 = vmatprep.subr.mxu0 0.0
    %543 = vmatpush2.xpose.msra.mxu0 0.0
    %544 = vmatprep.subr.mxu0 0.0
    %545 = vmatpush2.xpose.msra.mxu0 0.0
    %546 = vmatprep.subr.mxu0 0.0
    %547 = vmatpush2.xpose.msra.mxu0 0.0
    %548 = vmatprep.subr.mxu0 0.0
    %549 = vmatpush2.xpose.msra.mxu0 0.0
    %550 = vmatprep.subr.mxu0 0.0
    %551 = vmatpush2.xpose.msra.mxu0 0.0
    %552 = vmatprep.mubr.f32.mxu0 0.0
    %553 = vmatmul.mubr.f32.gmra.mxu0 %v480
    %v554 = vpop.f32.mrf.mxu0
    %v555 = vadd.f32 0.0, %v554
    %v556 = vpop.f32.mrf.mxu0
    %557 = vmatprep.mubr.f32.mxu0 0.0
    %558 = vmatmul.mubr.f32.gmra.mxu0 %v482
    %v559 = vpop.f32.mrf.mxu0
    %v560 = vadd.f32 0.0, %v559
    %v561 = vpop.f32.mrf.mxu0
    %562 = vdwg.mxu0
    %v563 = vmul.f32 %v555, 0.35355338
    %v564 = vmul.f32 %v560, 0.35355338
    %v565 = vsel %vm71, %v563, -inf
    %566 = vmax.xlane.f32.xlu0 %v565
    %v567 = vpop.xlane.xlu0 %566
    %v568 = vsel %vm71, %v564, -inf
    %569 = vmax.xlane.f32.xlu0 %v568
    %v570 = vpop.xlane.xlu0 %569
    %v571 = vsub.f32 %v563, %v567
    %v572 = vsub.f32 %v564, %v570
    %v573 = vmul.f32 %v571, 1.442695
    %v574 = vpow.pop %v573
    %v575 = vmul.f32 %v572, 1.442695
    %v576 = vpow.pop %v575
    %v577 = vsel %vm71, %v574, 0.0
    %578 = vadd.xlane.f32.xlu0 %v577
    %v579 = vpop.xlane.xlu0 %578
    %v580 = vsel %vm71, %v576, 0.0
    %581 = vadd.xlane.f32.xlu0 %v580
    %v582 = vpop.xlane.xlu0 %581
    %v583 = vrcp.pop %v579
    %v584 = vmul.f32 %v574, %v583
    %v585 = vrcp.pop %v582
    %v586 = vmul.f32 %v576, %v585
    %587 = vrot.lane.b32.xlu0 %v253, 56
    %v588 = vpop.permute.xlu0 %587
    %589 = vrot.lane.b32.xlu0 %v258, 56
    %v590 = vpop.permute.xlu0 %589
    %v594 = vsel %vm71, %v584, 0
    %v597 = vsel %vm71, %v586, 0
    %599 = vmatprep.subr.mxu0 0.0
    %600 = vmatpush1.msra.mxu0 0.0
    %601 = vmatprep.subr.mxu0 0.0
    %602 = vmatpush1.msra.mxu0 0.0
    %603 = vmatprep.subr.mxu0 0.0
    %604 = vmatpush1.msra.mxu0 0.0
    %605 = vmatprep.subr.mxu0 0.0
    %606 = vmatpush1.msra.mxu0 0.0
    %607 = vmatprep.subr.mxu0 0.0
    %608 = vmatpush1.msra.mxu0 0.0
    %609 = vmatprep.subr.mxu0 0.0
    %610 = vmatpush1.msra.mxu0 0.0
    %611 = vmatprep.subr.mxu0 0.0
    %612 = vmatpush1.msra.mxu0 0.0
    %613 = vmatprep.subr.mxu0 0.0
    %614 = vmatpush1.msra.mxu0 0.0
    %615 = vmatprep.subr.mxu0 0.0
    %616 = vmatpush1.msra.mxu0 0.0
    %617 = vmatprep.subr.mxu0 0.0
    %618 = vmatpush1.msra.mxu0 0.0
    %619 = vmatprep.subr.mxu0 0.0
    %620 = vmatpush1.msra.mxu0 0.0
    %621 = vmatprep.subr.mxu0 0.0
    %622 = vmatpush1.msra.mxu0 0.0
    %623 = vmatprep.subr.mxu0 0.0
    %624 = vmatpush1.msra.mxu0 0.0
    %625 = vmatprep.subr.mxu0 0.0
    %626 = vmatpush1.msra.mxu0 0.0
    %627 = vmatprep.subr.mxu0 0.0
    %628 = vmatpush1.msra.mxu0 %v590
    %629 = vmatprep.subr.mxu0 0.0
    %630 = vmatpush1.msra.mxu0 %v588
    %631 = vmatprep.subr.mxu0 0.0
    %632 = vmatpush2.msra.mxu0 0.0
    %633 = vmatprep.subr.mxu0 0.0
    %634 = vmatpush2.msra.mxu0 0.0
    %635 = vmatprep.subr.mxu0 0.0
    %636 = vmatpush2.msra.mxu0 0.0
    %637 = vmatprep.subr.mxu0 0.0
    %638 = vmatpush2.msra.mxu0 0.0
    %639 = vmatprep.subr.mxu0 0.0
    %640 = vmatpush2.msra.mxu0 0.0
    %641 = vmatprep.subr.mxu0 0.0
    %642 = vmatpush2.msra.mxu0 0.0
    %643 = vmatprep.subr.mxu0 0.0
    %644 = vmatpush2.msra.mxu0 0.0
    %645 = vmatprep.subr.mxu0 0.0
    %646 = vmatpush2.msra.mxu0 0.0
    %647 = vmatprep.subr.mxu0 0.0
    %648 = vmatpush2.msra.mxu0 0.0
    %649 = vmatprep.subr.mxu0 0.0
    %650 = vmatpush2.msra.mxu0 0.0
    %651 = vmatprep.subr.mxu0 0.0
    %652 = vmatpush2.msra.mxu0 0.0
    %653 = vmatprep.subr.mxu0 0.0
    %654 = vmatpush2.msra.mxu0 0.0
    %655 = vmatprep.subr.mxu0 0.0
    %656 = vmatpush2.msra.mxu0 0.0
    %657 = vmatprep.subr.mxu0 0.0
    %658 = vmatpush2.msra.mxu0 0.0
    %659 = vmatprep.subr.mxu0 0.0
    %660 = vmatpush2.msra.mxu0 0.0
    %661 = vmatprep.subr.mxu0 0.0
    %662 = vmatpush2.msra.mxu0 0.0
    %663 = vmatprep.mubr.f32.mxu0 0.0
    %664 = vmatmul.mubr.f32.gmra.mxu0 %v594
    %v665 = vpop.f32.mrf.mxu0
    %v666 = vadd.f32 0.0, %v665
    %v667 = vpop.f32.mrf.mxu0
    %668 = vmatprep.mubr.f32.mxu0 0.0
    %669 = vmatmul.mubr.f32.gmra.mxu0 %v597
    %v670 = vpop.f32.mrf.mxu0
    %v671 = vadd.f32 0.0, %v670
    %v672 = vpop.f32.mrf.mxu0
    %673 = vdwg.mxu0
    %674 = vrot.lane.b32.xlu0 %v253, 112
    %v675 = vpop.permute.xlu0 %674
    %676 = vrot.lane.b32.xlu0 %v258, 112
    %v677 = vpop.permute.xlu0 %676
    %678 = vrot.lane.b32.xlu0 %v253, 80
    %v679 = vpop.permute.xlu0 %678
    %680 = vrot.lane.b32.xlu0 %v258, 80
    %v681 = vpop.permute.xlu0 %680
    %v682 = vsel %vm277, %v675, 0
    %v684 = vsel %vm277, %v677, 0
    %v686 = vsel %vm277, %v679, 0
    %v688 = vsel %vm277, %v681, 0
    %690 = vmatprep.subr.mxu0 0.0
    %691 = vmatpush1.xpose.msra.mxu0 0.0
    %692 = vmatprep.subr.mxu0 0.0
    %693 = vmatpush1.xpose.msra.mxu0 0.0
    %694 = vmatprep.subr.mxu0 0.0
    %695 = vmatpush1.xpose.msra.mxu0 0.0
    %696 = vmatprep.subr.mxu0 0.0
    %697 = vmatpush1.xpose.msra.mxu0 0.0
    %698 = vmatprep.subr.mxu0 0.0
    %699 = vmatpush1.xpose.msra.mxu0 0.0
    %700 = vmatprep.subr.mxu0 0.0
    %701 = vmatpush1.xpose.msra.mxu0 0.0
    %702 = vmatprep.subr.mxu0 0.0
    %703 = vmatpush1.xpose.msra.mxu0 0.0
    %704 = vmatprep.subr.mxu0 0.0
    %705 = vmatpush1.xpose.msra.mxu0 0.0
    %706 = vmatprep.subr.mxu0 0.0
    %707 = vmatpush1.xpose.msra.mxu0 0.0
    %708 = vmatprep.subr.mxu0 0.0
    %709 = vmatpush1.xpose.msra.mxu0 0.0
    %710 = vmatprep.subr.mxu0 0.0
    %711 = vmatpush1.xpose.msra.mxu0 0.0
    %712 = vmatprep.subr.mxu0 0.0
    %713 = vmatpush1.xpose.msra.mxu0 0.0
    %714 = vmatprep.subr.mxu0 0.0
    %715 = vmatpush1.xpose.msra.mxu0 0.0
    %716 = vmatprep.subr.mxu0 0.0
    %717 = vmatpush1.xpose.msra.mxu0 0.0
    %718 = vmatprep.subr.mxu0 0.0
    %719 = vmatpush1.xpose.msra.mxu0 %v688
    %720 = vmatprep.subr.mxu0 0.0
    %721 = vmatpush1.xpose.msra.mxu0 %v686
    %722 = vmatprep.subr.mxu0 0.0
    %723 = vmatpush2.xpose.msra.mxu0 0.0
    %724 = vmatprep.subr.mxu0 0.0
    %725 = vmatpush2.xpose.msra.mxu0 0.0
    %726 = vmatprep.subr.mxu0 0.0
    %727 = vmatpush2.xpose.msra.mxu0 0.0
    %728 = vmatprep.subr.mxu0 0.0
    %729 = vmatpush2.xpose.msra.mxu0 0.0
    %730 = vmatprep.subr.mxu0 0.0
    %731 = vmatpush2.xpose.msra.mxu0 0.0
    %732 = vmatprep.subr.mxu0 0.0
    %733 = vmatpush2.xpose.msra.mxu0 0.0
    %734 = vmatprep.subr.mxu0 0.0
    %735 = vmatpush2.xpose.msra.mxu0 0.0
    %736 = vmatprep.subr.mxu0 0.0
    %737 = vmatpush2.xpose.msra.mxu0 0.0
    %738 = vmatprep.subr.mxu0 0.0
    %739 = vmatpush2.xpose.msra.mxu0 0.0
    %740 = vmatprep.subr.mxu0 0.0
    %741 = vmatpush2.xpose.msra.mxu0 0.0
    %742 = vmatprep.subr.mxu0 0.0
    %743 = vmatpush2.xpose.msra.mxu0 0.0
    %744 = vmatprep.subr.mxu0 0.0
    %745 = vmatpush2.xpose.msra.mxu0 0.0
    %746 = vmatprep.subr.mxu0 0.0
    %747 = vmatpush2.xpose.msra.mxu0 0.0
    %748 = vmatprep.subr.mxu0 0.0
    %749 = vmatpush2.xpose.msra.mxu0 0.0
    %750 = vmatprep.subr.mxu0 0.0
    %751 = vmatpush2.xpose.msra.mxu0 0.0
    %752 = vmatprep.subr.mxu0 0.0
    %753 = vmatpush2.xpose.msra.mxu0 0.0
    %754 = vmatprep.mubr.f32.mxu0 0.0
    %755 = vmatmul.mubr.f32.gmra.mxu0 %v682
    %v756 = vpop.f32.mrf.mxu0
    %v757 = vadd.f32 0.0, %v756
    %v758 = vpop.f32.mrf.mxu0
    %759 = vmatprep.mubr.f32.mxu0 0.0
    %760 = vmatmul.mubr.f32.gmra.mxu0 %v684
    %v761 = vpop.f32.mrf.mxu0
    %v762 = vadd.f32 0.0, %v761
    %v763 = vpop.f32.mrf.mxu0
    %764 = vdwg.mxu0
    %v765 = vmul.f32 %v757, 0.35355338
    %v766 = vmul.f32 %v762, 0.35355338
    %v767 = vsel %vm71, %v765, -inf
    %768 = vmax.xlane.f32.xlu0 %v767
    %v769 = vpop.xlane.xlu0 %768
    %v770 = vsel %vm71, %v766, -inf
    %771 = vmax.xlane.f32.xlu0 %v770
    %v772 = vpop.xlane.xlu0 %771
    %v773 = vsub.f32 %v765, %v769
    %v774 = vsub.f32 %v766, %v772
    %v775 = vmul.f32 %v773, 1.442695
    %v776 = vpow.pop %v775
    %v777 = vmul.f32 %v774, 1.442695
    %v778 = vpow.pop %v777
    %v779 = vsel %vm71, %v776, 0.0
    %780 = vadd.xlane.f32.xlu0 %v779
    %v781 = vpop.xlane.xlu0 %780
    %v782 = vsel %vm71, %v778, 0.0
    %783 = vadd.xlane.f32.xlu0 %v782
    %v784 = vpop.xlane.xlu0 %783
    %v785 = vrcp.pop %v781
    %v786 = vmul.f32 %v776, %v785
    %v787 = vrcp.pop %v784
    %v788 = vmul.f32 %v778, %v787
    %789 = vrot.lane.b32.xlu0 %v253, 48
    %v790 = vpop.permute.xlu0 %789
    %791 = vrot.lane.b32.xlu0 %v258, 48
    %v792 = vpop.permute.xlu0 %791
    %v796 = vsel %vm71, %v786, 0
    %v799 = vsel %vm71, %v788, 0
    %801 = vmatprep.subr.mxu0 0.0
    %802 = vmatpush1.msra.mxu0 0.0
    %803 = vmatprep.subr.mxu0 0.0
    %804 = vmatpush1.msra.mxu0 0.0
    %805 = vmatprep.subr.mxu0 0.0
    %806 = vmatpush1.msra.mxu0 0.0
    %807 = vmatprep.subr.mxu0 0.0
    %808 = vmatpush1.msra.mxu0 0.0
    %809 = vmatprep.subr.mxu0 0.0
    %810 = vmatpush1.msra.mxu0 0.0
    %811 = vmatprep.subr.mxu0 0.0
    %812 = vmatpush1.msra.mxu0 0.0
    %813 = vmatprep.subr.mxu0 0.0
    %814 = vmatpush1.msra.mxu0 0.0
    %815 = vmatprep.subr.mxu0 0.0
    %816 = vmatpush1.msra.mxu0 0.0
    %817 = vmatprep.subr.mxu0 0.0
    %818 = vmatpush1.msra.mxu0 0.0
    %819 = vmatprep.subr.mxu0 0.0
    %820 = vmatpush1.msra.mxu0 0.0
    %821 = vmatprep.subr.mxu0 0.0
    %822 = vmatpush1.msra.mxu0 0.0
    %823 = vmatprep.subr.mxu0 0.0
    %824 = vmatpush1.msra.mxu0 0.0
    %825 = vmatprep.subr.mxu0 0.0
    %826 = vmatpush1.msra.mxu0 0.0
    %827 = vmatprep.subr.mxu0 0.0
    %828 = vmatpush1.msra.mxu0 0.0
    %829 = vmatprep.subr.mxu0 0.0
    %830 = vmatpush1.msra.mxu0 %v792
    %831 = vmatprep.subr.mxu0 0.0
    %832 = vmatpush1.msra.mxu0 %v790
    %833 = vmatprep.subr.mxu0 0.0
    %834 = vmatpush2.msra.mxu0 0.0
    %835 = vmatprep.subr.mxu0 0.0
    %836 = vmatpush2.msra.mxu0 0.0
    %837 = vmatprep.subr.mxu0 0.0
    %838 = vmatpush2.msra.mxu0 0.0
    %839 = vmatprep.subr.mxu0 0.0
    %840 = vmatpush2.msra.mxu0 0.0
    %841 = vmatprep.subr.mxu0 0.0
    %842 = vmatpush2.msra.mxu0 0.0
    %843 = vmatprep.subr.mxu0 0.0
    %844 = vmatpush2.msra.mxu0 0.0
    %845 = vmatprep.subr.mxu0 0.0
    %846 = vmatpush2.msra.mxu0 0.0
    %847 = vmatprep.subr.mxu0 0.0
    %848 = vmatpush2.msra.mxu0 0.0
    %849 = vmatprep.subr.mxu0 0.0
    %850 = vmatpush2.msra.mxu0 0.0
    %851 = vmatprep.subr.mxu0 0.0
    %852 = vmatpush2.msra.mxu0 0.0
    %853 = vmatprep.subr.mxu0 0.0
    %854 = vmatpush2.msra.mxu0 0.0
    %855 = vmatprep.subr.mxu0 0.0
    %856 = vmatpush2.msra.mxu0 0.0
    %857 = vmatprep.subr.mxu0 0.0
    %858 = vmatpush2.msra.mxu0 0.0
    %859 = vmatprep.subr.mxu0 0.0
    %860 = vmatpush2.msra.mxu0 0.0
    %861 = vmatprep.subr.mxu0 0.0
    %862 = vmatpush2.msra.mxu0 0.0
    %863 = vmatprep.subr.mxu0 0.0
    %864 = vmatpush2.msra.mxu0 0.0
    %865 = vmatprep.mubr.f32.mxu0 0.0
    %866 = vmatmul.mubr.f32.gmra.mxu0 %v796
    %v867 = vpop.f32.mrf.mxu0
    %v868 = vadd.f32 0.0, %v867
    %v869 = vpop.f32.mrf.mxu0
    %870 = vmatprep.mubr.f32.mxu0 0.0
    %871 = vmatmul.mubr.f32.gmra.mxu0 %v799
    %v872 = vpop.f32.mrf.mxu0
    %v873 = vadd.f32 0.0, %v872
    %v874 = vpop.f32.mrf.mxu0
    %875 = vdwg.mxu0
    %876 = vrot.lane.b32.xlu0 %v253, 104
    %v877 = vpop.permute.xlu0 %876
    %878 = vrot.lane.b32.xlu0 %v258, 104
    %v879 = vpop.permute.xlu0 %878
    %880 = vrot.lane.b32.xlu0 %v253, 72
    %v881 = vpop.permute.xlu0 %880
    %882 = vrot.lane.b32.xlu0 %v258, 72
    %v883 = vpop.permute.xlu0 %882
    %v884 = vsel %vm277, %v877, 0
    %v886 = vsel %vm277, %v879, 0
    %v888 = vsel %vm277, %v881, 0
    %v890 = vsel %vm277, %v883, 0
    %892 = vmatprep.subr.mxu0 0.0
    %893 = vmatpush1.xpose.msra.mxu0 0.0
    %894 = vmatprep.subr.mxu0 0.0
    %895 = vmatpush1.xpose.msra.mxu0 0.0
    %896 = vmatprep.subr.mxu0 0.0
    %897 = vmatpush1.xpose.msra.mxu0 0.0
    %898 = vmatprep.subr.mxu0 0.0
    %899 = vmatpush1.xpose.msra.mxu0 0.0
    %900 = vmatprep.subr.mxu0 0.0
    %901 = vmatpush1.xpose.msra.mxu0 0.0
    %902 = vmatprep.subr.mxu0 0.0
    %903 = vmatpush1.xpose.msra.mxu0 0.0
    %904 = vmatprep.subr.mxu0 0.0
    %905 = vmatpush1.xpose.msra.mxu0 0.0
    %906 = vmatprep.subr.mxu0 0.0
    %907 = vmatpush1.xpose.msra.mxu0 0.0
    %908 = vmatprep.subr.mxu0 0.0
    %909 = vmatpush1.xpose.msra.mxu0 0.0
    %910 = vmatprep.subr.mxu0 0.0
    %911 = vmatpush1.xpose.msra.mxu0 0.0
    %912 = vmatprep.subr.mxu0 0.0
    %913 = vmatpush1.xpose.msra.mxu0 0.0
    %914 = vmatprep.subr.mxu0 0.0
    %915 = vmatpush1.xpose.msra.mxu0 0.0
    %916 = vmatprep.subr.mxu0 0.0
    %917 = vmatpush1.xpose.msra.mxu0 0.0
    %918 = vmatprep.subr.mxu0 0.0
    %919 = vmatpush1.xpose.msra.mxu0 0.0
    %920 = vmatprep.subr.mxu0 0.0
    %921 = vmatpush1.xpose.msra.mxu0 %v890
    %922 = vmatprep.subr.mxu0 0.0
    %923 = vmatpush1.xpose.msra.mxu0 %v888
    %924 = vmatprep.subr.mxu0 0.0
    %925 = vmatpush2.xpose.msra.mxu0 0.0
    %926 = vmatprep.subr.mxu0 0.0
    %927 = vmatpush2.xpose.msra.mxu0 0.0
    %928 = vmatprep.subr.mxu0 0.0
    %929 = vmatpush2.xpose.msra.mxu0 0.0
    %930 = vmatprep.subr.mxu0 0.0
    %931 = vmatpush2.xpose.msra.mxu0 0.0
    %932 = vmatprep.subr.mxu0 0.0
    %933 = vmatpush2.xpose.msra.mxu0 0.0
    %934 = vmatprep.subr.mxu0 0.0
    %935 = vmatpush2.xpose.msra.mxu0 0.0
    %936 = vmatprep.subr.mxu0 0.0
    %937 = vmatpush2.xpose.msra.mxu0 0.0
    %938 = vmatprep.subr.mxu0 0.0
    %939 = vmatpush2.xpose.msra.mxu0 0.0
    %940 = vmatprep.subr.mxu0 0.0
    %941 = vmatpush2.xpose.msra.mxu0 0.0
    %942 = vmatprep.subr.mxu0 0.0
    %943 = vmatpush2.xpose.msra.mxu0 0.0
    %944 = vmatprep.subr.mxu0 0.0
    %945 = vmatpush2.xpose.msra.mxu0 0.0
    %946 = vmatprep.subr.mxu0 0.0
    %947 = vmatpush2.xpose.msra.mxu0 0.0
    %948 = vmatprep.subr.mxu0 0.0
    %949 = vmatpush2.xpose.msra.mxu0 0.0
    %950 = vmatprep.subr.mxu0 0.0
    %951 = vmatpush2.xpose.msra.mxu0 0.0
    %952 = vmatprep.subr.mxu0 0.0
    %953 = vmatpush2.xpose.msra.mxu0 0.0
    %954 = vmatprep.subr.mxu0 0.0
    %955 = vmatpush2.xpose.msra.mxu0 0.0
    %956 = vmatprep.mubr.f32.mxu0 0.0
    %957 = vmatmul.mubr.f32.gmra.mxu0 %v884
    %v958 = vpop.f32.mrf.mxu0
    %v959 = vadd.f32 0.0, %v958
    %v960 = vpop.f32.mrf.mxu0
    %961 = vmatprep.mubr.f32.mxu0 0.0
    %962 = vmatmul.mubr.f32.gmra.mxu0 %v886
    %v963 = vpop.f32.mrf.mxu0
    %v964 = vadd.f32 0.0, %v963
    %v965 = vpop.f32.mrf.mxu0
    %966 = vdwg.mxu0
    %v967 = vmul.f32 %v959, 0.35355338
    %v968 = vmul.f32 %v964, 0.35355338
    %v969 = vsel %vm71, %v967, -inf
    %970 = vmax.xlane.f32.xlu0 %v969
    %v971 = vpop.xlane.xlu0 %970
    %v972 = vsel %vm71, %v968, -inf
    %973 = vmax.xlane.f32.xlu0 %v972
    %v974 = vpop.xlane.xlu0 %973
    %v975 = vsub.f32 %v967, %v971
    %v976 = vsub.f32 %v968, %v974
    %v977 = vmul.f32 %v975, 1.442695
    %v978 = vpow.pop %v977
    %v979 = vmul.f32 %v976, 1.442695
    %v980 = vpow.pop %v979
    %v981 = vsel %vm71, %v978, 0.0
    %982 = vadd.xlane.f32.xlu0 %v981
    %v983 = vpop.xlane.xlu0 %982
    %v984 = vsel %vm71, %v980, 0.0
    %985 = vadd.xlane.f32.xlu0 %v984
    %v986 = vpop.xlane.xlu0 %985
    %v987 = vrcp.pop %v983
    %v988 = vmul.f32 %v978, %v987
    %v989 = vrcp.pop %v986
    %v990 = vmul.f32 %v980, %v989
    %991 = vrot.lane.b32.xlu0 %v253, 40
    %v992 = vpop.permute.xlu0 %991
    %993 = vrot.lane.b32.xlu0 %v258, 40
    %v994 = vpop.permute.xlu0 %993
    %v998 = vsel %vm71, %v988, 0
    %v1001 = vsel %vm71, %v990, 0
    %1003 = vmatprep.subr.mxu0 0.0
    %1004 = vmatpush1.msra.mxu0 0.0
    %1005 = vmatprep.subr.mxu0 0.0
    %1006 = vmatpush1.msra.mxu0 0.0
    %1007 = vmatprep.subr.mxu0 0.0
    %1008 = vmatpush1.msra.mxu0 0.0
    %1009 = vmatprep.subr.mxu0 0.0
    %1010 = vmatpush1.msra.mxu0 0.0
    %1011 = vmatprep.subr.mxu0 0.0
    %1012 = vmatpush1.msra.mxu0 0.0
    %1013 = vmatprep.subr.mxu0 0.0
    %1014 = vmatpush1.msra.mxu0 0.0
    %1015 = vmatprep.subr.mxu0 0.0
    %1016 = vmatpush1.msra.mxu0 0.0
    %1017 = vmatprep.subr.mxu0 0.0
    %1018 = vmatpush1.msra.mxu0 0.0
    %1019 = vmatprep.subr.mxu0 0.0
    %1020 = vmatpush1.msra.mxu0 0.0
    %1021 = vmatprep.subr.mxu0 0.0
    %1022 = vmatpush1.msra.mxu0 0.0
    %1023 = vmatprep.subr.mxu0 0.0
    %1024 = vmatpush1.msra.mxu0 0.0
    %1025 = vmatprep.subr.mxu0 0.0
    %1026 = vmatpush1.msra.mxu0 0.0
    %1027 = vmatprep.subr.mxu0 0.0
    %1028 = vmatpush1.msra.mxu0 0.0
    %1029 = vmatprep.subr.mxu0 0.0
    %1030 = vmatpush1.msra.mxu0 0.0
    %1031 = vmatprep.subr.mxu0 0.0
    %1032 = vmatpush1.msra.mxu0 %v994
    %1033 = vmatprep.subr.mxu0 0.0
    %1034 = vmatpush1.msra.mxu0 %v992
    %1035 = vmatprep.subr.mxu0 0.0
    %1036 = vmatpush2.msra.mxu0 0.0
    %1037 = vmatprep.subr.mxu0 0.0
    %1038 = vmatpush2.msra.mxu0 0.0
    %1039 = vmatprep.subr.mxu0 0.0
    %1040 = vmatpush2.msra.mxu0 0.0
    %1041 = vmatprep.subr.mxu0 0.0
    %1042 = vmatpush2.msra.mxu0 0.0
    %1043 = vmatprep.subr.mxu0 0.0
    %1044 = vmatpush2.msra.mxu0 0.0
    %1045 = vmatprep.subr.mxu0 0.0
    %1046 = vmatpush2.msra.mxu0 0.0
    %1047 = vmatprep.subr.mxu0 0.0
    %1048 = vmatpush2.msra.mxu0 0.0
    %1049 = vmatprep.subr.mxu0 0.0
    %1050 = vmatpush2.msra.mxu0 0.0
    %1051 = vmatprep.subr.mxu0 0.0
    %1052 = vmatpush2.msra.mxu0 0.0
    %1053 = vmatprep.subr.mxu0 0.0
    %1054 = vmatpush2.msra.mxu0 0.0
    %1055 = vmatprep.subr.mxu0 0.0
    %1056 = vmatpush2.msra.mxu0 0.0
    %1057 = vmatprep.subr.mxu0 0.0
    %1058 = vmatpush2.msra.mxu0 0.0
    %1059 = vmatprep.subr.mxu0 0.0
    %1060 = vmatpush2.msra.mxu0 0.0
    %1061 = vmatprep.subr.mxu0 0.0
    %1062 = vmatpush2.msra.mxu0 0.0
    %1063 = vmatprep.subr.mxu0 0.0
    %1064 = vmatpush2.msra.mxu0 0.0
    %1065 = vmatprep.subr.mxu0 0.0
    %1066 = vmatpush2.msra.mxu0 0.0
    %1067 = vmatprep.mubr.f32.mxu0 0.0
    %1068 = vmatmul.mubr.f32.gmra.mxu0 %v998
    %v1069 = vpop.f32.mrf.mxu0
    %v1070 = vadd.f32 0.0, %v1069
    %v1071 = vpop.f32.mrf.mxu0
    %1072 = vmatprep.mubr.f32.mxu0 0.0
    %1073 = vmatmul.mubr.f32.gmra.mxu0 %v1001
    %v1074 = vpop.f32.mrf.mxu0
    %v1075 = vadd.f32 0.0, %v1074
    %v1076 = vpop.f32.mrf.mxu0
    %1077 = vdwg.mxu0
    %1080 = vrot.lane.b32.xlu0 %v666, 8
    %v1081 = vpop.permute.xlu0 %1080
    %1082 = vrot.lane.b32.xlu0 %v671, 8
    %v1083 = vpop.permute.xlu0 %1082
    %1088 = vrot.lane.b32.xlu0 %v868, 16
    %v1089 = vpop.permute.xlu0 %1088
    %1090 = vrot.lane.b32.xlu0 %v873, 16
    %v1091 = vpop.permute.xlu0 %1090
    %1096 = vrot.lane.b32.xlu0 %v1070, 24
    %v1097 = vpop.permute.xlu0 %1096
    %1098 = vrot.lane.b32.xlu0 %v1075, 24
    %v1099 = vpop.permute.xlu0 %1098
    %v1102 = vsel %vm277, %v464, %v1081
    %v1103 = vsel %vm277, %v469, %v1083
    %v1104 = vsel %vm71, %v1102, %v1089
    %v1105 = vsel %vm71, %v1103, %v1091
    %vm1106 = vcmask 195584
    %v1107 = vsel %vm1106, %v1104, %v1097
    %v1108 = vsel %vm1106, %v1105, %v1099
    %1111 = vrot.lane.b32.xlu0 %v263, 96
    %v1112 = vpop.permute.xlu0 %1111
    %1113 = vrot.lane.b32.xlu0 %v268, 96
    %v1114 = vpop.permute.xlu0 %1113
    %v1115 = vsel %vm277, %v263, 0
    %v1117 = vsel %vm277, %v268, 0
    %v1119 = vsel %vm277, %v1112, 0
    %v1121 = vsel %vm277, %v1114, 0
    %1123 = vmatprep.subr.mxu0 0.0
    %1124 = vmatpush1.xpose.msra.mxu0 0.0
    %1125 = vmatprep.subr.mxu0 0.0
    %1126 = vmatpush1.xpose.msra.mxu0 0.0
    %1127 = vmatprep.subr.mxu0 0.0
    %1128 = vmatpush1.xpose.msra.mxu0 0.0
    %1129 = vmatprep.subr.mxu0 0.0
    %1130 = vmatpush1.xpose.msra.mxu0 0.0
    %1131 = vmatprep.subr.mxu0 0.0
    %1132 = vmatpush1.xpose.msra.mxu0 0.0
    %1133 = vmatprep.subr.mxu0 0.0
    %1134 = vmatpush1.xpose.msra.mxu0 0.0
    %1135 = vmatprep.subr.mxu0 0.0
    %1136 = vmatpush1.xpose.msra.mxu0 0.0
    %1137 = vmatprep.subr.mxu0 0.0
    %1138 = vmatpush1.xpose.msra.mxu0 0.0
    %1139 = vmatprep.subr.mxu0 0.0
    %1140 = vmatpush1.xpose.msra.mxu0 0.0
    %1141 = vmatprep.subr.mxu0 0.0
    %1142 = vmatpush1.xpose.msra.mxu0 0.0
    %1143 = vmatprep.subr.mxu0 0.0
    %1144 = vmatpush1.xpose.msra.mxu0 0.0
    %1145 = vmatprep.subr.mxu0 0.0
    %1146 = vmatpush1.xpose.msra.mxu0 0.0
    %1147 = vmatprep.subr.mxu0 0.0
    %1148 = vmatpush1.xpose.msra.mxu0 0.0
    %1149 = vmatprep.subr.mxu0 0.0
    %1150 = vmatpush1.xpose.msra.mxu0 0.0
    %1151 = vmatprep.subr.mxu0 0.0
    %1152 = vmatpush1.xpose.msra.mxu0 %v1121
    %1153 = vmatprep.subr.mxu0 0.0
    %1154 = vmatpush1.xpose.msra.mxu0 %v1119
    %1155 = vmatprep.subr.mxu0 0.0
    %1156 = vmatpush2.xpose.msra.mxu0 0.0
    %1157 = vmatprep.subr.mxu0 0.0
    %1158 = vmatpush2.xpose.msra.mxu0 0.0
    %1159 = vmatprep.subr.mxu0 0.0
    %1160 = vmatpush2.xpose.msra.mxu0 0.0
    %1161 = vmatprep.subr.mxu0 0.0
    %1162 = vmatpush2.xpose.msra.mxu0 0.0
    %1163 = vmatprep.subr.mxu0 0.0
    %1164 = vmatpush2.xpose.msra.mxu0 0.0
    %1165 = vmatprep.subr.mxu0 0.0
    %1166 = vmatpush2.xpose.msra.mxu0 0.0
    %1167 = vmatprep.subr.mxu0 0.0
    %1168 = vmatpush2.xpose.msra.mxu0 0.0
    %1169 = vmatprep.subr.mxu0 0.0
    %1170 = vmatpush2.xpose.msra.mxu0 0.0
    %1171 = vmatprep.subr.mxu0 0.0
    %1172 = vmatpush2.xpose.msra.mxu0 0.0
    %1173 = vmatprep.subr.mxu0 0.0
    %1174 = vmatpush2.xpose.msra.mxu0 0.0
    %1175 = vmatprep.subr.mxu0 0.0
    %1176 = vmatpush2.xpose.msra.mxu0 0.0
    %1177 = vmatprep.subr.mxu0 0.0
    %1178 = vmatpush2.xpose.msra.mxu0 0.0
    %1179 = vmatprep.subr.mxu0 0.0
    %1180 = vmatpush2.xpose.msra.mxu0 0.0
    %1181 = vmatprep.subr.mxu0 0.0
    %1182 = vmatpush2.xpose.msra.mxu0 0.0
    %1183 = vmatprep.subr.mxu0 0.0
    %1184 = vmatpush2.xpose.msra.mxu0 0.0
    %1185 = vmatprep.subr.mxu0 0.0
    %1186 = vmatpush2.xpose.msra.mxu0 0.0
    %1187 = vmatprep.mubr.f32.mxu0 0.0
    %1188 = vmatmul.mubr.f32.gmra.mxu0 %v1115
    %v1189 = vpop.f32.mrf.mxu0
    %v1190 = vadd.f32 0.0, %v1189
    %v1191 = vpop.f32.mrf.mxu0
    %1192 = vmatprep.mubr.f32.mxu0 0.0
    %1193 = vmatmul.mubr.f32.gmra.mxu0 %v1117
    %v1194 = vpop.f32.mrf.mxu0
    %v1195 = vadd.f32 0.0, %v1194
    %v1196 = vpop.f32.mrf.mxu0
    %1197 = vdwg.mxu0
    %v1198 = vmul.f32 %v1190, 0.35355338
    %v1199 = vmul.f32 %v1195, 0.35355338
    %v1200 = vsel %vm71, %v1198, -inf
    %1201 = vmax.xlane.f32.xlu0 %v1200
    %v1202 = vpop.xlane.xlu0 %1201
    %v1203 = vsel %vm71, %v1199, -inf
    %1204 = vmax.xlane.f32.xlu0 %v1203
    %v1205 = vpop.xlane.xlu0 %1204
    %v1206 = vsub.f32 %v1198, %v1202
    %v1207 = vsub.f32 %v1199, %v1205
    %v1208 = vmul.f32 %v1206, 1.442695
    %v1209 = vpow.pop %v1208
    %v1210 = vmul.f32 %v1207, 1.442695
    %v1211 = vpow.pop %v1210
    %v1212 = vsel %vm71, %v1209, 0.0
    %1213 = vadd.xlane.f32.xlu0 %v1212
    %v1214 = vpop.xlane.xlu0 %1213
    %v1215 = vsel %vm71, %v1211, 0.0
    %1216 = vadd.xlane.f32.xlu0 %v1215
    %v1217 = vpop.xlane.xlu0 %1216
    %v1218 = vrcp.pop %v1214
    %v1219 = vmul.f32 %v1209, %v1218
    %v1220 = vrcp.pop %v1217
    %v1221 = vmul.f32 %v1211, %v1220
    %1222 = vrot.lane.b32.xlu0 %v263, 64
    %v1223 = vpop.permute.xlu0 %1222
    %1224 = vrot.lane.b32.xlu0 %v268, 64
    %v1225 = vpop.permute.xlu0 %1224
    %v1229 = vsel %vm71, %v1219, 0
    %v1232 = vsel %vm71, %v1221, 0
    %1234 = vmatprep.subr.mxu0 0.0
    %1235 = vmatpush1.msra.mxu0 0.0
    %1236 = vmatprep.subr.mxu0 0.0
    %1237 = vmatpush1.msra.mxu0 0.0
    %1238 = vmatprep.subr.mxu0 0.0
    %1239 = vmatpush1.msra.mxu0 0.0
    %1240 = vmatprep.subr.mxu0 0.0
    %1241 = vmatpush1.msra.mxu0 0.0
    %1242 = vmatprep.subr.mxu0 0.0
    %1243 = vmatpush1.msra.mxu0 0.0
    %1244 = vmatprep.subr.mxu0 0.0
    %1245 = vmatpush1.msra.mxu0 0.0
    %1246 = vmatprep.subr.mxu0 0.0
    %1247 = vmatpush1.msra.mxu0 0.0
    %1248 = vmatprep.subr.mxu0 0.0
    %1249 = vmatpush1.msra.mxu0 0.0
    %1250 = vmatprep.subr.mxu0 0.0
    %1251 = vmatpush1.msra.mxu0 0.0
    %1252 = vmatprep.subr.mxu0 0.0
    %1253 = vmatpush1.msra.mxu0 0.0
    %1254 = vmatprep.subr.mxu0 0.0
    %1255 = vmatpush1.msra.mxu0 0.0
    %1256 = vmatprep.subr.mxu0 0.0
    %1257 = vmatpush1.msra.mxu0 0.0
    %1258 = vmatprep.subr.mxu0 0.0
    %1259 = vmatpush1.msra.mxu0 0.0
    %1260 = vmatprep.subr.mxu0 0.0
    %1261 = vmatpush1.msra.mxu0 0.0
    %1262 = vmatprep.subr.mxu0 0.0
    %1263 = vmatpush1.msra.mxu0 %v1225
    %1264 = vmatprep.subr.mxu0 0.0
    %1265 = vmatpush1.msra.mxu0 %v1223
    %1266 = vmatprep.subr.mxu0 0.0
    %1267 = vmatpush2.msra.mxu0 0.0
    %1268 = vmatprep.subr.mxu0 0.0
    %1269 = vmatpush2.msra.mxu0 0.0
    %1270 = vmatprep.subr.mxu0 0.0
    %1271 = vmatpush2.msra.mxu0 0.0
    %1272 = vmatprep.subr.mxu0 0.0
    %1273 = vmatpush2.msra.mxu0 0.0
    %1274 = vmatprep.subr.mxu0 0.0
    %1275 = vmatpush2.msra.mxu0 0.0
    %1276 = vmatprep.subr.mxu0 0.0
    %1277 = vmatpush2.msra.mxu0 0.0
    %1278 = vmatprep.subr.mxu0 0.0
    %1279 = vmatpush2.msra.mxu0 0.0
    %1280 = vmatprep.subr.mxu0 0.0
    %1281 = vmatpush2.msra.mxu0 0.0
    %1282 = vmatprep.subr.mxu0 0.0
    %1283 = vmatpush2.msra.mxu0 0.0
    %1284 = vmatprep.subr.mxu0 0.0
    %1285 = vmatpush2.msra.mxu0 0.0
    %1286 = vmatprep.subr.mxu0 0.0
    %1287 = vmatpush2.msra.mxu0 0.0
    %1288 = vmatprep.subr.mxu0 0.0
    %1289 = vmatpush2.msra.mxu0 0.0
    %1290 = vmatprep.subr.mxu0 0.0
    %1291 = vmatpush2.msra.mxu0 0.0
    %1292 = vmatprep.subr.mxu0 0.0
    %1293 = vmatpush2.msra.mxu0 0.0
    %1294 = vmatprep.subr.mxu0 0.0
    %1295 = vmatpush2.msra.mxu0 0.0
    %1296 = vmatprep.subr.mxu0 0.0
    %1297 = vmatpush2.msra.mxu0 0.0
    %1298 = vmatprep.mubr.f32.mxu0 0.0
    %1299 = vmatmul.mubr.f32.gmra.mxu0 %v1229
    %v1300 = vpop.f32.mrf.mxu0
    %v1301 = vadd.f32 0.0, %v1300
    %v1302 = vpop.f32.mrf.mxu0
    %1303 = vmatprep.mubr.f32.mxu0 0.0
    %1304 = vmatmul.mubr.f32.gmra.mxu0 %v1232
    %v1305 = vpop.f32.mrf.mxu0
    %v1306 = vadd.f32 0.0, %v1305
    %v1307 = vpop.f32.mrf.mxu0
    %1308 = vdwg.mxu0
    %1309 = vrot.lane.b32.xlu0 %v263, 120
    %v1310 = vpop.permute.xlu0 %1309
    %1311 = vrot.lane.b32.xlu0 %v268, 120
    %v1312 = vpop.permute.xlu0 %1311
    %1313 = vrot.lane.b32.xlu0 %v263, 88
    %v1314 = vpop.permute.xlu0 %1313
    %1315 = vrot.lane.b32.xlu0 %v268, 88
    %v1316 = vpop.permute.xlu0 %1315
    %v1317 = vsel %vm277, %v1310, 0
    %v1319 = vsel %vm277, %v1312, 0
    %v1321 = vsel %vm277, %v1314, 0
    %v1323 = vsel %vm277, %v1316, 0
    %1325 = vmatprep.subr.mxu0 0.0
    %1326 = vmatpush1.xpose.msra.mxu0 0.0
    %1327 = vmatprep.subr.mxu0 0.0
    %1328 = vmatpush1.xpose.msra.mxu0 0.0
    %1329 = vmatprep.subr.mxu0 0.0
    %1330 = vmatpush1.xpose.msra.mxu0 0.0
    %1331 = vmatprep.subr.mxu0 0.0
    %1332 = vmatpush1.xpose.msra.mxu0 0.0
    %1333 = vmatprep.subr.mxu0 0.0
    %1334 = vmatpush1.xpose.msra.mxu0 0.0
    %1335 = vmatprep.subr.mxu0 0.0
    %1336 = vmatpush1.xpose.msra.mxu0 0.0
    %1337 = vmatprep.subr.mxu0 0.0
    %1338 = vmatpush1.xpose.msra.mxu0 0.0
    %1339 = vmatprep.subr.mxu0 0.0
    %1340 = vmatpush1.xpose.msra.mxu0 0.0
    %1341 = vmatprep.subr.mxu0 0.0
    %1342 = vmatpush1.xpose.msra.mxu0 0.0
    %1343 = vmatprep.subr.mxu0 0.0
    %1344 = vmatpush1.xpose.msra.mxu0 0.0
    %1345 = vmatprep.subr.mxu0 0.0
    %1346 = vmatpush1.xpose.msra.mxu0 0.0
    %1347 = vmatprep.subr.mxu0 0.0
    %1348 = vmatpush1.xpose.msra.mxu0 0.0
    %1349 = vmatprep.subr.mxu0 0.0
    %1350 = vmatpush1.xpose.msra.mxu0 0.0
    %1351 = vmatprep.subr.mxu0 0.0
    %1352 = vmatpush1.xpose.msra.mxu0 0.0
    %1353 = vmatprep.subr.mxu0 0.0
    %1354 = vmatpush1.xpose.msra.mxu0 %v1323
    %1355 = vmatprep.subr.mxu0 0.0
    %1356 = vmatpush1.xpose.msra.mxu0 %v1321
    %1357 = vmatprep.subr.mxu0 0.0
    %1358 = vmatpush2.xpose.msra.mxu0 0.0
    %1359 = vmatprep.subr.mxu0 0.0
    %1360 = vmatpush2.xpose.msra.mxu0 0.0
    %1361 = vmatprep.subr.mxu0 0.0
    %1362 = vmatpush2.xpose.msra.mxu0 0.0
    %1363 = vmatprep.subr.mxu0 0.0
    %1364 = vmatpush2.xpose.msra.mxu0 0.0
    %1365 = vmatprep.subr.mxu0 0.0
    %1366 = vmatpush2.xpose.msra.mxu0 0.0
    %1367 = vmatprep.subr.mxu0 0.0
    %1368 = vmatpush2.xpose.msra.mxu0 0.0
    %1369 = vmatprep.subr.mxu0 0.0
    %1370 = vmatpush2.xpose.msra.mxu0 0.0
    %1371 = vmatprep.subr.mxu0 0.0
    %1372 = vmatpush2.xpose.msra.mxu0 0.0
    %1373 = vmatprep.subr.mxu0 0.0
    %1374 = vmatpush2.xpose.msra.mxu0 0.0
    %1375 = vmatprep.subr.mxu0 0.0
    %1376 = vmatpush2.xpose.msra.mxu0 0.0
    %1377 = vmatprep.subr.mxu0 0.0
    %1378 = vmatpush2.xpose.msra.mxu0 0.0
    %1379 = vmatprep.subr.mxu0 0.0
    %1380 = vmatpush2.xpose.msra.mxu0 0.0
    %1381 = vmatprep.subr.mxu0 0.0
    %1382 = vmatpush2.xpose.msra.mxu0 0.0
    %1383 = vmatprep.subr.mxu0 0.0
    %1384 = vmatpush2.xpose.msra.mxu0 0.0
    %1385 = vmatprep.subr.mxu0 0.0
    %1386 = vmatpush2.xpose.msra.mxu0 0.0
    %1387 = vmatprep.subr.mxu0 0.0
    %1388 = vmatpush2.xpose.msra.mxu0 0.0
    %1389 = vmatprep.mubr.f32.mxu0 0.0
    %1390 = vmatmul.mubr.f32.gmra.mxu0 %v1317
    %v1391 = vpop.f32.mrf.mxu0
    %v1392 = vadd.f32 0.0, %v1391
    %v1393 = vpop.f32.mrf.mxu0
    %1394 = vmatprep.mubr.f32.mxu0 0.0
    %1395 = vmatmul.mubr.f32.gmra.mxu0 %v1319
    %v1396 = vpop.f32.mrf.mxu0
    %v1397 = vadd.f32 0.0, %v1396
    %v1398 = vpop.f32.mrf.mxu0
    %1399 = vdwg.mxu0
    %v1400 = vmul.f32 %v1392, 0.35355338
    %v1401 = vmul.f32 %v1397, 0.35355338
    %v1402 = vsel %vm71, %v1400, -inf
    %1403 = vmax.xlane.f32.xlu0 %v1402
    %v1404 = vpop.xlane.xlu0 %1403
    %v1405 = vsel %vm71, %v1401, -inf
    %1406 = vmax.xlane.f32.xlu0 %v1405
    %v1407 = vpop.xlane.xlu0 %1406
    %v1408 = vsub.f32 %v1400, %v1404
    %v1409 = vsub.f32 %v1401, %v1407
    %v1410 = vmul.f32 %v1408, 1.442695
    %v1411 = vpow.pop %v1410
    %v1412 = vmul.f32 %v1409, 1.442695
    %v1413 = vpow.pop %v1412
    %v1414 = vsel %vm71, %v1411, 0.0
    %1415 = vadd.xlane.f32.xlu0 %v1414
    %v1416 = vpop.xlane.xlu0 %1415
    %v1417 = vsel %vm71, %v1413, 0.0
    %1418 = vadd.xlane.f32.xlu0 %v1417
    %v1419 = vpop.xlane.xlu0 %1418
    %v1420 = vrcp.pop %v1416
    %v1421 = vmul.f32 %v1411, %v1420
    %v1422 = vrcp.pop %v1419
    %v1423 = vmul.f32 %v1413, %v1422
    %1424 = vrot.lane.b32.xlu0 %v263, 56
    %v1425 = vpop.permute.xlu0 %1424
    %1426 = vrot.lane.b32.xlu0 %v268, 56
    %v1427 = vpop.permute.xlu0 %1426
    %v1431 = vsel %vm71, %v1421, 0
    %v1434 = vsel %vm71, %v1423, 0
    %1436 = vmatprep.subr.mxu0 0.0
    %1437 = vmatpush1.msra.mxu0 0.0
    %1438 = vmatprep.subr.mxu0 0.0
    %1439 = vmatpush1.msra.mxu0 0.0
    %1440 = vmatprep.subr.mxu0 0.0
    %1441 = vmatpush1.msra.mxu0 0.0
    %1442 = vmatprep.subr.mxu0 0.0
    %1443 = vmatpush1.msra.mxu0 0.0
    %1444 = vmatprep.subr.mxu0 0.0
    %1445 = vmatpush1.msra.mxu0 0.0
    %1446 = vmatprep.subr.mxu0 0.0
    %1447 = vmatpush1.msra.mxu0 0.0
    %1448 = vmatprep.subr.mxu0 0.0
    %1449 = vmatpush1.msra.mxu0 0.0
    %1450 = vmatprep.subr.mxu0 0.0
    %1451 = vmatpush1.msra.mxu0 0.0
    %1452 = vmatprep.subr.mxu0 0.0
    %1453 = vmatpush1.msra.mxu0 0.0
    %1454 = vmatprep.subr.mxu0 0.0
    %1455 = vmatpush1.msra.mxu0 0.0
    %1456 = vmatprep.subr.mxu0 0.0
    %1457 = vmatpush1.msra.mxu0 0.0
    %1458 = vmatprep.subr.mxu0 0.0
    %1459 = vmatpush1.msra.mxu0 0.0
    %1460 = vmatprep.subr.mxu0 0.0
    %1461 = vmatpush1.msra.mxu0 0.0
    %1462 = vmatprep.subr.mxu0 0.0
    %1463 = vmatpush1.msra.mxu0 0.0
    %1464 = vmatprep.subr.mxu0 0.0
    %1465 = vmatpush1.msra.mxu0 %v1427
    %1466 = vmatprep.subr.mxu0 0.0
    %1467 = vmatpush1.msra.mxu0 %v1425
    %1468 = vmatprep.subr.mxu0 0.0
    %1469 = vmatpush2.msra.mxu0 0.0
    %1470 = vmatprep.subr.mxu0 0.0
    %1471 = vmatpush2.msra.mxu0 0.0
    %1472 = vmatprep.subr.mxu0 0.0
    %1473 = vmatpush2.msra.mxu0 0.0
    %1474 = vmatprep.subr.mxu0 0.0
    %1475 = vmatpush2.msra.mxu0 0.0
    %1476 = vmatprep.subr.mxu0 0.0
    %1477 = vmatpush2.msra.mxu0 0.0
    %1478 = vmatprep.subr.mxu0 0.0
    %1479 = vmatpush2.msra.mxu0 0.0
    %1480 = vmatprep.subr.mxu0 0.0
    %1481 = vmatpush2.msra.mxu0 0.0
    %1482 = vmatprep.subr.mxu0 0.0
    %1483 = vmatpush2.msra.mxu0 0.0
    %1484 = vmatprep.subr.mxu0 0.0
    %1485 = vmatpush2.msra.mxu0 0.0
    %1486 = vmatprep.subr.mxu0 0.0
    %1487 = vmatpush2.msra.mxu0 0.0
    %1488 = vmatprep.subr.mxu0 0.0
    %1489 = vmatpush2.msra.mxu0 0.0
    %1490 = vmatprep.subr.mxu0 0.0
    %1491 = vmatpush2.msra.mxu0 0.0
    %1492 = vmatprep.subr.mxu0 0.0
    %1493 = vmatpush2.msra.mxu0 0.0
    %1494 = vmatprep.subr.mxu0 0.0
    %1495 = vmatpush2.msra.mxu0 0.0
    %1496 = vmatprep.subr.mxu0 0.0
    %1497 = vmatpush2.msra.mxu0 0.0
    %1498 = vmatprep.subr.mxu0 0.0
    %1499 = vmatpush2.msra.mxu0 0.0
    %1500 = vmatprep.mubr.f32.mxu0 0.0
    %1501 = vmatmul.mubr.f32.gmra.mxu0 %v1431
    %v1502 = vpop.f32.mrf.mxu0
    %v1503 = vadd.f32 0.0, %v1502
    %v1504 = vpop.f32.mrf.mxu0
    %1505 = vmatprep.mubr.f32.mxu0 0.0
    %1506 = vmatmul.mubr.f32.gmra.mxu0 %v1434
    %v1507 = vpop.f32.mrf.mxu0
    %v1508 = vadd.f32 0.0, %v1507
    %v1509 = vpop.f32.mrf.mxu0
    %1510 = vdwg.mxu0
    %1511 = vrot.lane.b32.xlu0 %v263, 112
    %v1512 = vpop.permute.xlu0 %1511
    %1513 = vrot.lane.b32.xlu0 %v268, 112
    %v1514 = vpop.permute.xlu0 %1513
    %1515 = vrot.lane.b32.xlu0 %v263, 80
    %v1516 = vpop.permute.xlu0 %1515
    %1517 = vrot.lane.b32.xlu0 %v268, 80
    %v1518 = vpop.permute.xlu0 %1517
    %v1519 = vsel %vm277, %v1512, 0
    %v1521 = vsel %vm277, %v1514, 0
    %v1523 = vsel %vm277, %v1516, 0
    %v1525 = vsel %vm277, %v1518, 0
    %1527 = vmatprep.subr.mxu0 0.0
    %1528 = vmatpush1.xpose.msra.mxu0 0.0
    %1529 = vmatprep.subr.mxu0 0.0
    %1530 = vmatpush1.xpose.msra.mxu0 0.0
    %1531 = vmatprep.subr.mxu0 0.0
    %1532 = vmatpush1.xpose.msra.mxu0 0.0
    %1533 = vmatprep.subr.mxu0 0.0
    %1534 = vmatpush1.xpose.msra.mxu0 0.0
    %1535 = vmatprep.subr.mxu0 0.0
    %1536 = vmatpush1.xpose.msra.mxu0 0.0
    %1537 = vmatprep.subr.mxu0 0.0
    %1538 = vmatpush1.xpose.msra.mxu0 0.0
    %1539 = vmatprep.subr.mxu0 0.0
    %1540 = vmatpush1.xpose.msra.mxu0 0.0
    %1541 = vmatprep.subr.mxu0 0.0
    %1542 = vmatpush1.xpose.msra.mxu0 0.0
    %1543 = vmatprep.subr.mxu0 0.0
    %1544 = vmatpush1.xpose.msra.mxu0 0.0
    %1545 = vmatprep.subr.mxu0 0.0
    %1546 = vmatpush1.xpose.msra.mxu0 0.0
    %1547 = vmatprep.subr.mxu0 0.0
    %1548 = vmatpush1.xpose.msra.mxu0 0.0
    %1549 = vmatprep.subr.mxu0 0.0
    %1550 = vmatpush1.xpose.msra.mxu0 0.0
    %1551 = vmatprep.subr.mxu0 0.0
    %1552 = vmatpush1.xpose.msra.mxu0 0.0
    %1553 = vmatprep.subr.mxu0 0.0
    %1554 = vmatpush1.xpose.msra.mxu0 0.0
    %1555 = vmatprep.subr.mxu0 0.0
    %1556 = vmatpush1.xpose.msra.mxu0 %v1525
    %1557 = vmatprep.subr.mxu0 0.0
    %1558 = vmatpush1.xpose.msra.mxu0 %v1523
    %1559 = vmatprep.subr.mxu0 0.0
    %1560 = vmatpush2.xpose.msra.mxu0 0.0
    %1561 = vmatprep.subr.mxu0 0.0
    %1562 = vmatpush2.xpose.msra.mxu0 0.0
    %1563 = vmatprep.subr.mxu0 0.0
    %1564 = vmatpush2.xpose.msra.mxu0 0.0
    %1565 = vmatprep.subr.mxu0 0.0
    %1566 = vmatpush2.xpose.msra.mxu0 0.0
    %1567 = vmatprep.subr.mxu0 0.0
    %1568 = vmatpush2.xpose.msra.mxu0 0.0
    %1569 = vmatprep.subr.mxu0 0.0
    %1570 = vmatpush2.xpose.msra.mxu0 0.0
    %1571 = vmatprep.subr.mxu0 0.0
    %1572 = vmatpush2.xpose.msra.mxu0 0.0
    %1573 = vmatprep.subr.mxu0 0.0
    %1574 = vmatpush2.xpose.msra.mxu0 0.0
    %1575 = vmatprep.subr.mxu0 0.0
    %1576 = vmatpush2.xpose.msra.mxu0 0.0
    %1577 = vmatprep.subr.mxu0 0.0
    %1578 = vmatpush2.xpose.msra.mxu0 0.0
    %1579 = vmatprep.subr.mxu0 0.0
    %1580 = vmatpush2.xpose.msra.mxu0 0.0
    %1581 = vmatprep.subr.mxu0 0.0
    %1582 = vmatpush2.xpose.msra.mxu0 0.0
    %1583 = vmatprep.subr.mxu0 0.0
    %1584 = vmatpush2.xpose.msra.mxu0 0.0
    %1585 = vmatprep.subr.mxu0 0.0
    %1586 = vmatpush2.xpose.msra.mxu0 0.0
    %1587 = vmatprep.subr.mxu0 0.0
    %1588 = vmatpush2.xpose.msra.mxu0 0.0
    %1589 = vmatprep.subr.mxu0 0.0
    %1590 = vmatpush2.xpose.msra.mxu0 0.0
    %1591 = vmatprep.mubr.f32.mxu0 0.0
    %1592 = vmatmul.mubr.f32.gmra.mxu0 %v1519
    %v1593 = vpop.f32.mrf.mxu0
    %v1594 = vadd.f32 0.0, %v1593
    %v1595 = vpop.f32.mrf.mxu0
    %1596 = vmatprep.mubr.f32.mxu0 0.0
    %1597 = vmatmul.mubr.f32.gmra.mxu0 %v1521
    %v1598 = vpop.f32.mrf.mxu0
    %v1599 = vadd.f32 0.0, %v1598
    %v1600 = vpop.f32.mrf.mxu0
    %1601 = vdwg.mxu0
    %v1602 = vmul.f32 %v1594, 0.35355338
    %v1603 = vmul.f32 %v1599, 0.35355338
    %v1604 = vsel %vm71, %v1602, -inf
    %1605 = vmax.xlane.f32.xlu0 %v1604
    %v1606 = vpop.xlane.xlu0 %1605
    %v1607 = vsel %vm71, %v1603, -inf
    %1608 = vmax.xlane.f32.xlu0 %v1607
    %v1609 = vpop.xlane.xlu0 %1608
    %v1610 = vsub.f32 %v1602, %v1606
    %v1611 = vsub.f32 %v1603, %v1609
    %v1612 = vmul.f32 %v1610, 1.442695
    %v1613 = vpow.pop %v1612
    %v1614 = vmul.f32 %v1611, 1.442695
    %v1615 = vpow.pop %v1614
    %v1616 = vsel %vm71, %v1613, 0.0
    %1617 = vadd.xlane.f32.xlu0 %v1616
    %v1618 = vpop.xlane.xlu0 %1617
    %v1619 = vsel %vm71, %v1615, 0.0
    %1620 = vadd.xlane.f32.xlu0 %v1619
    %v1621 = vpop.xlane.xlu0 %1620
    %v1622 = vrcp.pop %v1618
    %v1623 = vmul.f32 %v1613, %v1622
    %v1624 = vrcp.pop %v1621
    %v1625 = vmul.f32 %v1615, %v1624
    %1626 = vrot.lane.b32.xlu0 %v263, 48
    %v1627 = vpop.permute.xlu0 %1626
    %1628 = vrot.lane.b32.xlu0 %v268, 48
    %v1629 = vpop.permute.xlu0 %1628
    %v1633 = vsel %vm71, %v1623, 0
    %v1636 = vsel %vm71, %v1625, 0
    %1638 = vmatprep.subr.mxu0 0.0
    %1639 = vmatpush1.msra.mxu0 0.0
    %1640 = vmatprep.subr.mxu0 0.0
    %1641 = vmatpush1.msra.mxu0 0.0
    %1642 = vmatprep.subr.mxu0 0.0
    %1643 = vmatpush1.msra.mxu0 0.0
    %1644 = vmatprep.subr.mxu0 0.0
    %1645 = vmatpush1.msra.mxu0 0.0
    %1646 = vmatprep.subr.mxu0 0.0
    %1647 = vmatpush1.msra.mxu0 0.0
    %1648 = vmatprep.subr.mxu0 0.0
    %1649 = vmatpush1.msra.mxu0 0.0
    %1650 = vmatprep.subr.mxu0 0.0
    %1651 = vmatpush1.msra.mxu0 0.0
    %1652 = vmatprep.subr.mxu0 0.0
    %1653 = vmatpush1.msra.mxu0 0.0
    %1654 = vmatprep.subr.mxu0 0.0
    %1655 = vmatpush1.msra.mxu0 0.0
    %1656 = vmatprep.subr.mxu0 0.0
    %1657 = vmatpush1.msra.mxu0 0.0
    %1658 = vmatprep.subr.mxu0 0.0
    %1659 = vmatpush1.msra.mxu0 0.0
    %1660 = vmatprep.subr.mxu0 0.0
    %1661 = vmatpush1.msra.mxu0 0.0
    %1662 = vmatprep.subr.mxu0 0.0
    %1663 = vmatpush1.msra.mxu0 0.0
    %1664 = vmatprep.subr.mxu0 0.0
    %1665 = vmatpush1.msra.mxu0 0.0
    %1666 = vmatprep.subr.mxu0 0.0
    %1667 = vmatpush1.msra.mxu0 %v1629
    %1668 = vmatprep.subr.mxu0 0.0
    %1669 = vmatpush1.msra.mxu0 %v1627
    %1670 = vmatprep.subr.mxu0 0.0
    %1671 = vmatpush2.msra.mxu0 0.0
    %1672 = vmatprep.subr.mxu0 0.0
    %1673 = vmatpush2.msra.mxu0 0.0
    %1674 = vmatprep.subr.mxu0 0.0
    %1675 = vmatpush2.msra.mxu0 0.0
    %1676 = vmatprep.subr.mxu0 0.0
    %1677 = vmatpush2.msra.mxu0 0.0
    %1678 = vmatprep.subr.mxu0 0.0
    %1679 = vmatpush2.msra.mxu0 0.0
    %1680 = vmatprep.subr.mxu0 0.0
    %1681 = vmatpush2.msra.mxu0 0.0
    %1682 = vmatprep.subr.mxu0 0.0
    %1683 = vmatpush2.msra.mxu0 0.0
    %1684 = vmatprep.subr.mxu0 0.0
    %1685 = vmatpush2.msra.mxu0 0.0
    %1686 = vmatprep.subr.mxu0 0.0
    %1687 = vmatpush2.msra.mxu0 0.0
    %1688 = vmatprep.subr.mxu0 0.0
    %1689 = vmatpush2.msra.mxu0 0.0
    %1690 = vmatprep.subr.mxu0 0.0
    %1691 = vmatpush2.msra.mxu0 0.0
    %1692 = vmatprep.subr.mxu0 0.0
    %1693 = vmatpush2.msra.mxu0 0.0
    %1694 = vmatprep.subr.mxu0 0.0
    %1695 = vmatpush2.msra.mxu0 0.0
    %1696 = vmatprep.subr.mxu0 0.0
    %1697 = vmatpush2.msra.mxu0 0.0
    %1698 = vmatprep.subr.mxu0 0.0
    %1699 = vmatpush2.msra.mxu0 0.0
    %1700 = vmatprep.subr.mxu0 0.0
    %1701 = vmatpush2.msra.mxu0 0.0
    %1702 = vmatprep.mubr.f32.mxu0 0.0
    %1703 = vmatmul.mubr.f32.gmra.mxu0 %v1633
    %v1704 = vpop.f32.mrf.mxu0
    %v1705 = vadd.f32 0.0, %v1704
    %v1706 = vpop.f32.mrf.mxu0
    %1707 = vmatprep.mubr.f32.mxu0 0.0
    %1708 = vmatmul.mubr.f32.gmra.mxu0 %v1636
    %v1709 = vpop.f32.mrf.mxu0
    %v1710 = vadd.f32 0.0, %v1709
    %v1711 = vpop.f32.mrf.mxu0
    %1712 = vdwg.mxu0
    %1713 = vrot.lane.b32.xlu0 %v263, 104
    %v1714 = vpop.permute.xlu0 %1713
    %1715 = vrot.lane.b32.xlu0 %v268, 104
    %v1716 = vpop.permute.xlu0 %1715
    %1717 = vrot.lane.b32.xlu0 %v263, 72
    %v1718 = vpop.permute.xlu0 %1717
    %1719 = vrot.lane.b32.xlu0 %v268, 72
    %v1720 = vpop.permute.xlu0 %1719
    %v1721 = vsel %vm277, %v1714, 0
    %v1723 = vsel %vm277, %v1716, 0
    %v1725 = vsel %vm277, %v1718, 0
    %v1727 = vsel %vm277, %v1720, 0
    %1729 = vmatprep.subr.mxu0 0.0
    %1730 = vmatpush1.xpose.msra.mxu0 0.0
    %1731 = vmatprep.subr.mxu0 0.0
    %1732 = vmatpush1.xpose.msra.mxu0 0.0
    %1733 = vmatprep.subr.mxu0 0.0
    %1734 = vmatpush1.xpose.msra.mxu0 0.0
    %1735 = vmatprep.subr.mxu0 0.0
    %1736 = vmatpush1.xpose.msra.mxu0 0.0
    %1737 = vmatprep.subr.mxu0 0.0
    %1738 = vmatpush1.xpose.msra.mxu0 0.0
    %1739 = vmatprep.subr.mxu0 0.0
    %1740 = vmatpush1.xpose.msra.mxu0 0.0
    %1741 = vmatprep.subr.mxu0 0.0
    %1742 = vmatpush1.xpose.msra.mxu0 0.0
    %1743 = vmatprep.subr.mxu0 0.0
    %1744 = vmatpush1.xpose.msra.mxu0 0.0
    %1745 = vmatprep.subr.mxu0 0.0
    %1746 = vmatpush1.xpose.msra.mxu0 0.0
    %1747 = vmatprep.subr.mxu0 0.0
    %1748 = vmatpush1.xpose.msra.mxu0 0.0
    %1749 = vmatprep.subr.mxu0 0.0
    %1750 = vmatpush1.xpose.msra.mxu0 0.0
    %1751 = vmatprep.subr.mxu0 0.0
    %1752 = vmatpush1.xpose.msra.mxu0 0.0
    %1753 = vmatprep.subr.mxu0 0.0
    %1754 = vmatpush1.xpose.msra.mxu0 0.0
    %1755 = vmatprep.subr.mxu0 0.0
    %1756 = vmatpush1.xpose.msra.mxu0 0.0
    %1757 = vmatprep.subr.mxu0 0.0
    %1758 = vmatpush1.xpose.msra.mxu0 %v1727
    %1759 = vmatprep.subr.mxu0 0.0
    %1760 = vmatpush1.xpose.msra.mxu0 %v1725
    %1761 = vmatprep.subr.mxu0 0.0
    %1762 = vmatpush2.xpose.msra.mxu0 0.0
    %1763 = vmatprep.subr.mxu0 0.0
    %1764 = vmatpush2.xpose.msra.mxu0 0.0
    %1765 = vmatprep.subr.mxu0 0.0
    %1766 = vmatpush2.xpose.msra.mxu0 0.0
    %1767 = vmatprep.subr.mxu0 0.0
    %1768 = vmatpush2.xpose.msra.mxu0 0.0
    %1769 = vmatprep.subr.mxu0 0.0
    %1770 = vmatpush2.xpose.msra.mxu0 0.0
    %1771 = vmatprep.subr.mxu0 0.0
    %1772 = vmatpush2.xpose.msra.mxu0 0.0
    %1773 = vmatprep.subr.mxu0 0.0
    %1774 = vmatpush2.xpose.msra.mxu0 0.0
    %1775 = vmatprep.subr.mxu0 0.0
    %1776 = vmatpush2.xpose.msra.mxu0 0.0
    %1777 = vmatprep.subr.mxu0 0.0
    %1778 = vmatpush2.xpose.msra.mxu0 0.0
    %1779 = vmatprep.subr.mxu0 0.0
    %1780 = vmatpush2.xpose.msra.mxu0 0.0
    %1781 = vmatprep.subr.mxu0 0.0
    %1782 = vmatpush2.xpose.msra.mxu0 0.0
    %1783 = vmatprep.subr.mxu0 0.0
    %1784 = vmatpush2.xpose.msra.mxu0 0.0
    %1785 = vmatprep.subr.mxu0 0.0
    %1786 = vmatpush2.xpose.msra.mxu0 0.0
    %1787 = vmatprep.subr.mxu0 0.0
    %1788 = vmatpush2.xpose.msra.mxu0 0.0
    %1789 = vmatprep.subr.mxu0 0.0
    %1790 = vmatpush2.xpose.msra.mxu0 0.0
    %1791 = vmatprep.subr.mxu0 0.0
    %1792 = vmatpush2.xpose.msra.mxu0 0.0
    %1793 = vmatprep.mubr.f32.mxu0 0.0
    %1794 = vmatmul.mubr.f32.gmra.mxu0 %v1721
    %v1795 = vpop.f32.mrf.mxu0
    %v1796 = vadd.f32 0.0, %v1795
    %v1797 = vpop.f32.mrf.mxu0
    %1798 = vmatprep.mubr.f32.mxu0 0.0
    %1799 = vmatmul.mubr.f32.gmra.mxu0 %v1723
    %v1800 = vpop.f32.mrf.mxu0
    %v1801 = vadd.f32 0.0, %v1800
    %v1802 = vpop.f32.mrf.mxu0
    %1803 = vdwg.mxu0
    %v1804 = vmul.f32 %v1796, 0.35355338
    %v1805 = vmul.f32 %v1801, 0.35355338
    %v1806 = vsel %vm71, %v1804, -inf
    %1807 = vmax.xlane.f32.xlu0 %v1806
    %v1808 = vpop.xlane.xlu0 %1807
    %v1809 = vsel %vm71, %v1805, -inf
    %1810 = vmax.xlane.f32.xlu0 %v1809
    %v1811 = vpop.xlane.xlu0 %1810
    %v1812 = vsub.f32 %v1804, %v1808
    %v1813 = vsub.f32 %v1805, %v1811
    %v1814 = vmul.f32 %v1812, 1.442695
    %v1815 = vpow.pop %v1814
    %v1816 = vmul.f32 %v1813, 1.442695
    %v1817 = vpow.pop %v1816
    %v1818 = vsel %vm71, %v1815, 0.0
    %1819 = vadd.xlane.f32.xlu0 %v1818
    %v1820 = vpop.xlane.xlu0 %1819
    %v1821 = vsel %vm71, %v1817, 0.0
    %1822 = vadd.xlane.f32.xlu0 %v1821
    %v1823 = vpop.xlane.xlu0 %1822
    %v1824 = vrcp.pop %v1820
    %v1825 = vmul.f32 %v1815, %v1824
    %v1826 = vrcp.pop %v1823
    %v1827 = vmul.f32 %v1817, %v1826
    %1828 = vrot.lane.b32.xlu0 %v263, 40
    %v1829 = vpop.permute.xlu0 %1828
    %1830 = vrot.lane.b32.xlu0 %v268, 40
    %v1831 = vpop.permute.xlu0 %1830
    %v1835 = vsel %vm71, %v1825, 0
    %v1838 = vsel %vm71, %v1827, 0
    %1840 = vmatprep.subr.mxu0 0.0
    %1841 = vmatpush1.msra.mxu0 0.0
    %1842 = vmatprep.subr.mxu0 0.0
    %1843 = vmatpush1.msra.mxu0 0.0
    %1844 = vmatprep.subr.mxu0 0.0
    %1845 = vmatpush1.msra.mxu0 0.0
    %1846 = vmatprep.subr.mxu0 0.0
    %1847 = vmatpush1.msra.mxu0 0.0
    %1848 = vmatprep.subr.mxu0 0.0
    %1849 = vmatpush1.msra.mxu0 0.0
    %1850 = vmatprep.subr.mxu0 0.0
    %1851 = vmatpush1.msra.mxu0 0.0
    %1852 = vmatprep.subr.mxu0 0.0
    %1853 = vmatpush1.msra.mxu0 0.0
    %1854 = vmatprep.subr.mxu0 0.0
    %1855 = vmatpush1.msra.mxu0 0.0
    %1856 = vmatprep.subr.mxu0 0.0
    %1857 = vmatpush1.msra.mxu0 0.0
    %1858 = vmatprep.subr.mxu0 0.0
    %1859 = vmatpush1.msra.mxu0 0.0
    %1860 = vmatprep.subr.mxu0 0.0
    %1861 = vmatpush1.msra.mxu0 0.0
    %1862 = vmatprep.subr.mxu0 0.0
    %1863 = vmatpush1.msra.mxu0 0.0
    %1864 = vmatprep.subr.mxu0 0.0
    %1865 = vmatpush1.msra.mxu0 0.0
    %1866 = vmatprep.subr.mxu0 0.0
    %1867 = vmatpush1.msra.mxu0 0.0
    %1868 = vmatprep.subr.mxu0 0.0
    %1869 = vmatpush1.msra.mxu0 %v1831
    %1870 = vmatprep.subr.mxu0 0.0
    %1871 = vmatpush1.msra.mxu0 %v1829
    %1872 = vmatprep.subr.mxu0 0.0
    %1873 = vmatpush2.msra.mxu0 0.0
    %1874 = vmatprep.subr.mxu0 0.0
    %1875 = vmatpush2.msra.mxu0 0.0
    %1876 = vmatprep.subr.mxu0 0.0
    %1877 = vmatpush2.msra.mxu0 0.0
    %1878 = vmatprep.subr.mxu0 0.0
    %1879 = vmatpush2.msra.mxu0 0.0
    %1880 = vmatprep.subr.mxu0 0.0
    %1881 = vmatpush2.msra.mxu0 0.0
    %1882 = vmatprep.subr.mxu0 0.0
    %1883 = vmatpush2.msra.mxu0 0.0
    %1884 = vmatprep.subr.mxu0 0.0
    %1885 = vmatpush2.msra.mxu0 0.0
    %1886 = vmatprep.subr.mxu0 0.0
    %1887 = vmatpush2.msra.mxu0 0.0
    %1888 = vmatprep.subr.mxu0 0.0
    %1889 = vmatpush2.msra.mxu0 0.0
    %1890 = vmatprep.subr.mxu0 0.0
    %1891 = vmatpush2.msra.mxu0 0.0
    %1892 = vmatprep.subr.mxu0 0.0
    %1893 = vmatpush2.msra.mxu0 0.0
    %1894 = vmatprep.subr.mxu0 0.0
    %1895 = vmatpush2.msra.mxu0 0.0
    %1896 = vmatprep.subr.mxu0 0.0
    %1897 = vmatpush2.msra.mxu0 0.0
    %1898 = vmatprep.subr.mxu0 0.0
    %1899 = vmatpush2.msra.mxu0 0.0
    %1900 = vmatprep.subr.mxu0 0.0
    %1901 = vmatpush2.msra.mxu0 0.0
    %1902 = vmatprep.subr.mxu0 0.0
    %1903 = vmatpush2.msra.mxu0 0.0
    %1904 = vmatprep.mubr.f32.mxu0 0.0
    %1905 = vmatmul.mubr.f32.gmra.mxu0 %v1835
    %v1906 = vpop.f32.mrf.mxu0
    %v1907 = vadd.f32 0.0, %v1906
    %v1908 = vpop.f32.mrf.mxu0
    %1909 = vmatprep.mubr.f32.mxu0 0.0
    %1910 = vmatmul.mubr.f32.gmra.mxu0 %v1838
    %v1911 = vpop.f32.mrf.mxu0
    %v1912 = vadd.f32 0.0, %v1911
    %v1913 = vpop.f32.mrf.mxu0
    %1914 = vdwg.mxu0
    %1917 = vrot.lane.b32.xlu0 %v1503, 8
    %v1918 = vpop.permute.xlu0 %1917
    %1919 = vrot.lane.b32.xlu0 %v1508, 8
    %v1920 = vpop.permute.xlu0 %1919
    %1925 = vrot.lane.b32.xlu0 %v1705, 16
    %v1926 = vpop.permute.xlu0 %1925
    %1927 = vrot.lane.b32.xlu0 %v1710, 16
    %v1928 = vpop.permute.xlu0 %1927
    %1933 = vrot.lane.b32.xlu0 %v1907, 24
    %v1934 = vpop.permute.xlu0 %1933
    %1935 = vrot.lane.b32.xlu0 %v1912, 24
    %v1936 = vpop.permute.xlu0 %1935
    %v1939 = vsel %vm277, %v1301, %v1918
    %v1940 = vsel %vm277, %v1306, %v1920
    %v1941 = vsel %vm71, %v1939, %v1926
    %v1942 = vsel %vm71, %v1940, %v1928
    %v1943 = vsel %vm1106, %v1941, %v1934
    %v1944 = vsel %vm1106, %v1942, %v1936
    %v1945 = vld [vmem:[%s6] sm:$0xff]
    %v1946 = vld [vmem:[%s6 + $0x8] sm:$0xff]
    %v1947 = vld [vmem:[%s6 + $0x10] sm:$0xff]
    %v1948 = vld [vmem:[%s6 + $0x18] sm:$0xff]
    %v1949 = vld [vmem:[%s7] sm:$0x1]
    %v1951 = vlaneseq
    %v1952 = vshrl.u32 %v1951, 7
    %v1953 = vsub.s32 0, %v1952
    %v1954 = vrot.slane %v1949, %v1953
    %v1957 = vsel %vm154, %v1107, 0
    %v1960 = vsel %vm154, %v1108, 0
    %v1963 = vsel %vm154, %v1943, 0
    %v1966 = vsel %vm154, %v1944, 0
    %1968 = vmatprep.subr.mxu0 0.0
    %1969 = vmatpush1.msra.mxu0 0.0
    %1970 = vmatprep.subr.mxu0 0.0
    %1971 = vmatpush1.msra.mxu0 0.0
    %1972 = vmatprep.subr.mxu0 0.0
    %1973 = vmatpush1.msra.mxu0 0.0
    %1974 = vmatprep.subr.mxu0 0.0
    %1975 = vmatpush1.msra.mxu0 0.0
    %1976 = vmatprep.subr.mxu0 0.0
    %1977 = vmatpush1.msra.mxu0 0.0
    %1978 = vmatprep.subr.mxu0 0.0
    %1979 = vmatpush1.msra.mxu0 0.0
    %1980 = vmatprep.subr.mxu0 0.0
    %1981 = vmatpush1.msra.mxu0 0.0
    %1982 = vmatprep.subr.mxu0 0.0
    %1983 = vmatpush1.msra.mxu0 0.0
    %1984 = vmatprep.subr.mxu0 0.0
    %1985 = vmatpush1.msra.mxu0 0.0
    %1986 = vmatprep.subr.mxu0 0.0
    %1987 = vmatpush1.msra.mxu0 0.0
    %1988 = vmatprep.subr.mxu0 0.0
    %1989 = vmatpush1.msra.mxu0 0.0
    %1990 = vmatprep.subr.mxu0 0.0
    %1991 = vmatpush1.msra.mxu0 0.0
    %1992 = vmatprep.subr.mxu0 0.0
    %1993 = vmatpush1.msra.mxu0 %v1948
    %1994 = vmatprep.subr.mxu0 0.0
    %1995 = vmatpush1.msra.mxu0 %v1947
    %1996 = vmatprep.subr.mxu0 0.0
    %1997 = vmatpush1.msra.mxu0 %v1946
    %1998 = vmatprep.subr.mxu0 0.0
    %1999 = vmatpush1.msra.mxu0 %v1945
    %2000 = vmatprep.subr.mxu0 0.0
    %2001 = vmatpush2.msra.mxu0 0.0
    %2002 = vmatprep.subr.mxu0 0.0
    %2003 = vmatpush2.msra.mxu0 0.0
    %2004 = vmatprep.subr.mxu0 0.0
    %2005 = vmatpush2.msra.mxu0 0.0
    %2006 = vmatprep.subr.mxu0 0.0
    %2007 = vmatpush2.msra.mxu0 0.0
    %2008 = vmatprep.subr.mxu0 0.0
    %2009 = vmatpush2.msra.mxu0 0.0
    %2010 = vmatprep.subr.mxu0 0.0
    %2011 = vmatpush2.msra.mxu0 0.0
    %2012 = vmatprep.subr.mxu0 0.0
    %2013 = vmatpush2.msra.mxu0 0.0
    %2014 = vmatprep.subr.mxu0 0.0
    %2015 = vmatpush2.msra.mxu0 0.0
    %2016 = vmatprep.subr.mxu0 0.0
    %2017 = vmatpush2.msra.mxu0 0.0
    %2018 = vmatprep.subr.mxu0 0.0
    %2019 = vmatpush2.msra.mxu0 0.0
    %2020 = vmatprep.subr.mxu0 0.0
    %2021 = vmatpush2.msra.mxu0 0.0
    %2022 = vmatprep.subr.mxu0 0.0
    %2023 = vmatpush2.msra.mxu0 0.0
    %2024 = vmatprep.subr.mxu0 0.0
    %2025 = vmatpush2.msra.mxu0 0.0
    %2026 = vmatprep.subr.mxu0 0.0
    %2027 = vmatpush2.msra.mxu0 0.0
    %2028 = vmatprep.subr.mxu0 0.0
    %2029 = vmatpush2.msra.mxu0 0.0
    %2030 = vmatprep.subr.mxu0 0.0
    %2031 = vmatpush2.msra.mxu0 0.0
    %2032 = vmatprep.mubr.f32.mxu0 0.0
    %2033 = vmatmul.mubr.f32.gmra.mxu0 %v1957
    %v2034 = vpop.f32.mrf.mxu0
    %v2035 = vadd.f32 %v1954, %v2034
    %v2036 = vpop.f32.mrf.mxu0
    %2037 = vmatprep.mubr.f32.mxu0 0.0
    %2038 = vmatmul.mubr.f32.gmra.mxu0 %v1960
    %v2039 = vpop.f32.mrf.mxu0
    %v2040 = vadd.f32 %v1954, %v2039
    %v2041 = vpop.f32.mrf.mxu0
    %2042 = vmatprep.mubr.f32.mxu0 0.0
    %2043 = vmatmul.mubr.f32.gmra.mxu0 %v1963
    %v2044 = vpop.f32.mrf.mxu0
    %v2045 = vadd.f32 %v1954, %v2044
    %v2046 = vpop.f32.mrf.mxu0
    %2047 = vmatprep.mubr.f32.mxu0 0.0
    %2048 = vmatmul.mubr.f32.gmra.mxu0 %v1966
    %v2049 = vpop.f32.mrf.mxu0
    %v2050 = vadd.f32 %v1954, %v2049
    %v2051 = vpop.f32.mrf.mxu0
    %2052 = vdwg.mxu0
    %v2053 = vadd.f32 %v159, %v2035
    %v2054 = vadd.f32 %v160, %v2040
    %v2055 = vadd.f32 %v161, %v2045
    %v2056 = vadd.f32 %v162, %v2050
    %v2057 = vld [vmem:[%s8] sm:$0x1]
    %v2058 = vld [vmem:[%s9] sm:$0x1]
    %v2059 = vsel %vm154, %v2053, 0.0
    %2060 = vadd.xlane.f32.xlu0 %v2059
    %v2061 = vpop.xlane.xlu0 %2060
    %v2062 = vsel %vm154, %v2054, 0.0
    %2063 = vadd.xlane.f32.xlu0 %v2062
    %v2064 = vpop.xlane.xlu0 %2063
    %v2065 = vsel %vm154, %v2055, 0.0
    %2066 = vadd.xlane.f32.xlu0 %v2065
    %v2067 = vpop.xlane.xlu0 %2066
    %v2068 = vsel %vm154, %v2056, 0.0
    %2069 = vadd.xlane.f32.xlu0 %v2068
    %v2070 = vpop.xlane.xlu0 %2069
    %v2071 = vrcp.pop 32.0
    %v2072 = vmul.f32 %v2061, %v2071
    %v2073 = vmul.f32 %v2064, %v2071
    %v2074 = vmul.f32 %v2067, %v2071
    %v2075 = vmul.f32 %v2070, %v2071
    %v2076 = vsub.f32 %v2053, %v2072
    %v2077 = vsub.f32 %v2054, %v2073
    %v2078 = vsub.f32 %v2055, %v2074
    %v2079 = vsub.f32 %v2056, %v2075
    %v2080 = vmul.f32 %v2076, %v2076
    %v2081 = vmul.f32 %v2077, %v2077
    %v2082 = vmul.f32 %v2078, %v2078
    %v2083 = vmul.f32 %v2079, %v2079
    %v2084 = vsel %vm154, %v2080, 0.0
    %2085 = vadd.xlane.f32.xlu0 %v2084
    %v2086 = vpop.xlane.xlu0 %2085
    %v2087 = vsel %vm154, %v2081, 0.0
    %2088 = vadd.xlane.f32.xlu0 %v2087
    %v2089 = vpop.xlane.xlu0 %2088
    %v2090 = vsel %vm154, %v2082, 0.0
    %2091 = vadd.xlane.f32.xlu0 %v2090
    %v2092 = vpop.xlane.xlu0 %2091
    %v2093 = vsel %vm154, %v2083, 0.0
    %2094 = vadd.xlane.f32.xlu0 %v2093
    %v2095 = vpop.xlane.xlu0 %2094
    %v2096 = vmul.f32 %v2086, %v2071
    %v2097 = vmul.f32 %v2089, %v2071
    %v2098 = vmul.f32 %v2092, %v2071
    %v2099 = vmul.f32 %v2095, %v2071
    %v2100 = vadd.f32 %v2096, 1e-05
    %v2101 = vadd.f32 %v2097, 1e-05
    %v2102 = vadd.f32 %v2098, 1e-05
    %v2103 = vadd.f32 %v2099, 1e-05
    %v2104 = vrsqrt.pop %v2100
    %v2105 = vrsqrt.pop %v2101
    %v2106 = vrsqrt.pop %v2102
    %v2107 = vrsqrt.pop %v2103
    %v2108 = vmul.f32 %v2076, %v2104
    %v2109 = vmul.f32 %v2077, %v2105
    %v2110 = vmul.f32 %v2078, %v2106
    %v2111 = vmul.f32 %v2079, %v2107
    %v2113 = vlaneseq
    %v2114 = vshrl.u32 %v2113, 7
    %v2115 = vsub.s32 0, %v2114
    %v2116 = vrot.slane %v2057, %v2115
    %v2118 = vmul.f32 %v2108, %v2116
    %v2119 = vmul.f32 %v2109, %v2116
    %v2120 = vmul.f32 %v2110, %v2116
    %v2121 = vmul.f32 %v2111, %v2116
    %v2123 = vlaneseq
    %v2124 = vshrl.u32 %v2123, 7
    %v2125 = vsub.s32 0, %v2124
    %v2126 = vrot.slane %v2058, %v2125
    %v2128 = vadd.f32 %v2118, %v2126
    %v2129 = vadd.f32 %v2119, %v2126
    %v2130 = vadd.f32 %v2120, %v2126
    %v2131 = vadd.f32 %v2121, %v2126
    %v2132 = vld [vmem:[%s10] sm:$0xff]
    %v2133 = vld [vmem:[%s10 + $0x8] sm:$0xff]
    %v2134 = vld [vmem:[%s10 + $0x10] sm:$0xff]
    %v2135 = vld [vmem:[%s10 + $0x18] sm:$0xff]
    %v2136 = vld [vmem:[%s11] sm:$0x1]
    %v2138 = vlaneseq
    %v2139 = vshrl.u32 %v2138, 7
    %v2140 = vsub.s32 0, %v2139
    %v2141 = vrot.slane %v2136, %v2140
    %v2144 = vsel %vm154, %v2128, 0
    %v2147 = vsel %vm154, %v2129, 0
    %v2150 = vsel %vm154, %v2130, 0
    %v2153 = vsel %vm154, %v2131, 0
    %2155 = vmatprep.subr.mxu0 0.0
    %2156 = vmatpush1.msra.mxu0 0.0
    %2157 = vmatprep.subr.mxu0 0.0
    %2158 = vmatpush1.msra.mxu0 0.0
    %2159 = vmatprep.subr.mxu0 0.0
    %2160 = vmatpush1.msra.mxu0 0.0
    %2161 = vmatprep.subr.mxu0 0.0
    %2162 = vmatpush1.msra.mxu0 0.0
    %2163 = vmatprep.subr.mxu0 0.0
    %2164 = vmatpush1.msra.mxu0 0.0
    %2165 = vmatprep.subr.mxu0 0.0
    %2166 = vmatpush1.msra.mxu0 0.0
    %2167 = vmatprep.subr.mxu0 0.0
    %2168 = vmatpush1.msra.mxu0 0.0
    %2169 = vmatprep.subr.mxu0 0.0
    %2170 = vmatpush1.msra.mxu0 0.0
    %2171 = vmatprep.subr.mxu0 0.0
    %2172 = vmatpush1.msra.mxu0 0.0
    %2173 = vmatprep.subr.mxu0 0.0
    %2174 = vmatpush1.msra.mxu0 0.0
    %2175 = vmatprep.subr.mxu0 0.0
    %2176 = vmatpush1.msra.mxu0 0.0
    %2177 = vmatprep.subr.mxu0 0.0
    %2178 = vmatpush1.msra.mxu0 0.0
    %2179 = vmatprep.subr.mxu0 0.0
    %2180 = vmatpush1.msra.mxu0 %v2135
    %2181 = vmatprep.subr.mxu0 0.0
    %2182 = vmatpush1.msra.mxu0 %v2134
    %2183 = vmatprep.subr.mxu0 0.0
    %2184 = vmatpush1.msra.mxu0 %v2133
    %2185 = vmatprep.subr.mxu0 0.0
    %2186 = vmatpush1.msra.mxu0 %v2132
    %2187 = vmatprep.subr.mxu0 0.0
    %2188 = vmatpush2.msra.mxu0 0.0
    %2189 = vmatprep.subr.mxu0 0.0
    %2190 = vmatpush2.msra.mxu0 0.0
    %2191 = vmatprep.subr.mxu0 0.0
    %2192 = vmatpush2.msra.mxu0 0.0
    %2193 = vmatprep.subr.mxu0 0.0
    %2194 = vmatpush2.msra.mxu0 0.0
    %2195 = vmatprep.subr.mxu0 0.0
    %2196 = vmatpush2.msra.mxu0 0.0
    %2197 = vmatprep.subr.mxu0 0.0
    %2198 = vmatpush2.msra.mxu0 0.0
    %2199 = vmatprep.subr.mxu0 0.0
    %2200 = vmatpush2.msra.mxu0 0.0
    %2201 = vmatprep.subr.mxu0 0.0
    %2202 = vmatpush2.msra.mxu0 0.0
    %2203 = vmatprep.subr.mxu0 0.0
    %2204 = vmatpush2.msra.mxu0 0.0
    %2205 = vmatprep.subr.mxu0 0.0
    %2206 = vmatpush2.msra.mxu0 0.0
    %2207 = vmatprep.subr.mxu0 0.0
    %2208 = vmatpush2.msra.mxu0 0.0
    %2209 = vmatprep.subr.mxu0 0.0
    %2210 = vmatpush2.msra.mxu0 0.0
    %2211 = vmatprep.subr.mxu0 0.0
    %2212 = vmatpush2.msra.mxu0 0.0
    %2213 = vmatprep.subr.mxu0 0.0
    %2214 = vmatpush2.msra.mxu0 0.0
    %2215 = vmatprep.subr.mxu0 0.0
    %2216 = vmatpush2.msra.mxu0 0.0
    %2217 = vmatprep.subr.mxu0 0.0
    %2218 = vmatpush2.msra.mxu0 0.0
    %2219 = vmatprep.mubr.f32.mxu0 0.0
    %2220 = vmatmul.mubr.f32.gmra.mxu0 %v2144
    %v2221 = vpop.f32.mrf.mxu0
    %v2222 = vadd.f32 %v2141, %v2221
    %v2223 = vpop.f32.mrf.mxu0
    %2224 = vmatprep.mubr.f32.mxu0 0.0
    %2225 = vmatmul.mubr.f32.gmra.mxu0 %v2147
    %v2226 = vpop.f32.mrf.mxu0
    %v2227 = vadd.f32 %v2141, %v2226
    %v2228 = vpop.f32.mrf.mxu0
    %2229 = vmatprep.mubr.f32.mxu0 0.0
    %2230 = vmatmul.mubr.f32.gmra.mxu0 %v2150
    %v2231 = vpop.f32.mrf.mxu0
    %v2232 = vadd.f32 %v2141, %v2231
    %v2233 = vpop.f32.mrf.mxu0
    %2234 = vmatprep.mubr.f32.mxu0 0.0
    %2235 = vmatmul.mubr.f32.gmra.mxu0 %v2153
    %v2236 = vpop.f32.mrf.mxu0
    %v2237 = vadd.f32 %v2141, %v2236
    %v2238 = vpop.f32.mrf.mxu0
    %2239 = vdwg.mxu0
    %v2240 = vmax.f32 %v2222, 0.0
    %v2241 = vmax.f32 %v2227, 0.0
    %v2242 = vmax.f32 %v2232, 0.0
    %v2243 = vmax.f32 %v2237, 0.0
    %v2244 = vld [vmem:[%s12] sm:$0xff]
    %v2245 = vld [vmem:[%s12 + $0x8] sm:$0xff]
    %v2246 = vld [vmem:[%s12 + $0x10] sm:$0xff]
    %v2247 = vld [vmem:[%s12 + $0x18] sm:$0xff]
    %v2248 = vld [vmem:[%s12 + $0x20] sm:$0xff]
    %v2249 = vld [vmem:[%s12 + $0x28] sm:$0xff]
    %v2250 = vld [vmem:[%s12 + $0x30] sm:$0xff]
    %v2251 = vld [vmem:[%s12 + $0x38] sm:$0xff]
    %v2252 = vld [vmem:[%s12 + $0x40] sm:$0xff]
    %v2253 = vld [vmem:[%s12 + $0x48] sm:$0xff]
    %v2254 = vld [vmem:[%s12 + $0x50] sm:$0xff]
    %v2255 = vld [vmem:[%s12 + $0x58] sm:$0xff]
    %v2256 = vld [vmem:[%s12 + $0x60] sm:$0xff]
    %v2257 = vld [vmem:[%s12 + $0x68] sm:$0xff]
    %v2258 = vld [vmem:[%s12 + $0x70] sm:$0xff]
    %v2259 = vld [vmem:[%s12 + $0x78] sm:$0xff]
    %v2260 = vld [vmem:[%s13] sm:$0x1]
    %v2262 = vlaneseq
    %v2263 = vshrl.u32 %v2262, 7
    %v2264 = vsub.s32 0, %v2263
    %v2265 = vrot.slane %v2260, %v2264
    %2267 = vmatprep.subr.mxu0 0.0
    %2268 = vmatpush1.msra.mxu0 %v2259
    %2269 = vmatprep.subr.mxu0 0.0
    %2270 = vmatpush1.msra.mxu0 %v2258
    %2271 = vmatprep.subr.mxu0 0.0
    %2272 = vmatpush1.msra.mxu0 %v2257
    %2273 = vmatprep.subr.mxu0 0.0
    %2274 = vmatpush1.msra.mxu0 %v2256
    %2275 = vmatprep.subr.mxu0 0.0
    %2276 = vmatpush1.msra.mxu0 %v2255
    %2277 = vmatprep.subr.mxu0 0.0
    %2278 = vmatpush1.msra.mxu0 %v2254
    %2279 = vmatprep.subr.mxu0 0.0
    %2280 = vmatpush1.msra.mxu0 %v2253
    %2281 = vmatprep.subr.mxu0 0.0
    %2282 = vmatpush1.msra.mxu0 %v2252
    %2283 = vmatprep.subr.mxu0 0.0
    %2284 = vmatpush1.msra.mxu0 %v2251
    %2285 = vmatprep.subr.mxu0 0.0
    %2286 = vmatpush1.msra.mxu0 %v2250
    %2287 = vmatprep.subr.mxu0 0.0
    %2288 = vmatpush1.msra.mxu0 %v2249
    %2289 = vmatprep.subr.mxu0 0.0
    %2290 = vmatpush1.msra.mxu0 %v2248
    %2291 = vmatprep.subr.mxu0 0.0
    %2292 = vmatpush1.msra.mxu0 %v2247
    %2293 = vmatprep.subr.mxu0 0.0
    %2294 = vmatpush1.msra.mxu0 %v2246
    %2295 = vmatprep.subr.mxu0 0.0
    %2296 = vmatpush1.msra.mxu0 %v2245
    %2297 = vmatprep.subr.mxu0 0.0
    %2298 = vmatpush1.msra.mxu0 %v2244
    %2299 = vmatprep.subr.mxu0 0.0
    %2300 = vmatpush2.msra.mxu0 0.0
    %2301 = vmatprep.subr.mxu0 0.0
    %2302 = vmatpush2.msra.mxu0 0.0
    %2303 = vmatprep.subr.mxu0 0.0
    %2304 = vmatpush2.msra.mxu0 0.0
    %2305 = vmatprep.subr.mxu0 0.0
    %2306 = vmatpush2.msra.mxu0 0.0
    %2307 = vmatprep.subr.mxu0 0.0
    %2308 = vmatpush2.msra.mxu0 0.0
    %2309 = vmatprep.subr.mxu0 0.0
    %2310 = vmatpush2.msra.mxu0 0.0
    %2311 = vmatprep.subr.mxu0 0.0
    %2312 = vmatpush2.msra.mxu0 0.0
    %2313 = vmatprep.subr.mxu0 0.0
    %2314 = vmatpush2.msra.mxu0 0.0
    %2315 = vmatprep.subr.mxu0 0.0
    %2316 = vmatpush2.msra.mxu0 0.0
    %2317 = vmatprep.subr.mxu0 0.0
    %2318 = vmatpush2.msra.mxu0 0.0
    %2319 = vmatprep.subr.mxu0 0.0
    %2320 = vmatpush2.msra.mxu0 0.0
    %2321 = vmatprep.subr.mxu0 0.0
    %2322 = vmatpush2.msra.mxu0 0.0
    %2323 = vmatprep.subr.mxu0 0.0
    %2324 = vmatpush2.msra.mxu0 0.0
    %2325 = vmatprep.subr.mxu0 0.0
    %2326 = vmatpush2.msra.mxu0 0.0
    %2327 = vmatprep.subr.mxu0 0.0
    %2328 = vmatpush2.msra.mxu0 0.0
    %2329 = vmatprep.subr.mxu0 0.0
    %2330 = vmatpush2.msra.mxu0 0.0
    %2331 = vmatprep.mubr.f32.mxu0 0.0
    %2332 = vmatmul.mubr.f32.gmra.mxu0 %v2240
    %v2333 = vpop.f32.mrf.mxu0
    %v2334 = vadd.f32 %v2265, %v2333
    %v2335 = vpop.f32.mrf.mxu0
    %2336 = vmatprep.mubr.f32.mxu0 0.0
    %2337 = vmatmul.mubr.f32.gmra.mxu0 %v2241
    %v2338 = vpop.f32.mrf.mxu0
    %v2339 = vadd.f32 %v2265, %v2338
    %v2340 = vpop.f32.mrf.mxu0
    %2341 = vmatprep.mubr.f32.mxu0 0.0
    %2342 = vmatmul.mubr.f32.gmra.mxu0 %v2242
    %v2343 = vpop.f32.mrf.mxu0
    %v2344 = vadd.f32 %v2265, %v2343
    %v2345 = vpop.f32.mrf.mxu0
    %2346 = vmatprep.mubr.f32.mxu0 0.0
    %2347 = vmatmul.mubr.f32.gmra.mxu0 %v2243
    %v2348 = vpop.f32.mrf.mxu0
    %v2349 = vadd.f32 %v2265, %v2348
    %v2350 = vpop.f32.mrf.mxu0
    %2351 = vdwg.mxu0
    %v2352 = vadd.f32 %v2128, %v2334
    %v2353 = vadd.f32 %v2129, %v2339
    %v2354 = vadd.f32 %v2130, %v2344
    %v2355 = vadd.f32 %v2131, %v2349
    %v2356 = vld [vmem:[%s14] sm:$0x1]
    %v2357 = vld [vmem:[%s15] sm:$0x1]
    %v2358 = vsel %vm154, %v2352, 0.0
    %2359 = vadd.xlane.f32.xlu0 %v2358
    %v2360 = vpop.xlane.xlu0 %2359
    %v2361 = vsel %vm154, %v2353, 0.0
    %2362 = vadd.xlane.f32.xlu0 %v2361
    %v2363 = vpop.xlane.xlu0 %2362
    %v2364 = vsel %vm154, %v2354, 0.0
    %2365 = vadd.xlane.f32.xlu0 %v2364
    %v2366 = vpop.xlane.xlu0 %2365
    %v2367 = vsel %vm154, %v2355, 0.0
    %2368 = vadd.xlane.f32.xlu0 %v2367
    %v2369 = vpop.xlane.xlu0 %2368
    %v2370 = vmul.f32 %v2360, %v2071
    %v2371 = vmul.f32 %v2363, %v2071
    %v2372 = vmul.f32 %v2366, %v2071
    %v2373 = vmul.f32 %v2369, %v2071
    %v2374 = vsub.f32 %v2352, %v2370
    %v2375 = vsub.f32 %v2353, %v2371
    %v2376 = vsub.f32 %v2354, %v2372
    %v2377 = vsub.f32 %v2355, %v2373
    %v2378 = vmul.f32 %v2374, %v2374
    %v2379 = vmul.f32 %v2375, %v2375
    %v2380 = vmul.f32 %v2376, %v2376
    %v2381 = vmul.f32 %v2377, %v2377
    %v2382 = vsel %vm154, %v2378, 0.0
    %2383 = vadd.xlane.f32.xlu0 %v2382
    %v2384 = vpop.xlane.xlu0 %2383
    %v2385 = vsel %vm154, %v2379, 0.0
    %2386 = vadd.xlane.f32.xlu0 %v2385
    %v2387 = vpop.xlane.xlu0 %2386
    %v2388 = vsel %vm154, %v2380, 0.0
    %2389 = vadd.xlane.f32.xlu0 %v2388
    %v2390 = vpop.xlane.xlu0 %2389
    %v2391 = vsel %vm154, %v2381, 0.0
    %2392 = vadd.xlane.f32.xlu0 %v2391
    %v2393 = vpop.xlane.xlu0 %2392
    %v2394 = vmul.f32 %v2384, %v2071
    %v2395 = vmul.f32 %v2387, %v2071
    %v2396 = vmul.f32 %v2390, %v2071
    %v2397 = vmul.f32 %v2393, %v2071
    %v2398 = vadd.f32 %v2394, 1e-05
    %v2399 = vadd.f32 %v2395, 1e-05
    %v2400 = vadd.f32 %v2396, 1e-05
    %v2401 = vadd.f32 %v2397, 1e-05
    %v2402 = vrsqrt.pop %v2398
    %v2403 = vrsqrt.pop %v2399
    %v2404 = vrsqrt.pop %v2400
    %v2405 = vrsqrt.pop %v2401
    %v2406 = vmul.f32 %v2374, %v2402
    %v2407 = vmul.f32 %v2375, %v2403
    %v2408 = vmul.f32 %v2376, %v2404
    %v2409 = vmul.f32 %v2377, %v2405
    %v2411 = vlaneseq
    %v2412 = vshrl.u32 %v2411, 7
    %v2413 = vsub.s32 0, %v2412
    %v2414 = vrot.slane %v2356, %v2413
    %v2416 = vmul.f32 %v2406, %v2414
    %v2417 = vmul.f32 %v2407, %v2414
    %v2418 = vmul.f32 %v2408, %v2414
    %v2419 = vmul.f32 %v2409, %v2414
    %v2421 = vlaneseq
    %v2422 = vshrl.u32 %v2421, 7
    %v2423 = vsub.s32 0, %v2422
    %v2424 = vrot.slane %v2357, %v2423
    %v2426 = vadd.f32 %v2416, %v2424
    %v2427 = vadd.f32 %v2417, %v2424
    %v2428 = vadd.f32 %v2418, %v2424
    %v2429 = vadd.f32 %v2419, %v2424
    %s2430 = scalar_lea.vmem %s4, 32
    %v2431 = vld [vmem:[%s2430] sm:$0xff]
    %v2432 = vld [vmem:[%s2430 + $0x8] sm:$0xff]
    %v2433 = vld [vmem:[%s2430 + $0x10] sm:$0xff]
    %v2434 = vld [vmem:[%s2430 + $0x18] sm:$0xff]
    %s2435 = scalar_lea.vmem %s5, 1
    %v2436 = vld [vmem:[%s2435] sm:$0x1]
    %v2438 = vlaneseq
    %v2439 = vshrl.u32 %v2438, 7
    %v2440 = vsub.s32 0, %v2439
    %v2441 = vrot.slane %v2436, %v2440
    %v2444 = vsel %vm154, %v2426, 0
    %v2447 = vsel %vm154, %v2427, 0
    %v2450 = vsel %vm154, %v2428, 0
    %v2453 = vsel %vm154, %v2429, 0
    %2455 = vmatprep.subr.mxu0 0.0
    %2456 = vmatpush1.msra.mxu0 0.0
    %2457 = vmatprep.subr.mxu0 0.0
    %2458 = vmatpush1.msra.mxu0 0.0
    %2459 = vmatprep.subr.mxu0 0.0
    %2460 = vmatpush1.msra.mxu0 0.0
    %2461 = vmatprep.subr.mxu0 0.0
    %2462 = vmatpush1.msra.mxu0 0.0
    %2463 = vmatprep.subr.mxu0 0.0
    %2464 = vmatpush1.msra.mxu0 0.0
    %2465 = vmatprep.subr.mxu0 0.0
    %2466 = vmatpush1.msra.mxu0 0.0
    %2467 = vmatprep.subr.mxu0 0.0
    %2468 = vmatpush1.msra.mxu0 0.0
    %2469 = vmatprep.subr.mxu0 0.0
    %2470 = vmatpush1.msra.mxu0 0.0
    %2471 = vmatprep.subr.mxu0 0.0
    %2472 = vmatpush1.msra.mxu0 0.0
    %2473 = vmatprep.subr.mxu0 0.0
    %2474 = vmatpush1.msra.mxu0 0.0
    %2475 = vmatprep.subr.mxu0 0.0
    %2476 = vmatpush1.msra.mxu0 0.0
    %2477 = vmatprep.subr.mxu0 0.0
    %2478 = vmatpush1.msra.mxu0 0.0
    %2479 = vmatprep.subr.mxu0 0.0
    %2480 = vmatpush1.msra.mxu0 %v2434
    %2481 = vmatprep.subr.mxu0 0.0
    %2482 = vmatpush1.msra.mxu0 %v2433
    %2483 = vmatprep.subr.mxu0 0.0
    %2484 = vmatpush1.msra.mxu0 %v2432
    %2485 = vmatprep.subr.mxu0 0.0
    %2486 = vmatpush1.msra.mxu0 %v2431
    %2487 = vmatprep.subr.mxu0 0.0
    %2488 = vmatpush2.msra.mxu0 0.0
    %2489 = vmatprep.subr.mxu0 0.0
    %2490 = vmatpush2.msra.mxu0 0.0
    %2491 = vmatprep.subr.mxu0 0.0
    %2492 = vmatpush2.msra.mxu0 0.0
    %2493 = vmatprep.subr.mxu0 0.0
    %2494 = vmatpush2.msra.mxu0 0.0
    %2495 = vmatprep.subr.mxu0 0.0
    %2496 = vmatpush2.msra.mxu0 0.0
    %2497 = vmatprep.subr.mxu0 0.0
    %2498 = vmatpush2.msra.mxu0 0.0
    %2499 = vmatprep.subr.mxu0 0.0
    %2500 = vmatpush2.msra.mxu0 0.0
    %2501 = vmatprep.subr.mxu0 0.0
    %2502 = vmatpush2.msra.mxu0 0.0
    %2503 = vmatprep.subr.mxu0 0.0
    %2504 = vmatpush2.msra.mxu0 0.0
    %2505 = vmatprep.subr.mxu0 0.0
    %2506 = vmatpush2.msra.mxu0 0.0
    %2507 = vmatprep.subr.mxu0 0.0
    %2508 = vmatpush2.msra.mxu0 0.0
    %2509 = vmatprep.subr.mxu0 0.0
    %2510 = vmatpush2.msra.mxu0 0.0
    %2511 = vmatprep.subr.mxu0 0.0
    %2512 = vmatpush2.msra.mxu0 0.0
    %2513 = vmatprep.subr.mxu0 0.0
    %2514 = vmatpush2.msra.mxu0 0.0
    %2515 = vmatprep.subr.mxu0 0.0
    %2516 = vmatpush2.msra.mxu0 0.0
    %2517 = vmatprep.subr.mxu0 0.0
    %2518 = vmatpush2.msra.mxu0 0.0
    %2519 = vmatprep.mubr.f32.mxu0 0.0
    %2520 = vmatmul.mubr.f32.gmra.mxu0 %v2444
    %v2521 = vpop.f32.mrf.mxu0
    %v2522 = vadd.f32 %v2441, %v2521
    %v2523 = vpop.f32.mrf.mxu0
    %2524 = vmatprep.mubr.f32.mxu0 0.0
    %2525 = vmatmul.mubr.f32.gmra.mxu0 %v2447
    %v2526 = vpop.f32.mrf.mxu0
    %v2527 = vadd.f32 %v2441, %v2526
    %v2528 = vpop.f32.mrf.mxu0
    %2529 = vmatprep.mubr.f32.mxu0 0.0
    %2530 = vmatmul.mubr.f32.gmra.mxu0 %v2450
    %v2531 = vpop.f32.mrf.mxu0
    %v2532 = vadd.f32 %v2441, %v2531
    %v2533 = vpop.f32.mrf.mxu0
    %2534 = vmatprep.mubr.f32.mxu0 0.0
    %2535 = vmatmul.mubr.f32.gmra.mxu0 %v2453
    %v2536 = vpop.f32.mrf.mxu0
    %v2537 = vadd.f32 %v2441, %v2536
    %v2538 = vpop.f32.mrf.mxu0
    %2539 = vdwg.mxu0
    %2542 = vrot.lane.b32.xlu0 %v2522, 96
    %v2543 = vpop.permute.xlu0 %2542
    %2544 = vrot.lane.b32.xlu0 %v2527, 96
    %v2545 = vpop.permute.xlu0 %2544
    %v2546 = vsel %vm277, %v2522, 0
    %v2548 = vsel %vm277, %v2527, 0
    %v2550 = vsel %vm277, %v2543, 0
    %v2552 = vsel %vm277, %v2545, 0
    %2554 = vmatprep.subr.mxu0 0.0
    %2555 = vmatpush1.xpose.msra.mxu0 0.0
    %2556 = vmatprep.subr.mxu0 0.0
    %2557 = vmatpush1.xpose.msra.mxu0 0.0
    %2558 = vmatprep.subr.mxu0 0.0
    %2559 = vmatpush1.xpose.msra.mxu0 0.0
    %2560 = vmatprep.subr.mxu0 0.0
    %2561 = vmatpush1.xpose.msra.mxu0 0.0
    %2562 = vmatprep.subr.mxu0 0.0
    %2563 = vmatpush1.xpose.msra.mxu0 0.0
    %2564 = vmatprep.subr.mxu0 0.0
    %2565 = vmatpush1.xpose.msra.mxu0 0.0
    %2566 = vmatprep.subr.mxu0 0.0
    %2567 = vmatpush1.xpose.msra.mxu0 0.0
    %2568 = vmatprep.subr.mxu0 0.0
    %2569 = vmatpush1.xpose.msra.mxu0 0.0
    %2570 = vmatprep.subr.mxu0 0.0
    %2571 = vmatpush1.xpose.msra.mxu0 0.0
    %2572 = vmatprep.subr.mxu0 0.0
    %2573 = vmatpush1.xpose.msra.mxu0 0.0
    %2574 = vmatprep.subr.mxu0 0.0
    %2575 = vmatpush1.xpose.msra.mxu0 0.0
    %2576 = vmatprep.subr.mxu0 0.0
    %2577 = vmatpush1.xpose.msra.mxu0 0.0
    %2578 = vmatprep.subr.mxu0 0.0
    %2579 = vmatpush1.xpose.msra.mxu0 0.0
    %2580 = vmatprep.subr.mxu0 0.0
    %2581 = vmatpush1.xpose.msra.mxu0 0.0
    %2582 = vmatprep.subr.mxu0 0.0
    %2583 = vmatpush1.xpose.msra.mxu0 %v2552
    %2584 = vmatprep.subr.mxu0 0.0
    %2585 = vmatpush1.xpose.msra.mxu0 %v2550
    %2586 = vmatprep.subr.mxu0 0.0
    %2587 = vmatpush2.xpose.msra.mxu0 0.0
    %2588 = vmatprep.subr.mxu0 0.0
    %2589 = vmatpush2.xpose.msra.mxu0 0.0
    %2590 = vmatprep.subr.mxu0 0.0
    %2591 = vmatpush2.xpose.msra.mxu0 0.0
    %2592 = vmatprep.subr.mxu0 0.0
    %2593 = vmatpush2.xpose.msra.mxu0 0.0
    %2594 = vmatprep.subr.mxu0 0.0
    %2595 = vmatpush2.xpose.msra.mxu0 0.0
    %2596 = vmatprep.subr.mxu0 0.0
    %2597 = vmatpush2.xpose.msra.mxu0 0.0
    %2598 = vmatprep.subr.mxu0 0.0
    %2599 = vmatpush2.xpose.msra.mxu0 0.0
    %2600 = vmatprep.subr.mxu0 0.0
    %2601 = vmatpush2.xpose.msra.mxu0 0.0
    %2602 = vmatprep.subr.mxu0 0.0
    %2603 = vmatpush2.xpose.msra.mxu0 0.0
    %2604 = vmatprep.subr.mxu0 0.0
    %2605 = vmatpush2.xpose.msra.mxu0 0.0
    %2606 = vmatprep.subr.mxu0 0.0
    %2607 = vmatpush2.xpose.msra.mxu0 0.0
    %2608 = vmatprep.subr.mxu0 0.0
    %2609 = vmatpush2.xpose.msra.mxu0 0.0
    %2610 = vmatprep.subr.mxu0 0.0
    %2611 = vmatpush2.xpose.msra.mxu0 0.0
    %2612 = vmatprep.subr.mxu0 0.0
    %2613 = vmatpush2.xpose.msra.mxu0 0.0
    %2614 = vmatprep.subr.mxu0 0.0
    %2615 = vmatpush2.xpose.msra.mxu0 0.0
    %2616 = vmatprep.subr.mxu0 0.0
    %2617 = vmatpush2.xpose.msra.mxu0 0.0
    %2618 = vmatprep.mubr.f32.mxu0 0.0
    %2619 = vmatmul.mubr.f32.gmra.mxu0 %v2546
    %v2620 = vpop.f32.mrf.mxu0
    %v2621 = vadd.f32 0.0, %v2620
    %v2622 = vpop.f32.mrf.mxu0
    %2623 = vmatprep.mubr.f32.mxu0 0.0
    %2624 = vmatmul.mubr.f32.gmra.mxu0 %v2548
    %v2625 = vpop.f32.mrf.mxu0
    %v2626 = vadd.f32 0.0, %v2625
    %v2627 = vpop.f32.mrf.mxu0
    %2628 = vdwg.mxu0
    %v2629 = vmul.f32 %v2621, 0.35355338
    %v2630 = vmul.f32 %v2626, 0.35355338
    %v2631 = vsel %vm71, %v2629, -inf
    %2632 = vmax.xlane.f32.xlu0 %v2631
    %v2633 = vpop.xlane.xlu0 %2632
    %v2634 = vsel %vm71, %v2630, -inf
    %2635 = vmax.xlane.f32.xlu0 %v2634
    %v2636 = vpop.xlane.xlu0 %2635
    %v2637 = vsub.f32 %v2629, %v2633
    %v2638 = vsub.f32 %v2630, %v2636
    %v2639 = vmul.f32 %v2637, 1.442695
    %v2640 = vpow.pop %v2639
    %v2641 = vmul.f32 %v2638, 1.442695
    %v2642 = vpow.pop %v2641
    %v2643 = vsel %vm71, %v2640, 0.0
    %2644 = vadd.xlane.f32.xlu0 %v2643
    %v2645 = vpop.xlane.xlu0 %2644
    %v2646 = vsel %vm71, %v2642, 0.0
    %2647 = vadd.xlane.f32.xlu0 %v2646
    %v2648 = vpop.xlane.xlu0 %2647
    %v2649 = vrcp.pop %v2645
    %v2650 = vmul.f32 %v2640, %v2649
    %v2651 = vrcp.pop %v2648
    %v2652 = vmul.f32 %v2642, %v2651
    %2653 = vrot.lane.b32.xlu0 %v2522, 64
    %v2654 = vpop.permute.xlu0 %2653
    %2655 = vrot.lane.b32.xlu0 %v2527, 64
    %v2656 = vpop.permute.xlu0 %2655
    %v2660 = vsel %vm71, %v2650, 0
    %v2663 = vsel %vm71, %v2652, 0
    %2665 = vmatprep.subr.mxu0 0.0
    %2666 = vmatpush1.msra.mxu0 0.0
    %2667 = vmatprep.subr.mxu0 0.0
    %2668 = vmatpush1.msra.mxu0 0.0
    %2669 = vmatprep.subr.mxu0 0.0
    %2670 = vmatpush1.msra.mxu0 0.0
    %2671 = vmatprep.subr.mxu0 0.0
    %2672 = vmatpush1.msra.mxu0 0.0
    %2673 = vmatprep.subr.mxu0 0.0
    %2674 = vmatpush1.msra.mxu0 0.0
    %2675 = vmatprep.subr.mxu0 0.0
    %2676 = vmatpush1.msra.mxu0 0.0
    %2677 = vmatprep.subr.mxu0 0.0
    %2678 = vmatpush1.msra.mxu0 0.0
    %2679 = vmatprep.subr.mxu0 0.0
    %2680 = vmatpush1.msra.mxu0 0.0
    %2681 = vmatprep.subr.mxu0 0.0
    %2682 = vmatpush1.msra.mxu0 0.0
    %2683 = vmatprep.subr.mxu0 0.0
    %2684 = vmatpush1.msra.mxu0 0.0
    %2685 = vmatprep.subr.mxu0 0.0
    %2686 = vmatpush1.msra.mxu0 0.0
    %2687 = vmatprep.subr.mxu0 0.0
    %2688 = vmatpush1.msra.mxu0 0.0
    %2689 = vmatprep.subr.mxu0 0.0
    %2690 = vmatpush1.msra.mxu0 0.0
    %2691 = vmatprep.subr.mxu0 0.0
    %2692 = vmatpush1.msra.mxu0 0.0
    %2693 = vmatprep.subr.mxu0 0.0
    %2694 = vmatpush1.msra.mxu0 %v2656
    %2695 = vmatprep.subr.mxu0 0.0
    %2696 = vmatpush1.msra.mxu0 %v2654
    %2697 = vmatprep.subr.mxu0 0.0
    %2698 = vmatpush2.msra.mxu0 0.0
    %2699 = vmatprep.subr.mxu0 0.0
    %2700 = vmatpush2.msra.mxu0 0.0
    %2701 = vmatprep.subr.mxu0 0.0
    %2702 = vmatpush2.msra.mxu0 0.0
    %2703 = vmatprep.subr.mxu0 0.0
    %2704 = vmatpush2.msra.mxu0 0.0
    %2705 = vmatprep.subr.mxu0 0.0
    %2706 = vmatpush2.msra.mxu0 0.0
    %2707 = vmatprep.subr.mxu0 0.0
    %2708 = vmatpush2.msra.mxu0 0.0
    %2709 = vmatprep.subr.mxu0 0.0
    %2710 = vmatpush2.msra.mxu0 0.0
    %2711 = vmatprep.subr.mxu0 0.0
    %2712 = vmatpush2.msra.mxu0 0.0
    %2713 = vmatprep.subr.mxu0 0.0
    %2714 = vmatpush2.msra.mxu0 0.0
    %2715 = vmatprep.subr.mxu0 0.0
    %2716 = vmatpush2.msra.mxu0 0.0
    %2717 = vmatprep.subr.mxu0 0.0
    %2718 = vmatpush2.msra.mxu0 0.0
    %2719 = vmatprep.subr.mxu0 0.0
    %2720 = vmatpush2.msra.mxu0 0.0
    %2721 = vmatprep.subr.mxu0 0.0
    %2722 = vmatpush2.msra.mxu0 0.0
    %2723 = vmatprep.subr.mxu0 0.0
    %2724 = vmatpush2.msra.mxu0 0.0
    %2725 = vmatprep.subr.mxu0 0.0
    %2726 = vmatpush2.msra.mxu0 0.0
    %2727 = vmatprep.subr.mxu0 0.0
    %2728 = vmatpush2.msra.mxu0 0.0
    %2729 = vmatprep.mubr.f32.mxu0 0.0
    %2730 = vmatmul.mubr.f32.gmra.mxu0 %v2660
    %v2731 = vpop.f32.mrf.mxu0
    %v2732 = vadd.f32 0.0, %v2731
    %v2733 = vpop.f32.mrf.mxu0
    %2734 = vmatprep.mubr.f32.mxu0 0.0
    %2735 = vmatmul.mubr.f32.gmra.mxu0 %v2663
    %v2736 = vpop.f32.mrf.mxu0
    %v2737 = vadd.f32 0.0, %v2736
    %v2738 = vpop.f32.mrf.mxu0
    %2739 = vdwg.mxu0
    %2740 = vrot.lane.b32.xlu0 %v2522, 120
    %v2741 = vpop.permute.xlu0 %2740
    %2742 = vrot.lane.b32.xlu0 %v2527, 120
    %v2743 = vpop.permute.xlu0 %2742
    %2744 = vrot.lane.b32.xlu0 %v2522, 88
    %v2745 = vpop.permute.xlu0 %2744
    %2746 = vrot.lane.b32.xlu0 %v2527, 88
    %v2747 = vpop.permute.xlu0 %2746
    %v2748 = vsel %vm277, %v2741, 0
    %v2750 = vsel %vm277, %v2743, 0
    %v2752 = vsel %vm277, %v2745, 0
    %v2754 = vsel %vm277, %v2747, 0
    %2756 = vmatprep.subr.mxu0 0.0
    %2757 = vmatpush1.xpose.msra.mxu0 0.0
    %2758 = vmatprep.subr.mxu0 0.0
    %2759 = vmatpush1.xpose.msra.mxu0 0.0
    %2760 = vmatprep.subr.mxu0 0.0
    %2761 = vmatpush1.xpose.msra.mxu0 0.0
    %2762 = vmatprep.subr.mxu0 0.0
    %2763 = vmatpush1.xpose.msra.mxu0 0.0
    %2764 = vmatprep.subr.mxu0 0.0
    %2765 = vmatpush1.xpose.msra.mxu0 0.0
    %2766 = vmatprep.subr.mxu0 0.0
    %2767 = vmatpush1.xpose.msra.mxu0 0.0
    %2768 = vmatprep.subr.mxu0 0.0
    %2769 = vmatpush1.xpose.msra.mxu0 0.0
    %2770 = vmatprep.subr.mxu0 0.0
    %2771 = vmatpush1.xpose.msra.mxu0 0.0
    %2772 = vmatprep.subr.mxu0 0.0
    %2773 = vmatpush1.xpose.msra.mxu0 0.0
    %2774 = vmatprep.subr.mxu0 0.0
    %2775 = vmatpush1.xpose.msra.mxu0 0.0
    %2776 = vmatprep.subr.mxu0 0.0
    %2777 = vmatpush1.xpose.msra.mxu0 0.0
    %2778 = vmatprep.subr.mxu0 0.0
    %2779 = vmatpush1.xpose.msra.mxu0 0.0
    %2780 = vmatprep.subr.mxu0 0.0
    %2781 = vmatpush1.xpose.msra.mxu0 0.0
    %2782 = vmatprep.subr.mxu0 0.0
    %2783 = vmatpush1.xpose.msra.mxu0 0.0
    %2784 = vmatprep.subr.mxu0 0.0
    %2785 = vmatpush1.xpose.msra.mxu0 %v2754
    %2786 = vmatprep.subr.mxu0 0.0
    %2787 = vmatpush1.xpose.msra.mxu0 %v2752
    %2788 = vmatprep.subr.mxu0 0.0
    %2789 = vmatpush2.xpose.msra.mxu0 0.0
    %2790 = vmatprep.subr.mxu0 0.0
    %2791 = vmatpush2.xpose.msra.mxu0 0.0
    %2792 = vmatprep.subr.mxu0 0.0
    %2793 = vmatpush2.xpose.msra.mxu0 0.0
    %2794 = vmatprep.subr.mxu0 0.0
    %2795 = vmatpush2.xpose.msra.mxu0 0.0
    %2796 = vmatprep.subr.mxu0 0.0
    %2797 = vmatpush2.xpose.msra.mxu0 0.0
    %2798 = vmatprep.subr.mxu0 0.0
    %2799 = vmatpush2.xpose.msra.mxu0 0.0
    %2800 = vmatprep.subr.mxu0 0.0
    %2801 = vmatpush2.xpose.msra.mxu0 0.0
    %2802 = vmatprep.subr.mxu0 0.0
    %2803 = vmatpush2.xpose.msra.mxu0 0.0
    %2804 = vmatprep.subr.mxu0 0.0
    %2805 = vmatpush2.xpose.msra.mxu0 0.0
    %2806 = vmatprep.subr.mxu0 0.0
    %2807 = vmatpush2.xpose.msra.mxu0 0.0
    %2808 = vmatprep.subr.mxu0 0.0
    %2809 = vmatpush2.xpose.msra.mxu0 0.0
    %2810 = vmatprep.subr.mxu0 0.0
    %2811 = vmatpush2.xpose.msra.mxu0 0.0
    %2812 = vmatprep.subr.mxu0 0.0
    %2813 = vmatpush2.xpose.msra.mxu0 0.0
    %2814 = vmatprep.subr.mxu0 0.0
    %2815 = vmatpush2.xpose.msra.mxu0 0.0
    %2816 = vmatprep.subr.mxu0 0.0
    %2817 = vmatpush2.xpose.msra.mxu0 0.0
    %2818 = vmatprep.subr.mxu0 0.0
    %2819 = vmatpush2.xpose.msra.mxu0 0.0
    %2820 = vmatprep.mubr.f32.mxu0 0.0
    %2821 = vmatmul.mubr.f32.gmra.mxu0 %v2748
    %v2822 = vpop.f32.mrf.mxu0
    %v2823 = vadd.f32 0.0, %v2822
    %v2824 = vpop.f32.mrf.mxu0
    %2825 = vmatprep.mubr.f32.mxu0 0.0
    %2826 = vmatmul.mubr.f32.gmra.mxu0 %v2750
    %v2827 = vpop.f32.mrf.mxu0
    %v2828 = vadd.f32 0.0, %v2827
    %v2829 = vpop.f32.mrf.mxu0
    %2830 = vdwg.mxu0
    %v2831 = vmul.f32 %v2823, 0.35355338
    %v2832 = vmul.f32 %v2828, 0.35355338
    %v2833 = vsel %vm71, %v2831, -inf
    %2834 = vmax.xlane.f32.xlu0 %v2833
    %v2835 = vpop.xlane.xlu0 %2834
    %v2836 = vsel %vm71, %v2832, -inf
    %2837 = vmax.xlane.f32.xlu0 %v2836
    %v2838 = vpop.xlane.xlu0 %2837
    %v2839 = vsub.f32 %v2831, %v2835
    %v2840 = vsub.f32 %v2832, %v2838
    %v2841 = vmul.f32 %v2839, 1.442695
    %v2842 = vpow.pop %v2841
    %v2843 = vmul.f32 %v2840, 1.442695
    %v2844 = vpow.pop %v2843
    %v2845 = vsel %vm71, %v2842, 0.0
    %2846 = vadd.xlane.f32.xlu0 %v2845
    %v2847 = vpop.xlane.xlu0 %2846
    %v2848 = vsel %vm71, %v2844, 0.0
    %2849 = vadd.xlane.f32.xlu0 %v2848
    %v2850 = vpop.xlane.xlu0 %2849
    %v2851 = vrcp.pop %v2847
    %v2852 = vmul.f32 %v2842, %v2851
    %v2853 = vrcp.pop %v2850
    %v2854 = vmul.f32 %v2844, %v2853
    %2855 = vrot.lane.b32.xlu0 %v2522, 56
    %v2856 = vpop.permute.xlu0 %2855
    %2857 = vrot.lane.b32.xlu0 %v2527, 56
    %v2858 = vpop.permute.xlu0 %2857
    %v2862 = vsel %vm71, %v2852, 0
    %v2865 = vsel %vm71, %v2854, 0
    %2867 = vmatprep.subr.mxu0 0.0
    %2868 = vmatpush1.msra.mxu0 0.0
    %2869 = vmatprep.subr.mxu0 0.0
    %2870 = vmatpush1.msra.mxu0 0.0
    %2871 = vmatprep.subr.mxu0 0.0
    %2872 = vmatpush1.msra.mxu0 0.0
    %2873 = vmatprep.subr.mxu0 0.0
    %2874 = vmatpush1.msra.mxu0 0.0
    %2875 = vmatprep.subr.mxu0 0.0
    %2876 = vmatpush1.msra.mxu0 0.0
    %2877 = vmatprep.subr.mxu0 0.0
    %2878 = vmatpush1.msra.mxu0 0.0
    %2879 = vmatprep.subr.mxu0 0.0
    %2880 = vmatpush1.msra.mxu0 0.0
    %2881 = vmatprep.subr.mxu0 0.0
    %2882 = vmatpush1.msra.mxu0 0.0
    %2883 = vmatprep.subr.mxu0 0.0
    %2884 = vmatpush1.msra.mxu0 0.0
    %2885 = vmatprep.subr.mxu0 0.0
    %2886 = vmatpush1.msra.mxu0 0.0
    %2887 = vmatprep.subr.mxu0 0.0
    %2888 = vmatpush1.msra.mxu0 0.0
    %2889 = vmatprep.subr.mxu0 0.0
    %2890 = vmatpush1.msra.mxu0 0.0
    %2891 = vmatprep.subr.mxu0 0.0
    %2892 = vmatpush1.msra.mxu0 0.0
    %2893 = vmatprep.subr.mxu0 0.0
    %2894 = vmatpush1.msra.mxu0 0.0
    %2895 = vmatprep.subr.mxu0 0.0
    %2896 = vmatpush1.msra.mxu0 %v2858
    %2897 = vmatprep.subr.mxu0 0.0
    %2898 = vmatpush1.msra.mxu0 %v2856
    %2899 = vmatprep.subr.mxu0 0.0
    %2900 = vmatpush2.msra.mxu0 0.0
    %2901 = vmatprep.subr.mxu0 0.0
    %2902 = vmatpush2.msra.mxu0 0.0
    %2903 = vmatprep.subr.mxu0 0.0
    %2904 = vmatpush2.msra.mxu0 0.0
    %2905 = vmatprep.subr.mxu0 0.0
    %2906 = vmatpush2.msra.mxu0 0.0
    %2907 = vmatprep.subr.mxu0 0.0
    %2908 = vmatpush2.msra.mxu0 0.0
    %2909 = vmatprep.subr.mxu0 0.0
    %2910 = vmatpush2.msra.mxu0 0.0
    %2911 = vmatprep.subr.mxu0 0.0
    %2912 = vmatpush2.msra.mxu0 0.0
    %2913 = vmatprep.subr.mxu0 0.0
    %2914 = vmatpush2.msra.mxu0 0.0
    %2915 = vmatprep.subr.mxu0 0.0
    %2916 = vmatpush2.msra.mxu0 0.0
    %2917 = vmatprep.subr.mxu0 0.0
    %2918 = vmatpush2.msra.mxu0 0.0
    %2919 = vmatprep.subr.mxu0 0.0
    %2920 = vmatpush2.msra.mxu0 0.0
    %2921 = vmatprep.subr.mxu0 0.0
    %2922 = vmatpush2.msra.mxu0 0.0
    %2923 = vmatprep.subr.mxu0 0.0
    %2924 = vmatpush2.msra.mxu0 0.0
    %2925 = vmatprep.subr.mxu0 0.0
    %2926 = vmatpush2.msra.mxu0 0.0
    %2927 = vmatprep.subr.mxu0 0.0
    %2928 = vmatpush2.msra.mxu0 0.0
    %2929 = vmatprep.subr.mxu0 0.0
    %2930 = vmatpush2.msra.mxu0 0.0
    %2931 = vmatprep.mubr.f32.mxu0 0.0
    %2932 = vmatmul.mubr.f32.gmra.mxu0 %v2862
    %v2933 = vpop.f32.mrf.mxu0
    %v2934 = vadd.f32 0.0, %v2933
    %v2935 = vpop.f32.mrf.mxu0
    %2936 = vmatprep.mubr.f32.mxu0 0.0
    %2937 = vmatmul.mubr.f32.gmra.mxu0 %v2865
    %v2938 = vpop.f32.mrf.mxu0
    %v2939 = vadd.f32 0.0, %v2938
    %v2940 = vpop.f32.mrf.mxu0
    %2941 = vdwg.mxu0
    %2942 = vrot.lane.b32.xlu0 %v2522, 112
    %v2943 = vpop.permute.xlu0 %2942
    %2944 = vrot.lane.b32.xlu0 %v2527, 112
    %v2945 = vpop.permute.xlu0 %2944
    %2946 = vrot.lane.b32.xlu0 %v2522, 80
    %v2947 = vpop.permute.xlu0 %2946
    %2948 = vrot.lane.b32.xlu0 %v2527, 80
    %v2949 = vpop.permute.xlu0 %2948
    %v2950 = vsel %vm277, %v2943, 0
    %v2952 = vsel %vm277, %v2945, 0
    %v2954 = vsel %vm277, %v2947, 0
    %v2956 = vsel %vm277, %v2949, 0
    %2958 = vmatprep.subr.mxu0 0.0
    %2959 = vmatpush1.xpose.msra.mxu0 0.0
    %2960 = vmatprep.subr.mxu0 0.0
    %2961 = vmatpush1.xpose.msra.mxu0 0.0
    %2962 = vmatprep.subr.mxu0 0.0
    %2963 = vmatpush1.xpose.msra.mxu0 0.0
    %2964 = vmatprep.subr.mxu0 0.0
    %2965 = vmatpush1.xpose.msra.mxu0 0.0
    %2966 = vmatprep.subr.mxu0 0.0
    %2967 = vmatpush1.xpose.msra.mxu0 0.0
    %2968 = vmatprep.subr.mxu0 0.0
    %2969 = vmatpush1.xpose.msra.mxu0 0.0
    %2970 = vmatprep.subr.mxu0 0.0
    %2971 = vmatpush1.xpose.msra.mxu0 0.0
    %2972 = vmatprep.subr.mxu0 0.0
    %2973 = vmatpush1.xpose.msra.mxu0 0.0
    %2974 = vmatprep.subr.mxu0 0.0
    %2975 = vmatpush1.xpose.msra.mxu0 0.0
    %2976 = vmatprep.subr.mxu0 0.0
    %2977 = vmatpush1.xpose.msra.mxu0 0.0
    %2978 = vmatprep.subr.mxu0 0.0
    %2979 = vmatpush1.xpose.msra.mxu0 0.0
    %2980 = vmatprep.subr.mxu0 0.0
    %2981 = vmatpush1.xpose.msra.mxu0 0.0
    %2982 = vmatprep.subr.mxu0 0.0
    %2983 = vmatpush1.xpose.msra.mxu0 0.0
    %2984 = vmatprep.subr.mxu0 0.0
    %2985 = vmatpush1.xpose.msra.mxu0 0.0
    %2986 = vmatprep.subr.mxu0 0.0
    %2987 = vmatpush1.xpose.msra.mxu0 %v2956
    %2988 = vmatprep.subr.mxu0 0.0
    %2989 = vmatpush1.xpose.msra.mxu0 %v2954
    %2990 = vmatprep.subr.mxu0 0.0
    %2991 = vmatpush2.xpose.msra.mxu0 0.0
    %2992 = vmatprep.subr.mxu0 0.0
    %2993 = vmatpush2.xpose.msra.mxu0 0.0
    %2994 = vmatprep.subr.mxu0 0.0
    %2995 = vmatpush2.xpose.msra.mxu0 0.0
    %2996 = vmatprep.subr.mxu0 0.0
    %2997 = vmatpush2.xpose.msra.mxu0 0.0
    %2998 = vmatprep.subr.mxu0 0.0
    %2999 = vmatpush2.xpose.msra.mxu0 0.0
    %3000 = vmatprep.subr.mxu0 0.0
    %3001 = vmatpush2.xpose.msra.mxu0 0.0
    %3002 = vmatprep.subr.mxu0 0.0
    %3003 = vmatpush2.xpose.msra.mxu0 0.0
    %3004 = vmatprep.subr.mxu0 0.0
    %3005 = vmatpush2.xpose.msra.mxu0 0.0
    %3006 = vmatprep.subr.mxu0 0.0
    %3007 = vmatpush2.xpose.msra.mxu0 0.0
    %3008 = vmatprep.subr.mxu0 0.0
    %3009 = vmatpush2.xpose.msra.mxu0 0.0
    %3010 = vmatprep.subr.mxu0 0.0
    %3011 = vmatpush2.xpose.msra.mxu0 0.0
    %3012 = vmatprep.subr.mxu0 0.0
    %3013 = vmatpush2.xpose.msra.mxu0 0.0
    %3014 = vmatprep.subr.mxu0 0.0
    %3015 = vmatpush2.xpose.msra.mxu0 0.0
    %3016 = vmatprep.subr.mxu0 0.0
    %3017 = vmatpush2.xpose.msra.mxu0 0.0
    %3018 = vmatprep.subr.mxu0 0.0
    %3019 = vmatpush2.xpose.msra.mxu0 0.0
    %3020 = vmatprep.subr.mxu0 0.0
    %3021 = vmatpush2.xpose.msra.mxu0 0.0
    %3022 = vmatprep.mubr.f32.mxu0 0.0
    %3023 = vmatmul.mubr.f32.gmra.mxu0 %v2950
    %v3024 = vpop.f32.mrf.mxu0
    %v3025 = vadd.f32 0.0, %v3024
    %v3026 = vpop.f32.mrf.mxu0
    %3027 = vmatprep.mubr.f32.mxu0 0.0
    %3028 = vmatmul.mubr.f32.gmra.mxu0 %v2952
    %v3029 = vpop.f32.mrf.mxu0
    %v3030 = vadd.f32 0.0, %v3029
    %v3031 = vpop.f32.mrf.mxu0
    %3032 = vdwg.mxu0
    %v3033 = vmul.f32 %v3025, 0.35355338
    %v3034 = vmul.f32 %v3030, 0.35355338
    %v3035 = vsel %vm71, %v3033, -inf
    %3036 = vmax.xlane.f32.xlu0 %v3035
    %v3037 = vpop.xlane.xlu0 %3036
    %v3038 = vsel %vm71, %v3034, -inf
    %3039 = vmax.xlane.f32.xlu0 %v3038
    %v3040 = vpop.xlane.xlu0 %3039
    %v3041 = vsub.f32 %v3033, %v3037
    %v3042 = vsub.f32 %v3034, %v3040
    %v3043 = vmul.f32 %v3041, 1.442695
    %v3044 = vpow.pop %v3043
    %v3045 = vmul.f32 %v3042, 1.442695
    %v3046 = vpow.pop %v3045
    %v3047 = vsel %vm71, %v3044, 0.0
    %3048 = vadd.xlane.f32.xlu0 %v3047
    %v3049 = vpop.xlane.xlu0 %3048
    %v3050 = vsel %vm71, %v3046, 0.0
    %3051 = vadd.xlane.f32.xlu0 %v3050
    %v3052 = vpop.xlane.xlu0 %3051
    %v3053 = vrcp.pop %v3049
    %v3054 = vmul.f32 %v3044, %v3053
    %v3055 = vrcp.pop %v3052
    %v3056 = vmul.f32 %v3046, %v3055
    %3057 = vrot.lane.b32.xlu0 %v2522, 48
    %v3058 = vpop.permute.xlu0 %3057
    %3059 = vrot.lane.b32.xlu0 %v2527, 48
    %v3060 = vpop.permute.xlu0 %3059
    %v3064 = vsel %vm71, %v3054, 0
    %v3067 = vsel %vm71, %v3056, 0
    %3069 = vmatprep.subr.mxu0 0.0
    %3070 = vmatpush1.msra.mxu0 0.0
    %3071 = vmatprep.subr.mxu0 0.0
    %3072 = vmatpush1.msra.mxu0 0.0
    %3073 = vmatprep.subr.mxu0 0.0
    %3074 = vmatpush1.msra.mxu0 0.0
    %3075 = vmatprep.subr.mxu0 0.0
    %3076 = vmatpush1.msra.mxu0 0.0
    %3077 = vmatprep.subr.mxu0 0.0
    %3078 = vmatpush1.msra.mxu0 0.0
    %3079 = vmatprep.subr.mxu0 0.0
    %3080 = vmatpush1.msra.mxu0 0.0
    %3081 = vmatprep.subr.mxu0 0.0
    %3082 = vmatpush1.msra.mxu0 0.0
    %3083 = vmatprep.subr.mxu0 0.0
    %3084 = vmatpush1.msra.mxu0 0.0
    %3085 = vmatprep.subr.mxu0 0.0
    %3086 = vmatpush1.msra.mxu0 0.0
    %3087 = vmatprep.subr.mxu0 0.0
    %3088 = vmatpush1.msra.mxu0 0.0
    %3089 = vmatprep.subr.mxu0 0.0
    %3090 = vmatpush1.msra.mxu0 0.0
    %3091 = vmatprep.subr.mxu0 0.0
    %3092 = vmatpush1.msra.mxu0 0.0
    %3093 = vmatprep.subr.mxu0 0.0
    %3094 = vmatpush1.msra.mxu0 0.0
    %3095 = vmatprep.subr.mxu0 0.0
    %3096 = vmatpush1.msra.mxu0 0.0
    %3097 = vmatprep.subr.mxu0 0.0
    %3098 = vmatpush1.msra.mxu0 %v3060
    %3099 = vmatprep.subr.mxu0 0.0
    %3100 = vmatpush1.msra.mxu0 %v3058
    %3101 = vmatprep.subr.mxu0 0.0
    %3102 = vmatpush2.msra.mxu0 0.0
    %3103 = vmatprep.subr.mxu0 0.0
    %3104 = vmatpush2.msra.mxu0 0.0
    %3105 = vmatprep.subr.mxu0 0.0
    %3106 = vmatpush2.msra.mxu0 0.0
    %3107 = vmatprep.subr.mxu0 0.0
    %3108 = vmatpush2.msra.mxu0 0.0
    %3109 = vmatprep.subr.mxu0 0.0
    %3110 = vmatpush2.msra.mxu0 0.0
    %3111 = vmatprep.subr.mxu0 0.0
    %3112 = vmatpush2.msra.mxu0 0.0
    %3113 = vmatprep.subr.mxu0 0.0
    %3114 = vmatpush2.msra.mxu0 0.0
    %3115 = vmatprep.subr.mxu0 0.0
    %3116 = vmatpush2.msra.mxu0 0.0
    %3117 = vmatprep.subr.mxu0 0.0
    %3118 = vmatpush2.msra.mxu0 0.0
    %3119 = vmatprep.subr.mxu0 0.0
    %3120 = vmatpush2.msra.mxu0 0.0
    %3121 = vmatprep.subr.mxu0 0.0
    %3122 = vmatpush2.msra.mxu0 0.0
    %3123 = vmatprep.subr.mxu0 0.0
    %3124 = vmatpush2.msra.mxu0 0.0
    %3125 = vmatprep.subr.mxu0 0.0
    %3126 = vmatpush2.msra.mxu0 0.0
    %3127 = vmatprep.subr.mxu0 0.0
    %3128 = vmatpush2.msra.mxu0 0.0
    %3129 = vmatprep.subr.mxu0 0.0
    %3130 = vmatpush2.msra.mxu0 0.0
    %3131 = vmatprep.subr.mxu0 0.0
    %3132 = vmatpush2.msra.mxu0 0.0
    %3133 = vmatprep.mubr.f32.mxu0 0.0
    %3134 = vmatmul.mubr.f32.gmra.mxu0 %v3064
    %v3135 = vpop.f32.mrf.mxu0
    %v3136 = vadd.f32 0.0, %v3135
    %v3137 = vpop.f32.mrf.mxu0
    %3138 = vmatprep.mubr.f32.mxu0 0.0
    %3139 = vmatmul.mubr.f32.gmra.mxu0 %v3067
    %v3140 = vpop.f32.mrf.mxu0
    %v3141 = vadd.f32 0.0, %v3140
    %v3142 = vpop.f32.mrf.mxu0
    %3143 = vdwg.mxu0
    %3144 = vrot.lane.b32.xlu0 %v2522, 104
    %v3145 = vpop.permute.xlu0 %3144
    %3146 = vrot.lane.b32.xlu0 %v2527, 104
    %v3147 = vpop.permute.xlu0 %3146
    %3148 = vrot.lane.b32.xlu0 %v2522, 72
    %v3149 = vpop.permute.xlu0 %3148
    %3150 = vrot.lane.b32.xlu0 %v2527, 72
    %v3151 = vpop.permute.xlu0 %3150
    %v3152 = vsel %vm277, %v3145, 0
    %v3154 = vsel %vm277, %v3147, 0
    %v3156 = vsel %vm277, %v3149, 0
    %v3158 = vsel %vm277, %v3151, 0
    %3160 = vmatprep.subr.mxu0 0.0
    %3161 = vmatpush1.xpose.msra.mxu0 0.0
    %3162 = vmatprep.subr.mxu0 0.0
    %3163 = vmatpush1.xpose.msra.mxu0 0.0
    %3164 = vmatprep.subr.mxu0 0.0
    %3165 = vmatpush1.xpose.msra.mxu0 0.0
    %3166 = vmatprep.subr.mxu0 0.0
    %3167 = vmatpush1.xpose.msra.mxu0 0.0
    %3168 = vmatprep.subr.mxu0 0.0
    %3169 = vmatpush1.xpose.msra.mxu0 0.0
    %3170 = vmatprep.subr.mxu0 0.0
    %3171 = vmatpush1.xpose.msra.mxu0 0.0
    %3172 = vmatprep.subr.mxu0 0.0
    %3173 = vmatpush1.xpose.msra.mxu0 0.0
    %3174 = vmatprep.subr.mxu0 0.0
    %3175 = vmatpush1.xpose.msra.mxu0 0.0
    %3176 = vmatprep.subr.mxu0 0.0
    %3177 = vmatpush1.xpose.msra.mxu0 0.0
    %3178 = vmatprep.subr.mxu0 0.0
    %3179 = vmatpush1.xpose.msra.mxu0 0.0
    %3180 = vmatprep.subr.mxu0 0.0
    %3181 = vmatpush1.xpose.msra.mxu0 0.0
    %3182 = vmatprep.subr.mxu0 0.0
    %3183 = vmatpush1.xpose.msra.mxu0 0.0
    %3184 = vmatprep.subr.mxu0 0.0
    %3185 = vmatpush1.xpose.msra.mxu0 0.0
    %3186 = vmatprep.subr.mxu0 0.0
    %3187 = vmatpush1.xpose.msra.mxu0 0.0
    %3188 = vmatprep.subr.mxu0 0.0
    %3189 = vmatpush1.xpose.msra.mxu0 %v3158
    %3190 = vmatprep.subr.mxu0 0.0
    %3191 = vmatpush1.xpose.msra.mxu0 %v3156
    %3192 = vmatprep.subr.mxu0 0.0
    %3193 = vmatpush2.xpose.msra.mxu0 0.0
    %3194 = vmatprep.subr.mxu0 0.0
    %3195 = vmatpush2.xpose.msra.mxu0 0.0
    %3196 = vmatprep.subr.mxu0 0.0
    %3197 = vmatpush2.xpose.msra.mxu0 0.0
    %3198 = vmatprep.subr.mxu0 0.0
    %3199 = vmatpush2.xpose.msra.mxu0 0.0
    %3200 = vmatprep.subr.mxu0 0.0
    %3201 = vmatpush2.xpose.msra.mxu0 0.0
    %3202 = vmatprep.subr.mxu0 0.0
    %3203 = vmatpush2.xpose.msra.mxu0 0.0
    %3204 = vmatprep.subr.mxu0 0.0
    %3205 = vmatpush2.xpose.msra.mxu0 0.0
    %3206 = vmatprep.subr.mxu0 0.0
    %3207 = vmatpush2.xpose.msra.mxu0 0.0
    %3208 = vmatprep.subr.mxu0 0.0
    %3209 = vmatpush2.xpose.msra.mxu0 0.0
    %3210 = vmatprep.subr.mxu0 0.0
    %3211 = vmatpush2.xpose.msra.mxu0 0.0
    %3212 = vmatprep.subr.mxu0 0.0
    %3213 = vmatpush2.xpose.msra.mxu0 0.0
    %3214 = vmatprep.subr.mxu0 0.0
    %3215 = vmatpush2.xpose.msra.mxu0 0.0
    %3216 = vmatprep.subr.mxu0 0.0
    %3217 = vmatpush2.xpose.msra.mxu0 0.0
    %3218 = vmatprep.subr.mxu0 0.0
    %3219 = vmatpush2.xpose.msra.mxu0 0.0
    %3220 = vmatprep.subr.mxu0 0.0
    %3221 = vmatpush2.xpose.msra.mxu0 0.0
    %3222 = vmatprep.subr.mxu0 0.0
    %3223 = vmatpush2.xpose.msra.mxu0 0.0
    %3224 = vmatprep.mubr.f32.mxu0 0.0
    %3225 = vmatmul.mubr.f32.gmra.mxu0 %v3152
    %v3226 = vpop.f32.mrf.mxu0
    %v3227 = vadd.f32 0.0, %v3226
    %v3228 = vpop.f32.mrf.mxu0
    %3229 = vmatprep.mubr.f32.mxu0 0.0
    %3230 = vmatmul.mubr.f32.gmra.mxu0 %v3154
    %v3231 = vpop.f32.mrf.mxu0
    %v3232 = vadd.f32 0.0, %v3231
    %v3233 = vpop.f32.mrf.mxu0
    %3234 = vdwg.mxu0
    %v3235 = vmul.f32 %v3227, 0.35355338
    %v3236 = vmul.f32 %v3232, 0.35355338
    %v3237 = vsel %vm71, %v3235, -inf
    %3238 = vmax.xlane.f32.xlu0 %v3237
    %v3239 = vpop.xlane.xlu0 %3238
    %v3240 = vsel %vm71, %v3236, -inf
    %3241 = vmax.xlane.f32.xlu0 %v3240
    %v3242 = vpop.xlane.xlu0 %3241
    %v3243 = vsub.f32 %v3235, %v3239
    %v3244 = vsub.f32 %v3236, %v3242
    %v3245 = vmul.f32 %v3243, 1.442695
    %v3246 = vpow.pop %v3245
    %v3247 = vmul.f32 %v3244, 1.442695
    %v3248 = vpow.pop %v3247
    %v3249 = vsel %vm71, %v3246, 0.0
    %3250 = vadd.xlane.f32.xlu0 %v3249
    %v3251 = vpop.xlane.xlu0 %3250
    %v3252 = vsel %vm71, %v3248, 0.0
    %3253 = vadd.xlane.f32.xlu0 %v3252
    %v3254 = vpop.xlane.xlu0 %3253
    %v3255 = vrcp.pop %v3251
    %v3256 = vmul.f32 %v3246, %v3255
    %v3257 = vrcp.pop %v3254
    %v3258 = vmul.f32 %v3248, %v3257
    %3259 = vrot.lane.b32.xlu0 %v2522, 40
    %v3260 = vpop.permute.xlu0 %3259
    %3261 = vrot.lane.b32.xlu0 %v2527, 40
    %v3262 = vpop.permute.xlu0 %3261
    %v3266 = vsel %vm71, %v3256, 0
    %v3269 = vsel %vm71, %v3258, 0
    %3271 = vmatprep.subr.mxu0 0.0
    %3272 = vmatpush1.msra.mxu0 0.0
    %3273 = vmatprep.subr.mxu0 0.0
    %3274 = vmatpush1.msra.mxu0 0.0
    %3275 = vmatprep.subr.mxu0 0.0
    %3276 = vmatpush1.msra.mxu0 0.0
    %3277 = vmatprep.subr.mxu0 0.0
    %3278 = vmatpush1.msra.mxu0 0.0
    %3279 = vmatprep.subr.mxu0 0.0
    %3280 = vmatpush1.msra.mxu0 0.0
    %3281 = vmatprep.subr.mxu0 0.0
    %3282 = vmatpush1.msra.mxu0 0.0
    %3283 = vmatprep.subr.mxu0 0.0
    %3284 = vmatpush1.msra.mxu0 0.0
    %3285 = vmatprep.subr.mxu0 0.0
    %3286 = vmatpush1.msra.mxu0 0.0
    %3287 = vmatprep.subr.mxu0 0.0
    %3288 = vmatpush1.msra.mxu0 0.0
    %3289 = vmatprep.subr.mxu0 0.0
    %3290 = vmatpush1.msra.mxu0 0.0
    %3291 = vmatprep.subr.mxu0 0.0
    %3292 = vmatpush1.msra.mxu0 0.0
    %3293 = vmatprep.subr.mxu0 0.0
    %3294 = vmatpush1.msra.mxu0 0.0
    %3295 = vmatprep.subr.mxu0 0.0
    %3296 = vmatpush1.msra.mxu0 0.0
    %3297 = vmatprep.subr.mxu0 0.0
    %3298 = vmatpush1.msra.mxu0 0.0
    %3299 = vmatprep.subr.mxu0 0.0
    %3300 = vmatpush1.msra.mxu0 %v3262
    %3301 = vmatprep.subr.mxu0 0.0
    %3302 = vmatpush1.msra.mxu0 %v3260
    %3303 = vmatprep.subr.mxu0 0.0
    %3304 = vmatpush2.msra.mxu0 0.0
    %3305 = vmatprep.subr.mxu0 0.0
    %3306 = vmatpush2.msra.mxu0 0.0
    %3307 = vmatprep.subr.mxu0 0.0
    %3308 = vmatpush2.msra.mxu0 0.0
    %3309 = vmatprep.subr.mxu0 0.0
    %3310 = vmatpush2.msra.mxu0 0.0
    %3311 = vmatprep.subr.mxu0 0.0
    %3312 = vmatpush2.msra.mxu0 0.0
    %3313 = vmatprep.subr.mxu0 0.0
    %3314 = vmatpush2.msra.mxu0 0.0
    %3315 = vmatprep.subr.mxu0 0.0
    %3316 = vmatpush2.msra.mxu0 0.0
    %3317 = vmatprep.subr.mxu0 0.0
    %3318 = vmatpush2.msra.mxu0 0.0
    %3319 = vmatprep.subr.mxu0 0.0
    %3320 = vmatpush2.msra.mxu0 0.0
    %3321 = vmatprep.subr.mxu0 0.0
    %3322 = vmatpush2.msra.mxu0 0.0
    %3323 = vmatprep.subr.mxu0 0.0
    %3324 = vmatpush2.msra.mxu0 0.0
    %3325 = vmatprep.subr.mxu0 0.0
    %3326 = vmatpush2.msra.mxu0 0.0
    %3327 = vmatprep.subr.mxu0 0.0
    %3328 = vmatpush2.msra.mxu0 0.0
    %3329 = vmatprep.subr.mxu0 0.0
    %3330 = vmatpush2.msra.mxu0 0.0
    %3331 = vmatprep.subr.mxu0 0.0
    %3332 = vmatpush2.msra.mxu0 0.0
    %3333 = vmatprep.subr.mxu0 0.0
    %3334 = vmatpush2.msra.mxu0 0.0
    %3335 = vmatprep.mubr.f32.mxu0 0.0
    %3336 = vmatmul.mubr.f32.gmra.mxu0 %v3266
    %v3337 = vpop.f32.mrf.mxu0
    %v3338 = vadd.f32 0.0, %v3337
    %v3339 = vpop.f32.mrf.mxu0
    %3340 = vmatprep.mubr.f32.mxu0 0.0
    %3341 = vmatmul.mubr.f32.gmra.mxu0 %v3269
    %v3342 = vpop.f32.mrf.mxu0
    %v3343 = vadd.f32 0.0, %v3342
    %v3344 = vpop.f32.mrf.mxu0
    %3345 = vdwg.mxu0
    %3348 = vrot.lane.b32.xlu0 %v2934, 8
    %v3349 = vpop.permute.xlu0 %3348
    %3350 = vrot.lane.b32.xlu0 %v2939, 8
    %v3351 = vpop.permute.xlu0 %3350
    %3356 = vrot.lane.b32.xlu0 %v3136, 16
    %v3357 = vpop.permute.xlu0 %3356
    %3358 = vrot.lane.b32.xlu0 %v3141, 16
    %v3359 = vpop.permute.xlu0 %3358
    %3364 = vrot.lane.b32.xlu0 %v3338, 24
    %v3365 = vpop.permute.xlu0 %3364
    %3366 = vrot.lane.b32.xlu0 %v3343, 24
    %v3367 = vpop.permute.xlu0 %3366
    %v3370 = vsel %vm277, %v2732, %v3349
    %v3371 = vsel %vm277, %v2737, %v3351
    %v3372 = vsel %vm71, %v3370, %v3357
    %v3373 = vsel %vm71, %v3371, %v3359
    %v3374 = vsel %vm1106, %v3372, %v3365
    %v3375 = vsel %vm1106, %v3373, %v3367
    %3378 = vrot.lane.b32.xlu0 %v2532, 96
    %v3379 = vpop.permute.xlu0 %3378
    %3380 = vrot.lane.b32.xlu0 %v2537, 96
    %v3381 = vpop.permute.xlu0 %3380
    %v3382 = vsel %vm277, %v2532, 0
    %v3384 = vsel %vm277, %v2537, 0
    %v3386 = vsel %vm277, %v3379, 0
    %v3388 = vsel %vm277, %v3381, 0
    %3390 = vmatprep.subr.mxu0 0.0
    %3391 = vmatpush1.xpose.msra.mxu0 0.0
    %3392 = vmatprep.subr.mxu0 0.0
    %3393 = vmatpush1.xpose.msra.mxu0 0.0
    %3394 = vmatprep.subr.mxu0 0.0
    %3395 = vmatpush1.xpose.msra.mxu0 0.0
    %3396 = vmatprep.subr.mxu0 0.0
    %3397 = vmatpush1.xpose.msra.mxu0 0.0
    %3398 = vmatprep.subr.mxu0 0.0
    %3399 = vmatpush1.xpose.msra.mxu0 0.0
    %3400 = vmatprep.subr.mxu0 0.0
    %3401 = vmatpush1.xpose.msra.mxu0 0.0
    %3402 = vmatprep.subr.mxu0 0.0
    %3403 = vmatpush1.xpose.msra.mxu0 0.0
    %3404 = vmatprep.subr.mxu0 0.0
    %3405 = vmatpush1.xpose.msra.mxu0 0.0
    %3406 = vmatprep.subr.mxu0 0.0
    %3407 = vmatpush1.xpose.msra.mxu0 0.0
    %3408 = vmatprep.subr.mxu0 0.0
    %3409 = vmatpush1.xpose.msra.mxu0 0.0
    %3410 = vmatprep.subr.mxu0 0.0
    %3411 = vmatpush1.xpose.msra.mxu0 0.0
    %3412 = vmatprep.subr.mxu0 0.0
    %3413 = vmatpush1.xpose.msra.mxu0 0.0
    %3414 = vmatprep.subr.mxu0 0.0
    %3415 = vmatpush1.xpose.msra.mxu0 0.0
    %3416 = vmatprep.subr.mxu0 0.0
    %3417 = vmatpush1.xpose.msra.mxu0 0.0
    %3418 = vmatprep.subr.mxu0 0.0
    %3419 = vmatpush1.xpose.msra.mxu0 %v3388
    %3420 = vmatprep.subr.mxu0 0.0
    %3421 = vmatpush1.xpose.msra.mxu0 %v3386
    %3422 = vmatprep.subr.mxu0 0.0
    %3423 = vmatpush2.xpose.msra.mxu0 0.0
    %3424 = vmatprep.subr.mxu0 0.0
    %3425 = vmatpush2.xpose.msra.mxu0 0.0
    %3426 = vmatprep.subr.mxu0 0.0
    %3427 = vmatpush2.xpose.msra.mxu0 0.0
    %3428 = vmatprep.subr.mxu0 0.0
    %3429 = vmatpush2.xpose.msra.mxu0 0.0
    %3430 = vmatprep.subr.mxu0 0.0
    %3431 = vmatpush2.xpose.msra.mxu0 0.0
    %3432 = vmatprep.subr.mxu0 0.0
    %3433 = vmatpush2.xpose.msra.mxu0 0.0
    %3434 = vmatprep.subr.mxu0 0.0
    %3435 = vmatpush2.xpose.msra.mxu0 0.0
    %3436 = vmatprep.subr.mxu0 0.0
    %3437 = vmatpush2.xpose.msra.mxu0 0.0
    %3438 = vmatprep.subr.mxu0 0.0
    %3439 = vmatpush2.xpose.msra.mxu0 0.0
    %3440 = vmatprep.subr.mxu0 0.0
    %3441 = vmatpush2.xpose.msra.mxu0 0.0
    %3442 = vmatprep.subr.mxu0 0.0
    %3443 = vmatpush2.xpose.msra.mxu0 0.0
    %3444 = vmatprep.subr.mxu0 0.0
    %3445 = vmatpush2.xpose.msra.mxu0 0.0
    %3446 = vmatprep.subr.mxu0 0.0
    %3447 = vmatpush2.xpose.msra.mxu0 0.0
    %3448 = vmatprep.subr.mxu0 0.0
    %3449 = vmatpush2.xpose.msra.mxu0 0.0
    %3450 = vmatprep.subr.mxu0 0.0
    %3451 = vmatpush2.xpose.msra.mxu0 0.0
    %3452 = vmatprep.subr.mxu0 0.0
    %3453 = vmatpush2.xpose.msra.mxu0 0.0
    %3454 = vmatprep.mubr.f32.mxu0 0.0
    %3455 = vmatmul.mubr.f32.gmra.mxu0 %v3382
    %v3456 = vpop.f32.mrf.mxu0
    %v3457 = vadd.f32 0.0, %v3456
    %v3458 = vpop.f32.mrf.mxu0
    %3459 = vmatprep.mubr.f32.mxu0 0.0
    %3460 = vmatmul.mubr.f32.gmra.mxu0 %v3384
    %v3461 = vpop.f32.mrf.mxu0
    %v3462 = vadd.f32 0.0, %v3461
    %v3463 = vpop.f32.mrf.mxu0
    %3464 = vdwg.mxu0
    %v3465 = vmul.f32 %v3457, 0.35355338
    %v3466 = vmul.f32 %v3462, 0.35355338
    %v3467 = vsel %vm71, %v3465, -inf
    %3468 = vmax.xlane.f32.xlu0 %v3467
    %v3469 = vpop.xlane.xlu0 %3468
    %v3470 = vsel %vm71, %v3466, -inf
    %3471 = vmax.xlane.f32.xlu0 %v3470
    %v3472 = vpop.xlane.xlu0 %3471
    %v3473 = vsub.f32 %v3465, %v3469
    %v3474 = vsub.f32 %v3466, %v3472
    %v3475 = vmul.f32 %v3473, 1.442695
    %v3476 = vpow.pop %v3475
    %v3477 = vmul.f32 %v3474, 1.442695
    %v3478 = vpow.pop %v3477
    %v3479 = vsel %vm71, %v3476, 0.0
    %3480 = vadd.xlane.f32.xlu0 %v3479
    %v3481 = vpop.xlane.xlu0 %3480
    %v3482 = vsel %vm71, %v3478, 0.0
    %3483 = vadd.xlane.f32.xlu0 %v3482
    %v3484 = vpop.xlane.xlu0 %3483
    %v3485 = vrcp.pop %v3481
    %v3486 = vmul.f32 %v3476, %v3485
    %v3487 = vrcp.pop %v3484
    %v3488 = vmul.f32 %v3478, %v3487
    %3489 = vrot.lane.b32.xlu0 %v2532, 64
    %v3490 = vpop.permute.xlu0 %3489
    %3491 = vrot.lane.b32.xlu0 %v2537, 64
    %v3492 = vpop.permute.xlu0 %3491
    %v3496 = vsel %vm71, %v3486, 0
    %v3499 = vsel %vm71, %v3488, 0
    %3501 = vmatprep.subr.mxu0 0.0
    %3502 = vmatpush1.msra.mxu0 0.0
    %3503 = vmatprep.subr.mxu0 0.0
    %3504 = vmatpush1.msra.mxu0 0.0
    %3505 = vmatprep.subr.mxu0 0.0
    %3506 = vmatpush1.msra.mxu0 0.0
    %3507 = vmatprep.subr.mxu0 0.0
    %3508 = vmatpush1.msra.mxu0 0.0
    %3509 = vmatprep.subr.mxu0 0.0
    %3510 = vmatpush1.msra.mxu0 0.0
    %3511 = vmatprep.subr.mxu0 0.0
    %3512 = vmatpush1.msra.mxu0 0.0
    %3513 = vmatprep.subr.mxu0 0.0
    %3514 = vmatpush1.msra.mxu0 0.0
    %3515 = vmatprep.subr.mxu0 0.0
    %3516 = vmatpush1.msra.mxu0 0.0
    %3517 = vmatprep.subr.mxu0 0.0
    %3518 = vmatpush1.msra.mxu0 0.0
    %3519 = vmatprep.subr.mxu0 0.0
    %3520 = vmatpush1.msra.mxu0 0.0
    %3521 = vmatprep.subr.mxu0 0.0
    %3522 = vmatpush1.msra.mxu0 0.0
    %3523 = vmatprep.subr.mxu0 0.0
    %3524 = vmatpush1.msra.mxu0 0.0
    %3525 = vmatprep.subr.mxu0 0.0
    %3526 = vmatpush1.msra.mxu0 0.0
    %3527 = vmatprep.subr.mxu0 0.0
    %3528 = vmatpush1.msra.mxu0 0.0
    %3529 = vmatprep.subr.mxu0 0.0
    %3530 = vmatpush1.msra.mxu0 %v3492
    %3531 = vmatprep.subr.mxu0 0.0
    %3532 = vmatpush1.msra.mxu0 %v3490
    %3533 = vmatprep.subr.mxu0 0.0
    %3534 = vmatpush2.msra.mxu0 0.0
    %3535 = vmatprep.subr.mxu0 0.0
    %3536 = vmatpush2.msra.mxu0 0.0
    %3537 = vmatprep.subr.mxu0 0.0
    %3538 = vmatpush2.msra.mxu0 0.0
    %3539 = vmatprep.subr.mxu0 0.0
    %3540 = vmatpush2.msra.mxu0 0.0
    %3541 = vmatprep.subr.mxu0 0.0
    %3542 = vmatpush2.msra.mxu0 0.0
    %3543 = vmatprep.subr.mxu0 0.0
    %3544 = vmatpush2.msra.mxu0 0.0
    %3545 = vmatprep.subr.mxu0 0.0
    %3546 = vmatpush2.msra.mxu0 0.0
    %3547 = vmatprep.subr.mxu0 0.0
    %3548 = vmatpush2.msra.mxu0 0.0
    %3549 = vmatprep.subr.mxu0 0.0
    %3550 = vmatpush2.msra.mxu0 0.0
    %3551 = vmatprep.subr.mxu0 0.0
    %3552 = vmatpush2.msra.mxu0 0.0
    %3553 = vmatprep.subr.mxu0 0.0
    %3554 = vmatpush2.msra.mxu0 0.0
    %3555 = vmatprep.subr.mxu0 0.0
    %3556 = vmatpush2.msra.mxu0 0.0
    %3557 = vmatprep.subr.mxu0 0.0
    %3558 = vmatpush2.msra.mxu0 0.0
    %3559 = vmatprep.subr.mxu0 0.0
    %3560 = vmatpush2.msra.mxu0 0.0
    %3561 = vmatprep.subr.mxu0 0.0
    %3562 = vmatpush2.msra.mxu0 0.0
    %3563 = vmatprep.subr.mxu0 0.0
    %3564 = vmatpush2.msra.mxu0 0.0
    %3565 = vmatprep.mubr.f32.mxu0 0.0
    %3566 = vmatmul.mubr.f32.gmra.mxu0 %v3496
    %v3567 = vpop.f32.mrf.mxu0
    %v3568 = vadd.f32 0.0, %v3567
    %v3569 = vpop.f32.mrf.mxu0
    %3570 = vmatprep.mubr.f32.mxu0 0.0
    %3571 = vmatmul.mubr.f32.gmra.mxu0 %v3499
    %v3572 = vpop.f32.mrf.mxu0
    %v3573 = vadd.f32 0.0, %v3572
    %v3574 = vpop.f32.mrf.mxu0
    %3575 = vdwg.mxu0
    %3576 = vrot.lane.b32.xlu0 %v2532, 120
    %v3577 = vpop.permute.xlu0 %3576
    %3578 = vrot.lane.b32.xlu0 %v2537, 120
    %v3579 = vpop.permute.xlu0 %3578
    %3580 = vrot.lane.b32.xlu0 %v2532, 88
    %v3581 = vpop.permute.xlu0 %3580
    %3582 = vrot.lane.b32.xlu0 %v2537, 88
    %v3583 = vpop.permute.xlu0 %3582
    %v3584 = vsel %vm277, %v3577, 0
    %v3586 = vsel %vm277, %v3579, 0
    %v3588 = vsel %vm277, %v3581, 0
    %v3590 = vsel %vm277, %v3583, 0
    %3592 = vmatprep.subr.mxu0 0.0
    %3593 = vmatpush1.xpose.msra.mxu0 0.0
    %3594 = vmatprep.subr.mxu0 0.0
    %3595 = vmatpush1.xpose.msra.mxu0 0.0
    %3596 = vmatprep.subr.mxu0 0.0
    %3597 = vmatpush1.xpose.msra.mxu0 0.0
    %3598 = vmatprep.subr.mxu0 0.0
    %3599 = vmatpush1.xpose.msra.mxu0 0.0
    %3600 = vmatprep.subr.mxu0 0.0
    %3601 = vmatpush1.xpose.msra.mxu0 0.0
    %3602 = vmatprep.subr.mxu0 0.0
    %3603 = vmatpush1.xpose.msra.mxu0 0.0
    %3604 = vmatprep.subr.mxu0 0.0
    %3605 = vmatpush1.xpose.msra.mxu0 0.0
    %3606 = vmatprep.subr.mxu0 0.0
    %3607 = vmatpush1.xpose.msra.mxu0 0.0
    %3608 = vmatprep.subr.mxu0 0.0
    %3609 = vmatpush1.xpose.msra.mxu0 0.0
    %3610 = vmatprep.subr.mxu0 0.0
    %3611 = vmatpush1.xpose.msra.mxu0 0.0
    %3612 = vmatprep.subr.mxu0 0.0
    %3613 = vmatpush1.xpose.msra.mxu0 0.0
    %3614 = vmatprep.subr.mxu0 0.0
    %3615 = vmatpush1.xpose.msra.mxu0 0.0
    %3616 = vmatprep.subr.mxu0 0.0
    %3617 = vmatpush1.xpose.msra.mxu0 0.0
    %3618 = vmatprep.subr.mxu0 0.0
    %3619 = vmatpush1.xpose.msra.mxu0 0.0
    %3620 = vmatprep.subr.mxu0 0.0
    %3621 = vmatpush1.xpose.msra.mxu0 %v3590
    %3622 = vmatprep.subr.mxu0 0.0
    %3623 = vmatpush1.xpose.msra.mxu0 %v3588
    %3624 = vmatprep.subr.mxu0 0.0
    %3625 = vmatpush2.xpose.msra.mxu0 0.0
    %3626 = vmatprep.subr.mxu0 0.0
    %3627 = vmatpush2.xpose.msra.mxu0 0.0
    %3628 = vmatprep.subr.mxu0 0.0
    %3629 = vmatpush2.xpose.msra.mxu0 0.0
    %3630 = vmatprep.subr.mxu0 0.0
    %3631 = vmatpush2.xpose.msra.mxu0 0.0
    %3632 = vmatprep.subr.mxu0 0.0
    %3633 = vmatpush2.xpose.msra.mxu0 0.0
    %3634 = vmatprep.subr.mxu0 0.0
    %3635 = vmatpush2.xpose.msra.mxu0 0.0
    %3636 = vmatprep.subr.mxu0 0.0
    %3637 = vmatpush2.xpose.msra.mxu0 0.0
    %3638 = vmatprep.subr.mxu0 0.0
    %3639 = vmatpush2.xpose.msra.mxu0 0.0
    %3640 = vmatprep.subr.mxu0 0.0
    %3641 = vmatpush2.xpose.msra.mxu0 0.0
    %3642 = vmatprep.subr.mxu0 0.0
    %3643 = vmatpush2.xpose.msra.mxu0 0.0
    %3644 = vmatprep.subr.mxu0 0.0
    %3645 = vmatpush2.xpose.msra.mxu0 0.0
    %3646 = vmatprep.subr.mxu0 0.0
    %3647 = vmatpush2.xpose.msra.mxu0 0.0
    %3648 = vmatprep.subr.mxu0 0.0
    %3649 = vmatpush2.xpose.msra.mxu0 0.0
    %3650 = vmatprep.subr.mxu0 0.0
    %3651 = vmatpush2.xpose.msra.mxu0 0.0
    %3652 = vmatprep.subr.mxu0 0.0
    %3653 = vmatpush2.xpose.msra.mxu0 0.0
    %3654 = vmatprep.subr.mxu0 0.0
    %3655 = vmatpush2.xpose.msra.mxu0 0.0
    %3656 = vmatprep.mubr.f32.mxu0 0.0
    %3657 = vmatmul.mubr.f32.gmra.mxu0 %v3584
    %v3658 = vpop.f32.mrf.mxu0
    %v3659 = vadd.f32 0.0, %v3658
    %v3660 = vpop.f32.mrf.mxu0
    %3661 = vmatprep.mubr.f32.mxu0 0.0
    %3662 = vmatmul.mubr.f32.gmra.mxu0 %v3586
    %v3663 = vpop.f32.mrf.mxu0
    %v3664 = vadd.f32 0.0, %v3663
    %v3665 = vpop.f32.mrf.mxu0
    %3666 = vdwg.mxu0
    %v3667 = vmul.f32 %v3659, 0.35355338
    %v3668 = vmul.f32 %v3664, 0.35355338
    %v3669 = vsel %vm71, %v3667, -inf
    %3670 = vmax.xlane.f32.xlu0 %v3669
    %v3671 = vpop.xlane.xlu0 %3670
    %v3672 = vsel %vm71, %v3668, -inf
    %3673 = vmax.xlane.f32.xlu0 %v3672
    %v3674 = vpop.xlane.xlu0 %3673
    %v3675 = vsub.f32 %v3667, %v3671
    %v3676 = vsub.f32 %v3668, %v3674
    %v3677 = vmul.f32 %v3675, 1.442695
    %v3678 = vpow.pop %v3677
    %v3679 = vmul.f32 %v3676, 1.442695
    %v3680 = vpow.pop %v3679
    %v3681 = vsel %vm71, %v3678, 0.0
    %3682 = vadd.xlane.f32.xlu0 %v3681
    %v3683 = vpop.xlane.xlu0 %3682
    %v3684 = vsel %vm71, %v3680, 0.0
    %3685 = vadd.xlane.f32.xlu0 %v3684
    %v3686 = vpop.xlane.xlu0 %3685
    %v3687 = vrcp.pop %v3683
    %v3688 = vmul.f32 %v3678, %v3687
    %v3689 = vrcp.pop %v3686
    %v3690 = vmul.f32 %v3680, %v3689
    %3691 = vrot.lane.b32.xlu0 %v2532, 56
    %v3692 = vpop.permute.xlu0 %3691
    %3693 = vrot.lane.b32.xlu0 %v2537, 56
    %v3694 = vpop.permute.xlu0 %3693
    %v3698 = vsel %vm71, %v3688, 0
    %v3701 = vsel %vm71, %v3690, 0
    %3703 = vmatprep.subr.mxu0 0.0
    %3704 = vmatpush1.msra.mxu0 0.0
    %3705 = vmatprep.subr.mxu0 0.0
    %3706 = vmatpush1.msra.mxu0 0.0
    %3707 = vmatprep.subr.mxu0 0.0
    %3708 = vmatpush1.msra.mxu0 0.0
    %3709 = vmatprep.subr.mxu0 0.0
    %3710 = vmatpush1.msra.mxu0 0.0
    %3711 = vmatprep.subr.mxu0 0.0
    %3712 = vmatpush1.msra.mxu0 0.0
    %3713 = vmatprep.subr.mxu0 0.0
    %3714 = vmatpush1.msra.mxu0 0.0
    %3715 = vmatprep.subr.mxu0 0.0
    %3716 = vmatpush1.msra.mxu0 0.0
    %3717 = vmatprep.subr.mxu0 0.0
    %3718 = vmatpush1.msra.mxu0 0.0
    %3719 = vmatprep.subr.mxu0 0.0
    %3720 = vmatpush1.msra.mxu0 0.0
    %3721 = vmatprep.subr.mxu0 0.0
    %3722 = vmatpush1.msra.mxu0 0.0
    %3723 = vmatprep.subr.mxu0 0.0
    %3724 = vmatpush1.msra.mxu0 0.0
    %3725 = vmatprep.subr.mxu0 0.0
    %3726 = vmatpush1.msra.mxu0 0.0
    %3727 = vmatprep.subr.mxu0 0.0
    %3728 = vmatpush1.msra.mxu0 0.0
    %3729 = vmatprep.subr.mxu0 0.0
    %3730 = vmatpush1.msra.mxu0 0.0
    %3731 = vmatprep.subr.mxu0 0.0
    %3732 = vmatpush1.msra.mxu0 %v3694
    %3733 = vmatprep.subr.mxu0 0.0
    %3734 = vmatpush1.msra.mxu0 %v3692
    %3735 = vmatprep.subr.mxu0 0.0
    %3736 = vmatpush2.msra.mxu0 0.0
    %3737 = vmatprep.subr.mxu0 0.0
    %3738 = vmatpush2.msra.mxu0 0.0
    %3739 = vmatprep.subr.mxu0 0.0
    %3740 = vmatpush2.msra.mxu0 0.0
    %3741 = vmatprep.subr.mxu0 0.0
    %3742 = vmatpush2.msra.mxu0 0.0
    %3743 = vmatprep.subr.mxu0 0.0
    %3744 = vmatpush2.msra.mxu0 0.0
    %3745 = vmatprep.subr.mxu0 0.0
    %3746 = vmatpush2.msra.mxu0 0.0
    %3747 = vmatprep.subr.mxu0 0.0
    %3748 = vmatpush2.msra.mxu0 0.0
    %3749 = vmatprep.subr.mxu0 0.0
    %3750 = vmatpush2.msra.mxu0 0.0
    %3751 = vmatprep.subr.mxu0 0.0
    %3752 = vmatpush2.msra.mxu0 0.0
    %3753 = vmatprep.subr.mxu0 0.0
    %3754 = vmatpush2.msra.mxu0 0.0
    %3755 = vmatprep.subr.mxu0 0.0
    %3756 = vmatpush2.msra.mxu0 0.0
    %3757 = vmatprep.subr.mxu0 0.0
    %3758 = vmatpush2.msra.mxu0 0.0
    %3759 = vmatprep.subr.mxu0 0.0
    %3760 = vmatpush2.msra.mxu0 0.0
    %3761 = vmatprep.subr.mxu0 0.0
    %3762 = vmatpush2.msra.mxu0 0.0
    %3763 = vmatprep.subr.mxu0 0.0
    %3764 = vmatpush2.msra.mxu0 0.0
    %3765 = vmatprep.subr.mxu0 0.0
    %3766 = vmatpush2.msra.mxu0 0.0
    %3767 = vmatprep.mubr.f32.mxu0 0.0
    %3768 = vmatmul.mubr.f32.gmra.mxu0 %v3698
    %v3769 = vpop.f32.mrf.mxu0
    %v3770 = vadd.f32 0.0, %v3769
    %v3771 = vpop.f32.mrf.mxu0
    %3772 = vmatprep.mubr.f32.mxu0 0.0
    %3773 = vmatmul.mubr.f32.gmra.mxu0 %v3701
    %v3774 = vpop.f32.mrf.mxu0
    %v3775 = vadd.f32 0.0, %v3774
    %v3776 = vpop.f32.mrf.mxu0
    %3777 = vdwg.mxu0
    %3778 = vrot.lane.b32.xlu0 %v2532, 112
    %v3779 = vpop.permute.xlu0 %3778
    %3780 = vrot.lane.b32.xlu0 %v2537, 112
    %v3781 = vpop.permute.xlu0 %3780
    %3782 = vrot.lane.b32.xlu0 %v2532, 80
    %v3783 = vpop.permute.xlu0 %3782
    %3784 = vrot.lane.b32.xlu0 %v2537, 80
    %v3785 = vpop.permute.xlu0 %3784
    %v3786 = vsel %vm277, %v3779, 0
    %v3788 = vsel %vm277, %v3781, 0
    %v3790 = vsel %vm277, %v3783, 0
    %v3792 = vsel %vm277, %v3785, 0
    %3794 = vmatprep.subr.mxu0 0.0
    %3795 = vmatpush1.xpose.msra.mxu0 0.0
    %3796 = vmatprep.subr.mxu0 0.0
    %3797 = vmatpush1.xpose.msra.mxu0 0.0
    %3798 = vmatprep.subr.mxu0 0.0
    %3799 = vmatpush1.xpose.msra.mxu0 0.0
    %3800 = vmatprep.subr.mxu0 0.0
    %3801 = vmatpush1.xpose.msra.mxu0 0.0
    %3802 = vmatprep.subr.mxu0 0.0
    %3803 = vmatpush1.xpose.msra.mxu0 0.0
    %3804 = vmatprep.subr.mxu0 0.0
    %3805 = vmatpush1.xpose.msra.mxu0 0.0
    %3806 = vmatprep.subr.mxu0 0.0
    %3807 = vmatpush1.xpose.msra.mxu0 0.0
    %3808 = vmatprep.subr.mxu0 0.0
    %3809 = vmatpush1.xpose.msra.mxu0 0.0
    %3810 = vmatprep.subr.mxu0 0.0
    %3811 = vmatpush1.xpose.msra.mxu0 0.0
    %3812 = vmatprep.subr.mxu0 0.0
    %3813 = vmatpush1.xpose.msra.mxu0 0.0
    %3814 = vmatprep.subr.mxu0 0.0
    %3815 = vmatpush1.xpose.msra.mxu0 0.0
    %3816 = vmatprep.subr.mxu0 0.0
    %3817 = vmatpush1.xpose.msra.mxu0 0.0
    %3818 = vmatprep.subr.mxu0 0.0
    %3819 = vmatpush1.xpose.msra.mxu0 0.0
    %3820 = vmatprep.subr.mxu0 0.0
    %3821 = vmatpush1.xpose.msra.mxu0 0.0
    %3822 = vmatprep.subr.mxu0 0.0
    %3823 = vmatpush1.xpose.msra.mxu0 %v3792
    %3824 = vmatprep.subr.mxu0 0.0
    %3825 = vmatpush1.xpose.msra.mxu0 %v3790
    %3826 = vmatprep.subr.mxu0 0.0
    %3827 = vmatpush2.xpose.msra.mxu0 0.0
    %3828 = vmatprep.subr.mxu0 0.0
    %3829 = vmatpush2.xpose.msra.mxu0 0.0
    %3830 = vmatprep.subr.mxu0 0.0
    %3831 = vmatpush2.xpose.msra.mxu0 0.0
    %3832 = vmatprep.subr.mxu0 0.0
    %3833 = vmatpush2.xpose.msra.mxu0 0.0
    %3834 = vmatprep.subr.mxu0 0.0
    %3835 = vmatpush2.xpose.msra.mxu0 0.0
    %3836 = vmatprep.subr.mxu0 0.0
    %3837 = vmatpush2.xpose.msra.mxu0 0.0
    %3838 = vmatprep.subr.mxu0 0.0
    %3839 = vmatpush2.xpose.msra.mxu0 0.0
    %3840 = vmatprep.subr.mxu0 0.0
    %3841 = vmatpush2.xpose.msra.mxu0 0.0
    %3842 = vmatprep.subr.mxu0 0.0
    %3843 = vmatpush2.xpose.msra.mxu0 0.0
    %3844 = vmatprep.subr.mxu0 0.0
    %3845 = vmatpush2.xpose.msra.mxu0 0.0
    %3846 = vmatprep.subr.mxu0 0.0
    %3847 = vmatpush2.xpose.msra.mxu0 0.0
    %3848 = vmatprep.subr.mxu0 0.0
    %3849 = vmatpush2.xpose.msra.mxu0 0.0
    %3850 = vmatprep.subr.mxu0 0.0
    %3851 = vmatpush2.xpose.msra.mxu0 0.0
    %3852 = vmatprep.subr.mxu0 0.0
    %3853 = vmatpush2.xpose.msra.mxu0 0.0
    %3854 = vmatprep.subr.mxu0 0.0
    %3855 = vmatpush2.xpose.msra.mxu0 0.0
    %3856 = vmatprep.subr.mxu0 0.0
    %3857 = vmatpush2.xpose.msra.mxu0 0.0
    %3858 = vmatprep.mubr.f32.mxu0 0.0
    %3859 = vmatmul.mubr.f32.gmra.mxu0 %v3786
    %v3860 = vpop.f32.mrf.mxu0
    %v3861 = vadd.f32 0.0, %v3860
    %v3862 = vpop.f32.mrf.mxu0
    %3863 = vmatprep.mubr.f32.mxu0 0.0
    %3864 = vmatmul.mubr.f32.gmra.mxu0 %v3788
    %v3865 = vpop.f32.mrf.mxu0
    %v3866 = vadd.f32 0.0, %v3865
    %v3867 = vpop.f32.mrf.mxu0
    %3868 = vdwg.mxu0
    %v3869 = vmul.f32 %v3861, 0.35355338
    %v3870 = vmul.f32 %v3866, 0.35355338
    %v3871 = vsel %vm71, %v3869, -inf
    %3872 = vmax.xlane.f32.xlu0 %v3871
    %v3873 = vpop.xlane.xlu0 %3872
    %v3874 = vsel %vm71, %v3870, -inf
    %3875 = vmax.xlane.f32.xlu0 %v3874
    %v3876 = vpop.xlane.xlu0 %3875
    %v3877 = vsub.f32 %v3869, %v3873
    %v3878 = vsub.f32 %v3870, %v3876
    %v3879 = vmul.f32 %v3877, 1.442695
    %v3880 = vpow.pop %v3879
    %v3881 = vmul.f32 %v3878, 1.442695
    %v3882 = vpow.pop %v3881
    %v3883 = vsel %vm71, %v3880, 0.0
    %3884 = vadd.xlane.f32.xlu0 %v3883
    %v3885 = vpop.xlane.xlu0 %3884
    %v3886 = vsel %vm71, %v3882, 0.0
    %3887 = vadd.xlane.f32.xlu0 %v3886
    %v3888 = vpop.xlane.xlu0 %3887
    %v3889 = vrcp.pop %v3885
    %v3890 = vmul.f32 %v3880, %v3889
    %v3891 = vrcp.pop %v3888
    %v3892 = vmul.f32 %v3882, %v3891
    %3893 = vrot.lane.b32.xlu0 %v2532, 48
    %v3894 = vpop.permute.xlu0 %3893
    %3895 = vrot.lane.b32.xlu0 %v2537, 48
    %v3896 = vpop.permute.xlu0 %3895
    %v3900 = vsel %vm71, %v3890, 0
    %v3903 = vsel %vm71, %v3892, 0
    %3905 = vmatprep.subr.mxu0 0.0
    %3906 = vmatpush1.msra.mxu0 0.0
    %3907 = vmatprep.subr.mxu0 0.0
    %3908 = vmatpush1.msra.mxu0 0.0
    %3909 = vmatprep.subr.mxu0 0.0
    %3910 = vmatpush1.msra.mxu0 0.0
    %3911 = vmatprep.subr.mxu0 0.0
    %3912 = vmatpush1.msra.mxu0 0.0
    %3913 = vmatprep.subr.mxu0 0.0
    %3914 = vmatpush1.msra.mxu0 0.0
    %3915 = vmatprep.subr.mxu0 0.0
    %3916 = vmatpush1.msra.mxu0 0.0
    %3917 = vmatprep.subr.mxu0 0.0
    %3918 = vmatpush1.msra.mxu0 0.0
    %3919 = vmatprep.subr.mxu0 0.0
    %3920 = vmatpush1.msra.mxu0 0.0
    %3921 = vmatprep.subr.mxu0 0.0
    %3922 = vmatpush1.msra.mxu0 0.0
    %3923 = vmatprep.subr.mxu0 0.0
    %3924 = vmatpush1.msra.mxu0 0.0
    %3925 = vmatprep.subr.mxu0 0.0
    %3926 = vmatpush1.msra.mxu0 0.0
    %3927 = vmatprep.subr.mxu0 0.0
    %3928 = vmatpush1.msra.mxu0 0.0
    %3929 = vmatprep.subr.mxu0 0.0
    %3930 = vmatpush1.msra.mxu0 0.0
    %3931 = vmatprep.subr.mxu0 0.0
    %3932 = vmatpush1.msra.mxu0 0.0
    %3933 = vmatprep.subr.mxu0 0.0
    %3934 = vmatpush1.msra.mxu0 %v3896
    %3935 = vmatprep.subr.mxu0 0.0
    %3936 = vmatpush1.msra.mxu0 %v3894
    %3937 = vmatprep.subr.mxu0 0.0
    %3938 = vmatpush2.msra.mxu0 0.0
    %3939 = vmatprep.subr.mxu0 0.0
    %3940 = vmatpush2.msra.mxu0 0.0
    %3941 = vmatprep.subr.mxu0 0.0
    %3942 = vmatpush2.msra.mxu0 0.0
    %3943 = vmatprep.subr.mxu0 0.0
    %3944 = vmatpush2.msra.mxu0 0.0
    %3945 = vmatprep.subr.mxu0 0.0
    %3946 = vmatpush2.msra.mxu0 0.0
    %3947 = vmatprep.subr.mxu0 0.0
    %3948 = vmatpush2.msra.mxu0 0.0
    %3949 = vmatprep.subr.mxu0 0.0
    %3950 = vmatpush2.msra.mxu0 0.0
    %3951 = vmatprep.subr.mxu0 0.0
    %3952 = vmatpush2.msra.mxu0 0.0
    %3953 = vmatprep.subr.mxu0 0.0
    %3954 = vmatpush2.msra.mxu0 0.0
    %3955 = vmatprep.subr.mxu0 0.0
    %3956 = vmatpush2.msra.mxu0 0.0
    %3957 = vmatprep.subr.mxu0 0.0
    %3958 = vmatpush2.msra.mxu0 0.0
    %3959 = vmatprep.subr.mxu0 0.0
    %3960 = vmatpush2.msra.mxu0 0.0
    %3961 = vmatprep.subr.mxu0 0.0
    %3962 = vmatpush2.msra.mxu0 0.0
    %3963 = vmatprep.subr.mxu0 0.0
    %3964 = vmatpush2.msra.mxu0 0.0
    %3965 = vmatprep.subr.mxu0 0.0
    %3966 = vmatpush2.msra.mxu0 0.0
    %3967 = vmatprep.subr.mxu0 0.0
    %3968 = vmatpush2.msra.mxu0 0.0
    %3969 = vmatprep.mubr.f32.mxu0 0.0
    %3970 = vmatmul.mubr.f32.gmra.mxu0 %v3900
    %v3971 = vpop.f32.mrf.mxu0
    %v3972 = vadd.f32 0.0, %v3971
    %v3973 = vpop.f32.mrf.mxu0
    %3974 = vmatprep.mubr.f32.mxu0 0.0
    %3975 = vmatmul.mubr.f32.gmra.mxu0 %v3903
    %v3976 = vpop.f32.mrf.mxu0
    %v3977 = vadd.f32 0.0, %v3976
    %v3978 = vpop.f32.mrf.mxu0
    %3979 = vdwg.mxu0
    %3980 = vrot.lane.b32.xlu0 %v2532, 104
    %v3981 = vpop.permute.xlu0 %3980
    %3982 = vrot.lane.b32.xlu0 %v2537, 104
    %v3983 = vpop.permute.xlu0 %3982
    %3984 = vrot.lane.b32.xlu0 %v2532, 72
    %v3985 = vpop.permute.xlu0 %3984
    %3986 = vrot.lane.b32.xlu0 %v2537, 72
    %v3987 = vpop.permute.xlu0 %3986
    %v3988 = vsel %vm277, %v3981, 0
    %v3990 = vsel %vm277, %v3983, 0
    %v3992 = vsel %vm277, %v3985, 0
    %v3994 = vsel %vm277, %v3987, 0
    %3996 = vmatprep.subr.mxu0 0.0
    %3997 = vmatpush1.xpose.msra.mxu0 0.0
    %3998 = vmatprep.subr.mxu0 0.0
    %3999 = vmatpush1.xpose.msra.mxu0 0.0
    %4000 = vmatprep.subr.mxu0 0.0
    %4001 = vmatpush1.xpose.msra.mxu0 0.0
    %4002 = vmatprep.subr.mxu0 0.0
    %4003 = vmatpush1.xpose.msra.mxu0 0.0
    %4004 = vmatprep.subr.mxu0 0.0
    %4005 = vmatpush1.xpose.msra.mxu0 0.0
    %4006 = vmatprep.subr.mxu0 0.0
    %4007 = vmatpush1.xpose.msra.mxu0 0.0
    %4008 = vmatprep.subr.mxu0 0.0
    %4009 = vmatpush1.xpose.msra.mxu0 0.0
    %4010 = vmatprep.subr.mxu0 0.0
    %4011 = vmatpush1.xpose.msra.mxu0 0.0
    %4012 = vmatprep.subr.mxu0 0.0
    %4013 = vmatpush1.xpose.msra.mxu0 0.0
    %4014 = vmatprep.subr.mxu0 0.0
    %4015 = vmatpush1.xpose.msra.mxu0 0.0
    %4016 = vmatprep.subr.mxu0 0.0
    %4017 = vmatpush1.xpose.msra.mxu0 0.0
    %4018 = vmatprep.subr.mxu0 0.0
    %4019 = vmatpush1.xpose.msra.mxu0 0.0
    %4020 = vmatprep.subr.mxu0 0.0
    %4021 = vmatpush1.xpose.msra.mxu0 0.0
    %4022 = vmatprep.subr.mxu0 0.0
    %4023 = vmatpush1.xpose.msra.mxu0 0.0
    %4024 = vmatprep.subr.mxu0 0.0
    %4025 = vmatpush1.xpose.msra.mxu0 %v3994
    %4026 = vmatprep.subr.mxu0 0.0
    %4027 = vmatpush1.xpose.msra.mxu0 %v3992
    %4028 = vmatprep.subr.mxu0 0.0
    %4029 = vmatpush2.xpose.msra.mxu0 0.0
    %4030 = vmatprep.subr.mxu0 0.0
    %4031 = vmatpush2.xpose.msra.mxu0 0.0
    %4032 = vmatprep.subr.mxu0 0.0
    %4033 = vmatpush2.xpose.msra.mxu0 0.0
    %4034 = vmatprep.subr.mxu0 0.0
    %4035 = vmatpush2.xpose.msra.mxu0 0.0
    %4036 = vmatprep.subr.mxu0 0.0
    %4037 = vmatpush2.xpose.msra.mxu0 0.0
    %4038 = vmatprep.subr.mxu0 0.0
    %4039 = vmatpush2.xpose.msra.mxu0 0.0
    %4040 = vmatprep.subr.mxu0 0.0
    %4041 = vmatpush2.xpose.msra.mxu0 0.0
    %4042 = vmatprep.subr.mxu0 0.0
    %4043 = vmatpush2.xpose.msra.mxu0 0.0
    %4044 = vmatprep.subr.mxu0 0.0
    %4045 = vmatpush2.xpose.msra.mxu0 0.0
    %4046 = vmatprep.subr.mxu0 0.0
    %4047 = vmatpush2.xpose.msra.mxu0 0.0
    %4048 = vmatprep.subr.mxu0 0.0
    %4049 = vmatpush2.xpose.msra.mxu0 0.0
    %4050 = vmatprep.subr.mxu0 0.0
    %4051 = vmatpush2.xpose.msra.mxu0 0.0
    %4052 = vmatprep.subr.mxu0 0.0
    %4053 = vmatpush2.xpose.msra.mxu0 0.0
    %4054 = vmatprep.subr.mxu0 0.0
    %4055 = vmatpush2.xpose.msra.mxu0 0.0
    %4056 = vmatprep.subr.mxu0 0.0
    %4057 = vmatpush2.xpose.msra.mxu0 0.0
    %4058 = vmatprep.subr.mxu0 0.0
    %4059 = vmatpush2.xpose.msra.mxu0 0.0
    %4060 = vmatprep.mubr.f32.mxu0 0.0
    %4061 = vmatmul.mubr.f32.gmra.mxu0 %v3988
    %v4062 = vpop.f32.mrf.mxu0
    %v4063 = vadd.f32 0.0, %v4062
    %v4064 = vpop.f32.mrf.mxu0
    %4065 = vmatprep.mubr.f32.mxu0 0.0
    %4066 = vmatmul.mubr.f32.gmra.mxu0 %v3990
    %v4067 = vpop.f32.mrf.mxu0
    %v4068 = vadd.f32 0.0, %v4067
    %v4069 = vpop.f32.mrf.mxu0
    %4070 = vdwg.mxu0
    %v4071 = vmul.f32 %v4063, 0.35355338
    %v4072 = vmul.f32 %v4068, 0.35355338
    %v4073 = vsel %vm71, %v4071, -inf
    %4074 = vmax.xlane.f32.xlu0 %v4073
    %v4075 = vpop.xlane.xlu0 %4074
    %v4076 = vsel %vm71, %v4072, -inf
    %4077 = vmax.xlane.f32.xlu0 %v4076
    %v4078 = vpop.xlane.xlu0 %4077
    %v4079 = vsub.f32 %v4071, %v4075
    %v4080 = vsub.f32 %v4072, %v4078
    %v4081 = vmul.f32 %v4079, 1.442695
    %v4082 = vpow.pop %v4081
    %v4083 = vmul.f32 %v4080, 1.442695
    %v4084 = vpow.pop %v4083
    %v4085 = vsel %vm71, %v4082, 0.0
    %4086 = vadd.xlane.f32.xlu0 %v4085
    %v4087 = vpop.xlane.xlu0 %4086
    %v4088 = vsel %vm71, %v4084, 0.0
    %4089 = vadd.xlane.f32.xlu0 %v4088
    %v4090 = vpop.xlane.xlu0 %4089
    %v4091 = vrcp.pop %v4087
    %v4092 = vmul.f32 %v4082, %v4091
    %v4093 = vrcp.pop %v4090
    %v4094 = vmul.f32 %v4084, %v4093
    %4095 = vrot.lane.b32.xlu0 %v2532, 40
    %v4096 = vpop.permute.xlu0 %4095
    %4097 = vrot.lane.b32.xlu0 %v2537, 40
    %v4098 = vpop.permute.xlu0 %4097
    %v4102 = vsel %vm71, %v4092, 0
    %v4105 = vsel %vm71, %v4094, 0
    %4107 = vmatprep.subr.mxu0 0.0
    %4108 = vmatpush1.msra.mxu0 0.0
    %4109 = vmatprep.subr.mxu0 0.0
    %4110 = vmatpush1.msra.mxu0 0.0
    %4111 = vmatprep.subr.mxu0 0.0
    %4112 = vmatpush1.msra.mxu0 0.0
    %4113 = vmatprep.subr.mxu0 0.0
    %4114 = vmatpush1.msra.mxu0 0.0
    %4115 = vmatprep.subr.mxu0 0.0
    %4116 = vmatpush1.msra.mxu0 0.0
    %4117 = vmatprep.subr.mxu0 0.0
    %4118 = vmatpush1.msra.mxu0 0.0
    %4119 = vmatprep.subr.mxu0 0.0
    %4120 = vmatpush1.msra.mxu0 0.0
    %4121 = vmatprep.subr.mxu0 0.0
    %4122 = vmatpush1.msra.mxu0 0.0
    %4123 = vmatprep.subr.mxu0 0.0
    %4124 = vmatpush1.msra.mxu0 0.0
    %4125 = vmatprep.subr.mxu0 0.0
    %4126 = vmatpush1.msra.mxu0 0.0
    %4127 = vmatprep.subr.mxu0 0.0
    %4128 = vmatpush1.msra.mxu0 0.0
    %4129 = vmatprep.subr.mxu0 0.0
    %4130 = vmatpush1.msra.mxu0 0.0
    %4131 = vmatprep.subr.mxu0 0.0
    %4132 = vmatpush1.msra.mxu0 0.0
    %4133 = vmatprep.subr.mxu0 0.0
    %4134 = vmatpush1.msra.mxu0 0.0
    %4135 = vmatprep.subr.mxu0 0.0
    %4136 = vmatpush1.msra.mxu0 %v4098
    %4137 = vmatprep.subr.mxu0 0.0
    %4138 = vmatpush1.msra.mxu0 %v4096
    %4139 = vmatprep.subr.mxu0 0.0
    %4140 = vmatpush2.msra.mxu0 0.0
    %4141 = vmatprep.subr.mxu0 0.0
    %4142 = vmatpush2.msra.mxu0 0.0
    %4143 = vmatprep.subr.mxu0 0.0
    %4144 = vmatpush2.msra.mxu0 0.0
    %4145 = vmatprep.subr.mxu0 0.0
    %4146 = vmatpush2.msra.mxu0 0.0
    %4147 = vmatprep.subr.mxu0 0.0
    %4148 = vmatpush2.msra.mxu0 0.0
    %4149 = vmatprep.subr.mxu0 0.0
    %4150 = vmatpush2.msra.mxu0 0.0
    %4151 = vmatprep.subr.mxu0 0.0
    %4152 = vmatpush2.msra.mxu0 0.0
    %4153 = vmatprep.subr.mxu0 0.0
    %4154 = vmatpush2.msra.mxu0 0.0
    %4155 = vmatprep.subr.mxu0 0.0
    %4156 = vmatpush2.msra.mxu0 0.0
    %4157 = vmatprep.subr.mxu0 0.0
    %4158 = vmatpush2.msra.mxu0 0.0
    %4159 = vmatprep.subr.mxu0 0.0
    %4160 = vmatpush2.msra.mxu0 0.0
    %4161 = vmatprep.subr.mxu0 0.0
    %4162 = vmatpush2.msra.mxu0 0.0
    %4163 = vmatprep.subr.mxu0 0.0
    %4164 = vmatpush2.msra.mxu0 0.0
    %4165 = vmatprep.subr.mxu0 0.0
    %4166 = vmatpush2.msra.mxu0 0.0
    %4167 = vmatprep.subr.mxu0 0.0
    %4168 = vmatpush2.msra.mxu0 0.0
    %4169 = vmatprep.subr.mxu0 0.0
    %4170 = vmatpush2.msra.mxu0 0.0
    %4171 = vmatprep.mubr.f32.mxu0 0.0
    %4172 = vmatmul.mubr.f32.gmra.mxu0 %v4102
    %v4173 = vpop.f32.mrf.mxu0
    %v4174 = vadd.f32 0.0, %v4173
    %v4175 = vpop.f32.mrf.mxu0
    %4176 = vmatprep.mubr.f32.mxu0 0.0
    %4177 = vmatmul.mubr.f32.gmra.mxu0 %v4105
    %v4178 = vpop.f32.mrf.mxu0
    %v4179 = vadd.f32 0.0, %v4178
    %v4180 = vpop.f32.mrf.mxu0
    %4181 = vdwg.mxu0
    %4184 = vrot.lane.b32.xlu0 %v3770, 8
    %v4185 = vpop.permute.xlu0 %4184
    %4186 = vrot.lane.b32.xlu0 %v3775, 8
    %v4187 = vpop.permute.xlu0 %4186
    %4192 = vrot.lane.b32.xlu0 %v3972, 16
    %v4193 = vpop.permute.xlu0 %4192
    %4194 = vrot.lane.b32.xlu0 %v3977, 16
    %v4195 = vpop.permute.xlu0 %4194
    %4200 = vrot.lane.b32.xlu0 %v4174, 24
    %v4201 = vpop.permute.xlu0 %4200
    %4202 = vrot.lane.b32.xlu0 %v4179, 24
    %v4203 = vpop.permute.xlu0 %4202
    %v4206 = vsel %vm277, %v3568, %v4185
    %v4207 = vsel %vm277, %v3573, %v4187
    %v4208 = vsel %vm71, %v4206, %v4193
    %v4209 = vsel %vm71, %v4207, %v4195
    %v4210 = vsel %vm1106, %v4208, %v4201
    %v4211 = vsel %vm1106, %v4209, %v4203
    %s4212 = scalar_lea.vmem %s6, 32
    %v4213 = vld [vmem:[%s4212] sm:$0xff]
    %v4214 = vld [vmem:[%s4212 + $0x8] sm:$0xff]
    %v4215 = vld [vmem:[%s4212 + $0x10] sm:$0xff]
    %v4216 = vld [vmem:[%s4212 + $0x18] sm:$0xff]
    %s4217 = scalar_lea.vmem %s7, 1
    %v4218 = vld [vmem:[%s4217] sm:$0x1]
    %v4220 = vlaneseq
    %v4221 = vshrl.u32 %v4220, 7
    %v4222 = vsub.s32 0, %v4221
    %v4223 = vrot.slane %v4218, %v4222
    %v4226 = vsel %vm154, %v3374, 0
    %v4229 = vsel %vm154, %v3375, 0
    %v4232 = vsel %vm154, %v4210, 0
    %v4235 = vsel %vm154, %v4211, 0
    %4237 = vmatprep.subr.mxu0 0.0
    %4238 = vmatpush1.msra.mxu0 0.0
    %4239 = vmatprep.subr.mxu0 0.0
    %4240 = vmatpush1.msra.mxu0 0.0
    %4241 = vmatprep.subr.mxu0 0.0
    %4242 = vmatpush1.msra.mxu0 0.0
    %4243 = vmatprep.subr.mxu0 0.0
    %4244 = vmatpush1.msra.mxu0 0.0
    %4245 = vmatprep.subr.mxu0 0.0
    %4246 = vmatpush1.msra.mxu0 0.0
    %4247 = vmatprep.subr.mxu0 0.0
    %4248 = vmatpush1.msra.mxu0 0.0
    %4249 = vmatprep.subr.mxu0 0.0
    %4250 = vmatpush1.msra.mxu0 0.0
    %4251 = vmatprep.subr.mxu0 0.0
    %4252 = vmatpush1.msra.mxu0 0.0
    %4253 = vmatprep.subr.mxu0 0.0
    %4254 = vmatpush1.msra.mxu0 0.0
    %4255 = vmatprep.subr.mxu0 0.0
    %4256 = vmatpush1.msra.mxu0 0.0
    %4257 = vmatprep.subr.mxu0 0.0
    %4258 = vmatpush1.msra.mxu0 0.0
    %4259 = vmatprep.subr.mxu0 0.0
    %4260 = vmatpush1.msra.mxu0 0.0
    %4261 = vmatprep.subr.mxu0 0.0
    %4262 = vmatpush1.msra.mxu0 %v4216
    %4263 = vmatprep.subr.mxu0 0.0
    %4264 = vmatpush1.msra.mxu0 %v4215
    %4265 = vmatprep.subr.mxu0 0.0
    %4266 = vmatpush1.msra.mxu0 %v4214
    %4267 = vmatprep.subr.mxu0 0.0
    %4268 = vmatpush1.msra.mxu0 %v4213
    %4269 = vmatprep.subr.mxu0 0.0
    %4270 = vmatpush2.msra.mxu0 0.0
    %4271 = vmatprep.subr.mxu0 0.0
    %4272 = vmatpush2.msra.mxu0 0.0
    %4273 = vmatprep.subr.mxu0 0.0
    %4274 = vmatpush2.msra.mxu0 0.0
    %4275 = vmatprep.subr.mxu0 0.0
    %4276 = vmatpush2.msra.mxu0 0.0
    %4277 = vmatprep.subr.mxu0 0.0
    %4278 = vmatpush2.msra.mxu0 0.0
    %4279 = vmatprep.subr.mxu0 0.0
    %4280 = vmatpush2.msra.mxu0 0.0
    %4281 = vmatprep.subr.mxu0 0.0
    %4282 = vmatpush2.msra.mxu0 0.0
    %4283 = vmatprep.subr.mxu0 0.0
    %4284 = vmatpush2.msra.mxu0 0.0
    %4285 = vmatprep.subr.mxu0 0.0
    %4286 = vmatpush2.msra.mxu0 0.0
    %4287 = vmatprep.subr.mxu0 0.0
    %4288 = vmatpush2.msra.mxu0 0.0
    %4289 = vmatprep.subr.mxu0 0.0
    %4290 = vmatpush2.msra.mxu0 0.0
    %4291 = vmatprep.subr.mxu0 0.0
    %4292 = vmatpush2.msra.mxu0 0.0
    %4293 = vmatprep.subr.mxu0 0.0
    %4294 = vmatpush2.msra.mxu0 0.0
    %4295 = vmatprep.subr.mxu0 0.0
    %4296 = vmatpush2.msra.mxu0 0.0
    %4297 = vmatprep.subr.mxu0 0.0
    %4298 = vmatpush2.msra.mxu0 0.0
    %4299 = vmatprep.subr.mxu0 0.0
    %4300 = vmatpush2.msra.mxu0 0.0
    %4301 = vmatprep.mubr.f32.mxu0 0.0
    %4302 = vmatmul.mubr.f32.gmra.mxu0 %v4226
    %v4303 = vpop.f32.mrf.mxu0
    %v4304 = vadd.f32 %v4223, %v4303
    %v4305 = vpop.f32.mrf.mxu0
    %4306 = vmatprep.mubr.f32.mxu0 0.0
    %4307 = vmatmul.mubr.f32.gmra.mxu0 %v4229
    %v4308 = vpop.f32.mrf.mxu0
    %v4309 = vadd.f32 %v4223, %v4308
    %v4310 = vpop.f32.mrf.mxu0
    %4311 = vmatprep.mubr.f32.mxu0 0.0
    %4312 = vmatmul.mubr.f32.gmra.mxu0 %v4232
    %v4313 = vpop.f32.mrf.mxu0
    %v4314 = vadd.f32 %v4223, %v4313
    %v4315 = vpop.f32.mrf.mxu0
    %4316 = vmatprep.mubr.f32.mxu0 0.0
    %4317 = vmatmul.mubr.f32.gmra.mxu0 %v4235
    %v4318 = vpop.f32.mrf.mxu0
    %v4319 = vadd.f32 %v4223, %v4318
    %v4320 = vpop.f32.mrf.mxu0
    %4321 = vdwg.mxu0
    %v4322 = vadd.f32 %v2426, %v4304
    %v4323 = vadd.f32 %v2427, %v4309
    %v4324 = vadd.f32 %v2428, %v4314
    %v4325 = vadd.f32 %v2429, %v4319
    %s4326 = scalar_lea.vmem %s8, 1
    %v4327 = vld [vmem:[%s4326] sm:$0x1]
    %s4328 = scalar_lea.vmem %s9, 1
    %v4329 = vld [vmem:[%s4328] sm:$0x1]
    %v4330 = vsel %vm154, %v4322, 0.0
    %4331 = vadd.xlane.f32.xlu0 %v4330
    %v4332 = vpop.xlane.xlu0 %4331
    %v4333 = vsel %vm154, %v4323, 0.0
    %4334 = vadd.xlane.f32.xlu0 %v4333
    %v4335 = vpop.xlane.xlu0 %4334
    %v4336 = vsel %vm154, %v4324, 0.0
    %4337 = vadd.xlane.f32.xlu0 %v4336
    %v4338 = vpop.xlane.xlu0 %4337
    %v4339 = vsel %vm154, %v4325, 0.0
    %4340 = vadd.xlane.f32.xlu0 %v4339
    %v4341 = vpop.xlane.xlu0 %4340
    %v4342 = vmul.f32 %v4332, %v2071
    %v4343 = vmul.f32 %v4335, %v2071
    %v4344 = vmul.f32 %v4338, %v2071
    %v4345 = vmul.f32 %v4341, %v2071
    %v4346 = vsub.f32 %v4322, %v4342
    %v4347 = vsub.f32 %v4323, %v4343
    %v4348 = vsub.f32 %v4324, %v4344
    %v4349 = vsub.f32 %v4325, %v4345
    %v4350 = vmul.f32 %v4346, %v4346
    %v4351 = vmul.f32 %v4347, %v4347
    %v4352 = vmul.f32 %v4348, %v4348
    %v4353 = vmul.f32 %v4349, %v4349
    %v4354 = vsel %vm154, %v4350, 0.0
    %4355 = vadd.xlane.f32.xlu0 %v4354
    %v4356 = vpop.xlane.xlu0 %4355
    %v4357 = vsel %vm154, %v4351, 0.0
    %4358 = vadd.xlane.f32.xlu0 %v4357
    %v4359 = vpop.xlane.xlu0 %4358
    %v4360 = vsel %vm154, %v4352, 0.0
    %4361 = vadd.xlane.f32.xlu0 %v4360
    %v4362 = vpop.xlane.xlu0 %4361
    %v4363 = vsel %vm154, %v4353, 0.0
    %4364 = vadd.xlane.f32.xlu0 %v4363
    %v4365 = vpop.xlane.xlu0 %4364
    %v4366 = vmul.f32 %v4356, %v2071
    %v4367 = vmul.f32 %v4359, %v2071
    %v4368 = vmul.f32 %v4362, %v2071
    %v4369 = vmul.f32 %v4365, %v2071
    %v4370 = vadd.f32 %v4366, 1e-05
    %v4371 = vadd.f32 %v4367, 1e-05
    %v4372 = vadd.f32 %v4368, 1e-05
    %v4373 = vadd.f32 %v4369, 1e-05
    %v4374 = vrsqrt.pop %v4370
    %v4375 = vrsqrt.pop %v4371
    %v4376 = vrsqrt.pop %v4372
    %v4377 = vrsqrt.pop %v4373
    %v4378 = vmul.f32 %v4346, %v4374
    %v4379 = vmul.f32 %v4347, %v4375
    %v4380 = vmul.f32 %v4348, %v4376
    %v4381 = vmul.f32 %v4349, %v4377
    %v4383 = vlaneseq
    %v4384 = vshrl.u32 %v4383, 7
    %v4385 = vsub.s32 0, %v4384
    %v4386 = vrot.slane %v4327, %v4385
    %v4388 = vmul.f32 %v4378, %v4386
    %v4389 = vmul.f32 %v4379, %v4386
    %v4390 = vmul.f32 %v4380, %v4386
    %v4391 = vmul.f32 %v4381, %v4386
    %v4393 = vlaneseq
    %v4394 = vshrl.u32 %v4393, 7
    %v4395 = vsub.s32 0, %v4394
    %v4396 = vrot.slane %v4329, %v4395
    %v4398 = vadd.f32 %v4388, %v4396
    %v4399 = vadd.f32 %v4389, %v4396
    %v4400 = vadd.f32 %v4390, %v4396
    %v4401 = vadd.f32 %v4391, %v4396
    %s4402 = scalar_lea.vmem %s10, 32
    %v4403 = vld [vmem:[%s4402] sm:$0xff]
    %v4404 = vld [vmem:[%s4402 + $0x8] sm:$0xff]
    %v4405 = vld [vmem:[%s4402 + $0x10] sm:$0xff]
    %v4406 = vld [vmem:[%s4402 + $0x18] sm:$0xff]
    %s4407 = scalar_lea.vmem %s11, 1
    %v4408 = vld [vmem:[%s4407] sm:$0x1]
    %v4410 = vlaneseq
    %v4411 = vshrl.u32 %v4410, 7
    %v4412 = vsub.s32 0, %v4411
    %v4413 = vrot.slane %v4408, %v4412
    %v4416 = vsel %vm154, %v4398, 0
    %v4419 = vsel %vm154, %v4399, 0
    %v4422 = vsel %vm154, %v4400, 0
    %v4425 = vsel %vm154, %v4401, 0
    %4427 = vmatprep.subr.mxu0 0.0
    %4428 = vmatpush1.msra.mxu0 0.0
    %4429 = vmatprep.subr.mxu0 0.0
    %4430 = vmatpush1.msra.mxu0 0.0
    %4431 = vmatprep.subr.mxu0 0.0
    %4432 = vmatpush1.msra.mxu0 0.0
    %4433 = vmatprep.subr.mxu0 0.0
    %4434 = vmatpush1.msra.mxu0 0.0
    %4435 = vmatprep.subr.mxu0 0.0
    %4436 = vmatpush1.msra.mxu0 0.0
    %4437 = vmatprep.subr.mxu0 0.0
    %4438 = vmatpush1.msra.mxu0 0.0
    %4439 = vmatprep.subr.mxu0 0.0
    %4440 = vmatpush1.msra.mxu0 0.0
    %4441 = vmatprep.subr.mxu0 0.0
    %4442 = vmatpush1.msra.mxu0 0.0
    %4443 = vmatprep.subr.mxu0 0.0
    %4444 = vmatpush1.msra.mxu0 0.0
    %4445 = vmatprep.subr.mxu0 0.0
    %4446 = vmatpush1.msra.mxu0 0.0
    %4447 = vmatprep.subr.mxu0 0.0
    %4448 = vmatpush1.msra.mxu0 0.0
    %4449 = vmatprep.subr.mxu0 0.0
    %4450 = vmatpush1.msra.mxu0 0.0
    %4451 = vmatprep.subr.mxu0 0.0
    %4452 = vmatpush1.msra.mxu0 %v4406
    %4453 = vmatprep.subr.mxu0 0.0
    %4454 = vmatpush1.msra.mxu0 %v4405
    %4455 = vmatprep.subr.mxu0 0.0
    %4456 = vmatpush1.msra.mxu0 %v4404
    %4457 = vmatprep.subr.mxu0 0.0
    %4458 = vmatpush1.msra.mxu0 %v4403
    %4459 = vmatprep.subr.mxu0 0.0
    %4460 = vmatpush2.msra.mxu0 0.0
    %4461 = vmatprep.subr.mxu0 0.0
    %4462 = vmatpush2.msra.mxu0 0.0
    %4463 = vmatprep.subr.mxu0 0.0
    %4464 = vmatpush2.msra.mxu0 0.0
    %4465 = vmatprep.subr.mxu0 0.0
    %4466 = vmatpush2.msra.mxu0 0.0
    %4467 = vmatprep.subr.mxu0 0.0
    %4468 = vmatpush2.msra.mxu0 0.0
    %4469 = vmatprep.subr.mxu0 0.0
    %4470 = vmatpush2.msra.mxu0 0.0
    %4471 = vmatprep.subr.mxu0 0.0
    %4472 = vmatpush2.msra.mxu0 0.0
    %4473 = vmatprep.subr.mxu0 0.0
    %4474 = vmatpush2.msra.mxu0 0.0
    %4475 = vmatprep.subr.mxu0 0.0
    %4476 = vmatpush2.msra.mxu0 0.0
    %4477 = vmatprep.subr.mxu0 0.0
    %4478 = vmatpush2.msra.mxu0 0.0
    %4479 = vmatprep.subr.mxu0 0.0
    %4480 = vmatpush2.msra.mxu0 0.0
    %4481 = vmatprep.subr.mxu0 0.0
    %4482 = vmatpush2.msra.mxu0 0.0
    %4483 = vmatprep.subr.mxu0 0.0
    %4484 = vmatpush2.msra.mxu0 0.0
    %4485 = vmatprep.subr.mxu0 0.0
    %4486 = vmatpush2.msra.mxu0 0.0
    %4487 = vmatprep.subr.mxu0 0.0
    %4488 = vmatpush2.msra.mxu0 0.0
    %4489 = vmatprep.subr.mxu0 0.0
    %4490 = vmatpush2.msra.mxu0 0.0
    %4491 = vmatprep.mubr.f32.mxu0 0.0
    %4492 = vmatmul.mubr.f32.gmra.mxu0 %v4416
    %v4493 = vpop.f32.mrf.mxu0
    %v4494 = vadd.f32 %v4413, %v4493
    %v4495 = vpop.f32.mrf.mxu0
    %4496 = vmatprep.mubr.f32.mxu0 0.0
    %4497 = vmatmul.mubr.f32.gmra.mxu0 %v4419
    %v4498 = vpop.f32.mrf.mxu0
    %v4499 = vadd.f32 %v4413, %v4498
    %v4500 = vpop.f32.mrf.mxu0
    %4501 = vmatprep.mubr.f32.mxu0 0.0
    %4502 = vmatmul.mubr.f32.gmra.mxu0 %v4422
    %v4503 = vpop.f32.mrf.mxu0
    %v4504 = vadd.f32 %v4413, %v4503
    %v4505 = vpop.f32.mrf.mxu0
    %4506 = vmatprep.mubr.f32.mxu0 0.0
    %4507 = vmatmul.mubr.f32.gmra.mxu0 %v4425
    %v4508 = vpop.f32.mrf.mxu0
    %v4509 = vadd.f32 %v4413, %v4508
    %v4510 = vpop.f32.mrf.mxu0
    %4511 = vdwg.mxu0
    %v4512 = vmax.f32 %v4494, 0.0
    %v4513 = vmax.f32 %v4499, 0.0
    %v4514 = vmax.f32 %v4504, 0.0
    %v4515 = vmax.f32 %v4509, 0.0
    %s4516 = scalar_lea.vmem %s12, 128
    %v4517 = vld [vmem:[%s4516] sm:$0xff]
    %v4518 = vld [vmem:[%s4516 + $0x8] sm:$0xff]
    %v4519 = vld [vmem:[%s4516 + $0x10] sm:$0xff]
    %v4520 = vld [vmem:[%s4516 + $0x18] sm:$0xff]
    %v4521 = vld [vmem:[%s4516 + $0x20] sm:$0xff]
    %v4522 = vld [vmem:[%s4516 + $0x28] sm:$0xff]
    %v4523 = vld [vmem:[%s4516 + $0x30] sm:$0xff]
    %v4524 = vld [vmem:[%s4516 + $0x38] sm:$0xff]
    %v4525 = vld [vmem:[%s4516 + $0x40] sm:$0xff]
    %v4526 = vld [vmem:[%s4516 + $0x48] sm:$0xff]
    %v4527 = vld [vmem:[%s4516 + $0x50] sm:$0xff]
    %v4528 = vld [vmem:[%s4516 + $0x58] sm:$0xff]
    %v4529 = vld [vmem:[%s4516 + $0x60] sm:$0xff]
    %v4530 = vld [vmem:[%s4516 + $0x68] sm:$0xff]
    %v4531 = vld [vmem:[%s4516 + $0x70] sm:$0xff]
    %v4532 = vld [vmem:[%s4516 + $0x78] sm:$0xff]
    %s4533 = scalar_lea.vmem %s13, 1
    %v4534 = vld [vmem:[%s4533] sm:$0x1]
    %v4536 = vlaneseq
    %v4537 = vshrl.u32 %v4536, 7
    %v4538 = vsub.s32 0, %v4537
    %v4539 = vrot.slane %v4534, %v4538
    %4541 = vmatprep.subr.mxu0 0.0
    %4542 = vmatpush1.msra.mxu0 %v4532
    %4543 = vmatprep.subr.mxu0 0.0
    %4544 = vmatpush1.msra.mxu0 %v4531
    %4545 = vmatprep.subr.mxu0 0.0
    %4546 = vmatpush1.msra.mxu0 %v4530
    %4547 = vmatprep.subr.mxu0 0.0
    %4548 = vmatpush1.msra.mxu0 %v4529
    %4549 = vmatprep.subr.mxu0 0.0
    %4550 = vmatpush1.msra.mxu0 %v4528
    %4551 = vmatprep.subr.mxu0 0.0
    %4552 = vmatpush1.msra.mxu0 %v4527
    %4553 = vmatprep.subr.mxu0 0.0
    %4554 = vmatpush1.msra.mxu0 %v4526
    %4555 = vmatprep.subr.mxu0 0.0
    %4556 = vmatpush1.msra.mxu0 %v4525
    %4557 = vmatprep.subr.mxu0 0.0
    %4558 = vmatpush1.msra.mxu0 %v4524
    %4559 = vmatprep.subr.mxu0 0.0
    %4560 = vmatpush1.msra.mxu0 %v4523
    %4561 = vmatprep.subr.mxu0 0.0
    %4562 = vmatpush1.msra.mxu0 %v4522
    %4563 = vmatprep.subr.mxu0 0.0
    %4564 = vmatpush1.msra.mxu0 %v4521
    %4565 = vmatprep.subr.mxu0 0.0
    %4566 = vmatpush1.msra.mxu0 %v4520
    %4567 = vmatprep.subr.mxu0 0.0
    %4568 = vmatpush1.msra.mxu0 %v4519
    %4569 = vmatprep.subr.mxu0 0.0
    %4570 = vmatpush1.msra.mxu0 %v4518
    %4571 = vmatprep.subr.mxu0 0.0
    %4572 = vmatpush1.msra.mxu0 %v4517
    %4573 = vmatprep.subr.mxu0 0.0
    %4574 = vmatpush2.msra.mxu0 0.0
    %4575 = vmatprep.subr.mxu0 0.0
    %4576 = vmatpush2.msra.mxu0 0.0
    %4577 = vmatprep.subr.mxu0 0.0
    %4578 = vmatpush2.msra.mxu0 0.0
    %4579 = vmatprep.subr.mxu0 0.0
    %4580 = vmatpush2.msra.mxu0 0.0
    %4581 = vmatprep.subr.mxu0 0.0
    %4582 = vmatpush2.msra.mxu0 0.0
    %4583 = vmatprep.subr.mxu0 0.0
    %4584 = vmatpush2.msra.mxu0 0.0
    %4585 = vmatprep.subr.mxu0 0.0
    %4586 = vmatpush2.msra.mxu0 0.0
    %4587 = vmatprep.subr.mxu0 0.0
    %4588 = vmatpush2.msra.mxu0 0.0
    %4589 = vmatprep.subr.mxu0 0.0
    %4590 = vmatpush2.msra.mxu0 0.0
    %4591 = vmatprep.subr.mxu0 0.0
    %4592 = vmatpush2.msra.mxu0 0.0
    %4593 = vmatprep.subr.mxu0 0.0
    %4594 = vmatpush2.msra.mxu0 0.0
    %4595 = vmatprep.subr.mxu0 0.0
    %4596 = vmatpush2.msra.mxu0 0.0
    %4597 = vmatprep.subr.mxu0 0.0
    %4598 = vmatpush2.msra.mxu0 0.0
    %4599 = vmatprep.subr.mxu0 0.0
    %4600 = vmatpush2.msra.mxu0 0.0
    %4601 = vmatprep.subr.mxu0 0.0
    %4602 = vmatpush2.msra.mxu0 0.0
    %4603 = vmatprep.subr.mxu0 0.0
    %4604 = vmatpush2.msra.mxu0 0.0
    %4605 = vmatprep.mubr.f32.mxu0 0.0
    %4606 = vmatmul.mubr.f32.gmra.mxu0 %v4512
    %v4607 = vpop.f32.mrf.mxu0
    %v4608 = vadd.f32 %v4539, %v4607
    %v4609 = vpop.f32.mrf.mxu0
    %4610 = vmatprep.mubr.f32.mxu0 0.0
    %4611 = vmatmul.mubr.f32.gmra.mxu0 %v4513
    %v4612 = vpop.f32.mrf.mxu0
    %v4613 = vpop.f32.mrf.mxu0
    %4614 = vmatprep.mubr.f32.mxu0 0.0
    %4615 = vmatmul.mubr.f32.gmra.mxu0 %v4514
    %v4616 = vpop.f32.mrf.mxu0
    %v4617 = vadd.f32 %v4539, %v4616
    %v4618 = vpop.f32.mrf.mxu0
    %4619 = vmatprep.mubr.f32.mxu0 0.0
    %4620 = vmatmul.mubr.f32.gmra.mxu0 %v4515
    %v4621 = vpop.f32.mrf.mxu0
    %v4622 = vpop.f32.mrf.mxu0
    %4623 = vdwg.mxu0
    %v4624 = vadd.f32 %v4398, %v4608
    %v4625 = vadd.f32 %v4400, %v4617
    %s4626 = scalar_lea.vmem %s14, 1
    %v4627 = vld [vmem:[%s4626] sm:$0x1]
    %s4628 = scalar_lea.vmem %s15, 1
    %v4629 = vld [vmem:[%s4628] sm:$0x1]
    %v4630 = vsel %vm154, %v4624, 0.0
    %4631 = vadd.xlane.f32.xlu0 %v4630
    %v4632 = vpop.xlane.xlu0 %4631
    %v4633 = vsel %vm154, %v4625, 0.0
    %4634 = vadd.xlane.f32.xlu0 %v4633
    %v4635 = vpop.xlane.xlu0 %4634
    %v4636 = vmul.f32 %v4632, %v2071
    %v4637 = vmul.f32 %v4635, %v2071
    %v4638 = vsub.f32 %v4624, %v4636
    %v4639 = vsub.f32 %v4625, %v4637
    %v4640 = vmul.f32 %v4638, %v4638
    %v4641 = vmul.f32 %v4639, %v4639
    %v4642 = vsel %vm154, %v4640, 0.0
    %4643 = vadd.xlane.f32.xlu0 %v4642
    %v4644 = vpop.xlane.xlu0 %4643
    %v4645 = vsel %vm154, %v4641, 0.0
    %4646 = vadd.xlane.f32.xlu0 %v4645
    %v4647 = vpop.xlane.xlu0 %4646
    %v4648 = vmul.f32 %v4644, %v2071
    %v4649 = vmul.f32 %v4647, %v2071
    %v4650 = vadd.f32 %v4648, 1e-05
    %v4651 = vadd.f32 %v4649, 1e-05
    %v4652 = vrsqrt.pop %v4650
    %v4653 = vrsqrt.pop %v4651
    %v4654 = vmul.f32 %v4638, %v4652
    %v4655 = vmul.f32 %v4639, %v4653
    %v4657 = vlaneseq
    %v4658 = vshrl.u32 %v4657, 7
    %v4659 = vsub.s32 0, %v4658
    %v4660 = vrot.slane %v4627, %v4659
    %v4662 = vmul.f32 %v4654, %v4660
    %v4663 = vmul.f32 %v4655, %v4660
    %v4665 = vlaneseq
    %v4666 = vshrl.u32 %v4665, 7
    %v4667 = vsub.s32 0, %v4666
    %v4668 = vrot.slane %v4629, %v4667
    %v4670 = vadd.f32 %v4662, %v4668
    %v4671 = vadd.f32 %v4663, %v4668
    %v4672 = vld [vmem:[%s16] sm:$0xff]
    %v4673 = vld [vmem:[%s16 + $0x8] sm:$0xff]
    %v4674 = vld [vmem:[%s16 + $0x10] sm:$0xff]
    %v4675 = vld [vmem:[%s16 + $0x18] sm:$0xff]
    %v4676 = vld [vmem:[%s17] sm:$0x1]
    %v4678 = vlaneseq
    %v4679 = vshrl.u32 %v4678, 7
    %v4680 = vsub.s32 0, %v4679
    %v4681 = vrot.slane %v4676, %v4680
    %v4684 = vsel %vm154, %v4670, 0
    %v4687 = vsel %vm154, %v4671, 0
    %4689 = vmatprep.subr.mxu0 0.0
    %4690 = vmatpush1.msra.mxu0 0.0
    %4691 = vmatprep.subr.mxu0 0.0
    %4692 = vmatpush1.msra.mxu0 0.0
    %4693 = vmatprep.subr.mxu0 0.0
    %4694 = vmatpush1.msra.mxu0 0.0
    %4695 = vmatprep.subr.mxu0 0.0
    %4696 = vmatpush1.msra.mxu0 0.0
    %4697 = vmatprep.subr.mxu0 0.0
    %4698 = vmatpush1.msra.mxu0 0.0
    %4699 = vmatprep.subr.mxu0 0.0
    %4700 = vmatpush1.msra.mxu0 0.0
    %4701 = vmatprep.subr.mxu0 0.0
    %4702 = vmatpush1.msra.mxu0 0.0
    %4703 = vmatprep.subr.mxu0 0.0
    %4704 = vmatpush1.msra.mxu0 0.0
    %4705 = vmatprep.subr.mxu0 0.0
    %4706 = vmatpush1.msra.mxu0 0.0
    %4707 = vmatprep.subr.mxu0 0.0
    %4708 = vmatpush1.msra.mxu0 0.0
    %4709 = vmatprep.subr.mxu0 0.0
    %4710 = vmatpush1.msra.mxu0 0.0
    %4711 = vmatprep.subr.mxu0 0.0
    %4712 = vmatpush1.msra.mxu0 0.0
    %4713 = vmatprep.subr.mxu0 0.0
    %4714 = vmatpush1.msra.mxu0 %v4675
    %4715 = vmatprep.subr.mxu0 0.0
    %4716 = vmatpush1.msra.mxu0 %v4674
    %4717 = vmatprep.subr.mxu0 0.0
    %4718 = vmatpush1.msra.mxu0 %v4673
    %4719 = vmatprep.subr.mxu0 0.0
    %4720 = vmatpush1.msra.mxu0 %v4672
    %4721 = vmatprep.subr.mxu0 0.0
    %4722 = vmatpush2.msra.mxu0 0.0
    %4723 = vmatprep.subr.mxu0 0.0
    %4724 = vmatpush2.msra.mxu0 0.0
    %4725 = vmatprep.subr.mxu0 0.0
    %4726 = vmatpush2.msra.mxu0 0.0
    %4727 = vmatprep.subr.mxu0 0.0
    %4728 = vmatpush2.msra.mxu0 0.0
    %4729 = vmatprep.subr.mxu0 0.0
    %4730 = vmatpush2.msra.mxu0 0.0
    %4731 = vmatprep.subr.mxu0 0.0
    %4732 = vmatpush2.msra.mxu0 0.0
    %4733 = vmatprep.subr.mxu0 0.0
    %4734 = vmatpush2.msra.mxu0 0.0
    %4735 = vmatprep.subr.mxu0 0.0
    %4736 = vmatpush2.msra.mxu0 0.0
    %4737 = vmatprep.subr.mxu0 0.0
    %4738 = vmatpush2.msra.mxu0 0.0
    %4739 = vmatprep.subr.mxu0 0.0
    %4740 = vmatpush2.msra.mxu0 0.0
    %4741 = vmatprep.subr.mxu0 0.0
    %4742 = vmatpush2.msra.mxu0 0.0
    %4743 = vmatprep.subr.mxu0 0.0
    %4744 = vmatpush2.msra.mxu0 0.0
    %4745 = vmatprep.subr.mxu0 0.0
    %4746 = vmatpush2.msra.mxu0 0.0
    %4747 = vmatprep.subr.mxu0 0.0
    %4748 = vmatpush2.msra.mxu0 0.0
    %4749 = vmatprep.subr.mxu0 0.0
    %4750 = vmatpush2.msra.mxu0 0.0
    %4751 = vmatprep.subr.mxu0 0.0
    %4752 = vmatpush2.msra.mxu0 0.0
    %4753 = vmatprep.mubr.f32.mxu0 0.0
    %4754 = vmatmul.mubr.f32.gmra.mxu0 %v4684
    %v4755 = vpop.f32.mrf.mxu0
    %v4756 = vadd.f32 %v4681, %v4755
    %v4757 = vpop.f32.mrf.mxu0
    %4758 = vmatprep.mubr.f32.mxu0 0.0
    %4759 = vmatmul.mubr.f32.gmra.mxu0 %v4687
    %v4760 = vpop.f32.mrf.mxu0
    %v4761 = vadd.f32 %v4681, %v4760
    %v4762 = vpop.f32.mrf.mxu0
    %4763 = vdwg.mxu0
    %4764 = vst.msk [vmem:[#allocation3] sm:$0xff] %vm154, %v4756
    %4765 = vst.msk [vmem:[#allocation3 + $0x8] sm:$0xff] %vm154, %v4761
    // Predicated region
    $region74: #{qformer_forward.1} parent=1 // pred_check
      _
    $region75: #{qformer_forward.1} parent=1 // pred_check_branch
      %4767 = sbr.rel (0) target = $region77
    $region76: #{qformer_forward.1} parent=1 // pred_region
      %s4769 = ssub.s32 256, 256
      %4770 = vsyncadd [#allocation4], %s4769
      %s4771 = sshll.u32 [#allocation3], 4
      %s4772 = int_to_ptr.vmem [resolvable:$true] %s4771
      %4777 = dma.vmem_to_hbm [thread:$0]  %s4772, 256, %s18, [#allocation4], 128, 128, 8
    $region77: #{qformer_forward.1} parent=1 // pred_fallthru
      _
    // Predicated region
    $region78: #{qformer_forward.1} parent=1 // pred_check
      _
    $region79: #{qformer_forward.1} parent=1 // pred_check_branch
      %4779 = sbr.rel (0) target = $region81
    $region80: #{qformer_forward.1} parent=1 // pred_region
      %4780 = dma.done [#allocation4], 256
    $region81: #{qformer_forward.1} parent=1 // pred_fallthru
      _
    %4781 = vsyncpa [#allocation4], 1

</llo_original>
